<compile_context>
chip_gen: v6e
topology: v6e:2x2x1
jax: 0.10.0
libtpu: 0.0.40
codegen_flags: <defaults>
</compile_context>

<pallas_src>
import functools

import jax
import jax.numpy as jnp
from jax import lax
from jax.experimental import pallas as pl
from jax.experimental.pallas import tpu as pltpu


def _gnn_fused_kernel(cfg, edge_dim, x_ref, ea_ref, src_ref, dst_ref,
                      w1b_ref, w2bd_ref, root_ref, rcol_ref, out_ref):
    """One grid step = one graph.  cfg[l] = (c_in, c_out, hid, hid_off, out_off, out_w)."""
    f32 = jnp.float32
    x = x_ref[0]            # (N, C_in)
    ea = ea_ref[0]          # (E, D)
    src = src_ref[0]        # (E, 1)
    dst = dst_ref[0]        # (1, E)
    E = ea.shape[0]
    N = x.shape[0]

    # --- one-hot gather / mean-scatter operators: built once, reused by all 3 layers ---
    # S[e, n] = (src[e] == n);  AT_mean[n, e] = (dst[e] == n) / max(deg_n, 1)  (exact division).
    S = (src == lax.broadcasted_iota(jnp.int32, (E, N), 1)).astype(f32)          # (E, N)
    AT = (dst == lax.broadcasted_iota(jnp.int32, (N, E), 0)).astype(f32)         # (N, E)
    deg = jnp.sum(AT, axis=1, keepdims=True)                                     # (N, 1)
    AT_mean = AT / jnp.maximum(deg, 1.0)

    # --- all three edge-MLPs fused into two matmuls (BN scale already folded into w2/b2) ---
    w1b = w1b_ref[...]                       # (edge_dim + 2, HID_TOTAL)
    w1 = w1b[:edge_dim, :]
    b1 = w1b[edge_dim:edge_dim + 1, :]
    b2 = w1b[edge_dim + 1:edge_dim + 2, :]
    h_cat = jnp.maximum(jnp.dot(ea, w1, preferred_element_type=f32) + b1, 0.0)   # (E, HID_TOTAL)
    theta_cat = jnp.dot(h_cat, w2bd_ref[...], preferred_element_type=f32) + b2   # (E, HID_TOTAL)

    root_all = root_ref[...]                 # (R_max + 1, OUT_TOTAL); last row = folded bias
    rcol_all = rcol_ref[...]                 # (HID_TOTAL, OUT_TOTAL) block-diag collapse one-hot
    r_last = root_all.shape[0] - 1

    h = x
    for (c_in, c_out, hid, hid_off, out_off, out_w) in cfg:
        theta = theta_cat[:, hid_off:hid_off + hid]                              # (E, hid)
        # expand one-hot rexp[c, j] = (c*c_out <= j < (c+1)*c_out), built in-kernel (no DMA).
        j_i = lax.broadcasted_iota(jnp.int32, (c_in, hid), 1)
        c_i = lax.broadcasted_iota(jnp.int32, (c_in, hid), 0)
        rexp = ((j_i >= c_i * c_out) & (j_i < (c_i + 1) * c_out)).astype(f32)    # (c_in, hid)

        xs = jnp.dot(S, h, preferred_element_type=f32)                           # gather x[src]  (E, c_in)
        prod = jnp.dot(xs, rexp, preferred_element_type=f32) * theta             # per-edge msgs  (E, hid)
        agg = jnp.dot(AT_mean, prod, preferred_element_type=f32)                 # scatter-mean   (N, hid)

        rcol = rcol_all[hid_off:hid_off + hid, out_off:out_off + out_w]          # (hid, out_w)
        root = root_all[:c_in, out_off:out_off + out_w]                          # (c_in, out_w)
        bias = root_all[r_last:r_last + 1, out_off:out_off + out_w]              # (1, out_w)
        h = jnp.maximum(
            jnp.dot(agg, rcol, preferred_element_type=f32)
            + jnp.dot(h, root, preferred_element_type=f32)
            + bias,
            0.0)                                                                 # BN(eval) folded + ReLU
    out_ref[0] = h                                                               # (N, out_w_last) lane-dense


def make_layer_params(key, edge_dim, c_in, c_out):
    """Deterministic synthetic params matching the PyTorch layer shapes (raw, unfolded)."""
    hid = c_in * c_out
    ks = jax.random.split(key, 5)
    s = 0.1
    return {
        "w1": s * jax.random.normal(ks[0], (edge_dim, hid), jnp.float32),
        "b1": s * jax.random.normal(ks[1], (1, hid), jnp.float32),
        "w2": s * jax.random.normal(ks[2], (hid, hid), jnp.float32),
        "b2": s * jax.random.normal(ks[3], (1, hid), jnp.float32),
        "root": s * jax.random.normal(ks[4], (c_in, c_out), jnp.float32),
        "bias": jnp.zeros((1, c_out), jnp.float32),
        # BatchNorm1d defaults: gamma=1, beta=0, running_mean=0, running_var=1
        "gamma": jnp.ones((1, c_out), jnp.float32),
        "beta": jnp.zeros((1, c_out), jnp.float32),
        "rmean": jnp.zeros((1, c_out), jnp.float32),
        "rvar": jnp.ones((1, c_out), jnp.float32),
    }


def pack_params(params, in_ch, hidden, out_channels, edge_dim, eps=1e-5):
    """Fold BatchNorm(eval) into the NNConv weights and pack all 3 layers into 4 flat arrays."""
    dims = ((in_ch, hidden), (hidden, hidden // 2), (hidden // 2, out_channels))
    hids = tuple(ci * co for ci, co in dims)
    hid_total = sum(hids)
    # pad the LAST layer's projection to 128 output lanes -> unmasked, lane-dense final store
    out_ws = (dims[0][1], dims[1][1], ((out_channels + 127) // 128) * 128)
    out_total = sum(out_ws)
    r_max = max(ci for ci, _ in dims)

    w1b = jnp.zeros((edge_dim + 2, hid_total), jnp.float32)    # rows: w1 | b1 | b2 (folded)
    w2bd = jnp.zeros((hid_total, hid_total), jnp.float32)      # block-diagonal folded w2
    rootp = jnp.zeros((r_max + 1, out_total), jnp.float32)     # rows 0..c_in-1: root; last row: bias
    rcolbd = jnp.zeros((hid_total, out_total), jnp.float32)    # block-diagonal collapse one-hot

    cfg = []
    hid_off = 0
    out_off = 0
    for l, name in enumerate(("l1", "l2", "l3")):
        p = params[name]
        c_in, c_out = dims[l]
        hid = hids[l]
        out_w = out_ws[l]
        scale = p["gamma"] * lax.rsqrt(p["rvar"] + eps)        # BN eval scale / shift
        shift = p["beta"] - p["rmean"] * scale
        scale_hid = jnp.tile(scale, (1, c_in))                 # theta col j gets scale[j % c_out]

        w1b = w1b.at[:edge_dim, hid_off:hid_off + hid].set(p["w1"])
        w1b = w1b.at[edge_dim, hid_off:hid_off + hid].set(p["b1"][0])
        w1b = w1b.at[edge_dim + 1, hid_off:hid_off + hid].set((p["b2"] * scale_hid)[0])
        w2bd = w2bd.at[hid_off:hid_off + hid, hid_off:hid_off + hid].set(p["w2"] * scale_hid)
        rootp = rootp.at[:c_in, out_off:out_off + c_out].set(p["root"] * scale)
        rootp = rootp.at[r_max, out_off:out_off + c_out].set((p["bias"] * scale + shift)[0])
        j = jnp.arange(hid)
        rcol = (j[:, None] % c_out == jnp.arange(c_out)[None, :]).astype(jnp.float32)
        rcolbd = rcolbd.at[hid_off:hid_off + hid, out_off:out_off + c_out].set(rcol)

        cfg.append((c_in, c_out, hid, hid_off, out_off, out_w))
        hid_off += hid
        out_off += out_w
    return (w1b, w2bd, rootp, rcolbd), tuple(cfg)


def gnn_encoder_forward_batched(x, src, dst, edge_attr, params, hidden, out_channels, eps=1e-5):
    """x: (B,N,C_in), src/dst: (B,E) int32, edge_attr: (B,E,D).  Eval-mode GNNEncoder per graph."""
    B, N, in_ch = x.shape
    _, E, edge_dim = edge_attr.shape

    # Pad E to a multiple of 128 (lane-dense one-hot operands); padded edges use dst=-1 so they
    # match no node in the scatter one-hot and contribute nothing to agg or deg.
    Ep = max(128, ((E + 127) // 128) * 128)
    pad = Ep - E
    if pad:
        src = jnp.concatenate([src, jnp.zeros((B, pad), jnp.int32)], axis=1)
        dst = jnp.concatenate([dst, jnp.full((B, pad), -1, jnp.int32)], axis=1)
        edge_attr = jnp.concatenate(
            [edge_attr, jnp.zeros((B, pad, edge_dim), edge_attr.dtype)], axis=1)
    src_col = src.reshape(B, Ep, 1).astype(jnp.int32)
    dst_row = dst.reshape(B, 1, Ep).astype(jnp.int32)

    (w1b, w2bd, rootp, rcolbd), cfg = pack_params(params, in_ch, hidden, out_channels, edge_dim, eps)
    out_w_last = cfg[-1][5]

    out = pl.pallas_call(
        functools.partial(_gnn_fused_kernel, cfg, edge_dim),
        grid=(B,),
        out_shape=jax.ShapeDtypeStruct((B, N, out_w_last), jnp.float32),
        in_specs=[
            pl.BlockSpec((1, N, in_ch), lambda b: (b, 0, 0)),
            pl.BlockSpec((1, Ep, edge_dim), lambda b: (b, 0, 0)),
            pl.BlockSpec((1, Ep, 1), lambda b: (b, 0, 0)),
            pl.BlockSpec((1, 1, Ep), lambda b: (b, 0, 0)),
            # packed parameters: constant block index -> DMA'd once, VMEM-resident across the grid
            pl.BlockSpec(w1b.shape, lambda b: (0, 0)),
            pl.BlockSpec(w2bd.shape, lambda b: (0, 0)),
            pl.BlockSpec(rootp.shape, lambda b: (0, 0)),
            pl.BlockSpec(rcolbd.shape, lambda b: (0, 0)),
        ],
        out_specs=pl.BlockSpec((1, N, out_w_last), lambda b: (b, 0, 0)),
        compiler_params=pltpu.CompilerParams(
            dimension_semantics=("parallel",)),   # v7x: shard graphs across both TensorCores
    )(x, edge_attr, src_col, dst_row, w1b, w2bd, rootp, rcolbd)
    return out[..., :out_channels]


def gnn_encoder_forward(x, src, dst, edge_attr, params, hidden, out_channels, eps=1e-5):
    """Single-graph convenience wrapper (matches the PyTorch module's forward signature)."""
    return gnn_encoder_forward_batched(x[None], src[None], dst[None], edge_attr[None],
                                       params, hidden, out_channels, eps)[0]


def _gnn_reference(x, src, dst, edge_attr, params, hidden, out_channels, eps=1e-5):
    """Pure-JAX reference (PyG NNConv aggr='mean' + BN eval + ReLU), vmapped over graphs."""
    dims = ((x.shape[-1], hidden), (hidden, hidden // 2), (hidden // 2, out_channels))

    def one_graph(xg, sg, dg, eg):
        h = xg
        for l, name in enumerate(("l1", "l2", "l3")):
            p = params[name]
            c_in, c_out = dims[l]
            hmid = jnp.maximum(eg @ p["w1"] + p["b1"], 0.0)
            theta = (hmid @ p["w2"] + p["b2"]).reshape(-1, c_in, c_out)
            msg = jnp.einsum("ec,eco->eo", h[sg], theta)
            summ = jnp.zeros((xg.shape[0], c_out), jnp.float32).at[dg].add(msg)
            cnt = jnp.zeros((xg.shape[0],), jnp.float32).at[dg].add(1.0)
            agg = summ / jnp.maximum(cnt, 1.0)[:, None]
            conv = agg + h @ p["root"] + p["bias"]
            scale = p["gamma"] * lax.rsqrt(p["rvar"] + eps)
            h = jnp.maximum((conv - p["rmean"]) * scale + p["beta"], 0.0)
        return h

    return jax.vmap(one_graph)(x, src, dst, edge_attr)


if __name__ == "__main__":
    IN_CHANNELS = 4
    EDGE_ATTR_DIM = 6
    HIDDEN = 32
    OUT_CHANNELS = 8
    N_NODES = 16
    N_EDGES = 40
    BATCH = 4     # graphs per pallas_call (leading "parallel" grid axis)

    key = jax.random.PRNGKey(0)
    kx, kea, ksrc, kdst, kp1, kp2, kp3 = jax.random.split(key, 7)

    x = jax.random.normal(kx, (BATCH, N_NODES, IN_CHANNELS), jnp.float32)
    edge_attr = jax.random.normal(kea, (BATCH, N_EDGES, EDGE_ATTR_DIM), jnp.float32)
    src = jax.random.randint(ksrc, (BATCH, N_EDGES), 0, N_NODES, jnp.int32)
    dst = jax.random.randint(kdst, (BATCH, N_EDGES), 0, N_NODES, jnp.int32)

    params = {
        "l1": make_layer_params(kp1, EDGE_ATTR_DIM, IN_CHANNELS, HIDDEN),
        "l2": make_layer_params(kp2, EDGE_ATTR_DIM, HIDDEN, HIDDEN // 2),
        "l3": make_layer_params(kp3, EDGE_ATTR_DIM, HIDDEN // 2, OUT_CHANNELS),
    }

    fwd = jax.jit(functools.partial(gnn_encoder_forward_batched, params=params,
                                    hidden=HIDDEN, out_channels=OUT_CHANNELS))
    out = jax.block_until_ready(fwd(x, src, dst, edge_attr))
    assert out.shape == (BATCH, N_NODES, OUT_CHANNELS)
    assert bool(jnp.all(jnp.isfinite(out)))

    # correctness vs. pure-JAX reference (loose tolerance: covers matmul-precision differences)
    with jax.default_matmul_precision("highest"):
        ref = jax.block_until_ready(
            _gnn_reference(x, src, dst, edge_attr, params, HIDDEN, OUT_CHANNELS))
    assert bool(jnp.allclose(out, ref, atol=2e-3, rtol=2e-2)), \
        f"max abs err {float(jnp.max(jnp.abs(out - ref)))}"

    print("KERNEL_OK")
</pallas_src>

<mosaic_0001>
module attributes {stable_mosaic.version = 11 : i64} {
  func.func @_gnn_fused_kernel(%arg0: i32, %arg1: memref<1x16x4xf32, #tpu.memory_space<vmem>>, %arg2: memref<1x128x6xf32, #tpu.memory_space<vmem>>, %arg3: memref<1x128x1xi32, #tpu.memory_space<vmem>>, %arg4: memref<1x1x128xi32, #tpu.memory_space<vmem>>, %arg5: memref<8x768xf32, #tpu.memory_space<vmem>>, %arg6: memref<768x768xf32, #tpu.memory_space<vmem>>, %arg7: memref<33x176xf32, #tpu.memory_space<vmem>>, %arg8: memref<768x176xf32, #tpu.memory_space<vmem>>, %arg9: memref<1x16x128xf32, #tpu.memory_space<vmem>>) attributes {dimension_semantics = [#tpu.dimension_semantics<parallel>], iteration_bounds = array<i64: 4>, scalar_prefetch = 0 : i64, scratch_operands = 0 : i64, tpu.core_type = #tpu.core_type<tc>, window_params = [{transform_indices = @transform_0, window_bounds = array<i64: 1, 16, 4>}, {transform_indices = @transform_1, window_bounds = array<i64: 1, 128, 6>}, {transform_indices = @transform_2, window_bounds = array<i64: 1, 128, 1>}, {transform_indices = @transform_3, window_bounds = array<i64: 1, 1, 128>}, {pipeline_mode = #tpu.pipeline_mode<synchronous>, transform_indices = @transform_4, window_bounds = array<i64: 8, 768>}, {pipeline_mode = #tpu.pipeline_mode<synchronous>, transform_indices = @transform_5, window_bounds = array<i64: 768, 768>}, {pipeline_mode = #tpu.pipeline_mode<synchronous>, transform_indices = @transform_6, window_bounds = array<i64: 33, 176>}, {pipeline_mode = #tpu.pipeline_mode<synchronous>, transform_indices = @transform_7, window_bounds = array<i64: 768, 176>}, {transform_indices = @transform_8, window_bounds = array<i64: 1, 16, 128>}]} {
    %c0 = arith.constant 0 : index
    %c0_0 = arith.constant 0 : index
    %c0_1 = arith.constant 0 : index
    %0 = vector.load %arg1[%c0, %c0_0, %c0_1] : memref<1x16x4xf32, #tpu.memory_space<vmem>>, vector<1x16x4xf32>
    %1 = vector.shape_cast %0 : vector<1x16x4xf32> to vector<16x4xf32>
    %c0_2 = arith.constant 0 : index
    %c0_3 = arith.constant 0 : index
    %c0_4 = arith.constant 0 : index
    %2 = vector.load %arg2[%c0_2, %c0_3, %c0_4] : memref<1x128x6xf32, #tpu.memory_space<vmem>>, vector<1x128x6xf32>
    %3 = vector.shape_cast %2 : vector<1x128x6xf32> to vector<128x6xf32>
    %c0_5 = arith.constant 0 : index
    %c0_6 = arith.constant 0 : index
    %c0_7 = arith.constant 0 : index
    %4 = vector.load %arg3[%c0_5, %c0_6, %c0_7] : memref<1x128x1xi32, #tpu.memory_space<vmem>>, vector<1x128x1xi32>
    %5 = vector.shape_cast %4 : vector<1x128x1xi32> to vector<128x1xi32>
    %c0_8 = arith.constant 0 : index
    %c0_9 = arith.constant 0 : index
    %c0_10 = arith.constant 0 : index
    %6 = vector.load %arg4[%c0_8, %c0_9, %c0_10] : memref<1x1x128xi32, #tpu.memory_space<vmem>>, vector<1x1x128xi32>
    %7 = vector.shape_cast %6 : vector<1x1x128xi32> to vector<1x128xi32>
    %8 = tpu.iota {dimensions = array<i32: 1>} : vector<128x16xi32>
    %9 = vector.broadcast %5 : vector<128x1xi32> to vector<128x16xi32>
    %10 = arith.cmpi eq, %9, %8 : vector<128x16xi32>
    %11 = arith.extui %10 : vector<128x16xi1> to vector<128x16xi32>
    %12 = arith.sitofp %11 : vector<128x16xi32> to vector<128x16xf32>
    %13 = tpu.iota {dimensions = array<i32: 0>} : vector<16x128xi32>
    %14 = vector.broadcast %7 : vector<1x128xi32> to vector<16x128xi32>
    %15 = arith.cmpi eq, %14, %13 : vector<16x128xi32>
    %16 = arith.extui %15 : vector<16x128xi1> to vector<16x128xi32>
    %17 = arith.sitofp %16 : vector<16x128xi32> to vector<16x128xf32>
    %cst = arith.constant dense<0.000000e+00> : vector<16xf32>
    %18 = vector.multi_reduction <add>, %17, %cst [1] : vector<16x128xf32> to vector<16xf32>
    %19 = vector.shape_cast %18 : vector<16xf32> to vector<16x1xf32>
    %cst_11 = arith.constant 1.000000e+00 : f32
    %20 = vector.broadcast %cst_11 : f32 to vector<16x1xf32>
    %21 = arith.maximumf %19, %20 : vector<16x1xf32>
    %22 = vector.broadcast %21 : vector<16x1xf32> to vector<16x128xf32>
    %23 = arith.divf %17, %22 : vector<16x128xf32>
    %c0_12 = arith.constant 0 : index
    %c0_13 = arith.constant 0 : index
    %24 = vector.load %arg5[%c0_12, %c0_13] : memref<8x768xf32, #tpu.memory_space<vmem>>, vector<8x768xf32>
    %25 = vector.extract_strided_slice %24 {offsets = [0, 0], sizes = [6, 768], strides = [1, 1]} : vector<8x768xf32> to vector<6x768xf32>
    %26 = vector.extract_strided_slice %24 {offsets = [6, 0], sizes = [1, 768], strides = [1, 1]} : vector<8x768xf32> to vector<1x768xf32>
    %27 = vector.extract_strided_slice %24 {offsets = [7, 0], sizes = [1, 768], strides = [1, 1]} : vector<8x768xf32> to vector<1x768xf32>
    %cst_14 = arith.constant dense<0.000000e+00> : vector<128x768xf32>
    %28 = tpu.matmul %3, %25, %cst_14 {dimension_numbers = #tpu.dot_dimension_numbers<[1], [0], [0], [1], [0, 0, 1, 1], [], []>} : vector<128x6xf32>, vector<6x768xf32>, vector<128x768xf32> -> vector<128x768xf32>
    %29 = vector.broadcast %26 : vector<1x768xf32> to vector<128x768xf32>
    %30 = arith.addf %28, %29 : vector<128x768xf32>
    %cst_15 = arith.constant 0.000000e+00 : f32
    %31 = vector.broadcast %cst_15 : f32 to vector<128x768xf32>
    %32 = arith.maximumf %30, %31 : vector<128x768xf32>
    %c0_16 = arith.constant 0 : index
    %c0_17 = arith.constant 0 : index
    %33 = vector.load %arg6[%c0_16, %c0_17] : memref<768x768xf32, #tpu.memory_space<vmem>>, vector<768x768xf32>
    %cst_18 = arith.constant dense<0.000000e+00> : vector<128x768xf32>
    %34 = tpu.matmul %32, %33, %cst_18 {dimension_numbers = #tpu.dot_dimension_numbers<[1], [0], [0], [1], [0, 0, 1, 1], [], []>} : vector<128x768xf32>, vector<768x768xf32>, vector<128x768xf32> -> vector<128x768xf32>
    %35 = vector.broadcast %27 : vector<1x768xf32> to vector<128x768xf32>
    %36 = arith.addf %34, %35 : vector<128x768xf32>
    %c0_19 = arith.constant 0 : index
    %c0_20 = arith.constant 0 : index
    %37 = vector.load %arg7[%c0_19, %c0_20] : memref<33x176xf32, #tpu.memory_space<vmem>>, vector<33x176xf32>
    %c0_21 = arith.constant 0 : index
    %c0_22 = arith.constant 0 : index
    %38 = vector.load %arg8[%c0_21, %c0_22] : memref<768x176xf32, #tpu.memory_space<vmem>>, vector<768x176xf32>
    %39 = vector.extract_strided_slice %36 {offsets = [0, 0], sizes = [128, 128], strides = [1, 1]} : vector<128x768xf32> to vector<128x128xf32>
    %40 = tpu.iota {dimensions = array<i32: 1>} : vector<4x128xi32>
    %41 = tpu.iota {dimensions = array<i32: 0>} : vector<4x128xi32>
    %c32_i32 = arith.constant 32 : i32
    %42 = vector.broadcast %c32_i32 : i32 to vector<4x128xi32>
    %43 = arith.muli %41, %42 : vector<4x128xi32>
    %44 = arith.cmpi sge, %40, %43 : vector<4x128xi32>
    %c1_i32 = arith.constant 1 : i32
    %45 = vector.broadcast %c1_i32 : i32 to vector<4x128xi32>
    %46 = arith.addi %41, %45 : vector<4x128xi32>
    %c32_i32_23 = arith.constant 32 : i32
    %47 = vector.broadcast %c32_i32_23 : i32 to vector<4x128xi32>
    %48 = arith.muli %46, %47 : vector<4x128xi32>
    %49 = arith.cmpi slt, %40, %48 : vector<4x128xi32>
    %50 = arith.andi %44, %49 : vector<4x128xi1>
    %51 = arith.extui %50 : vector<4x128xi1> to vector<4x128xi32>
    %52 = arith.sitofp %51 : vector<4x128xi32> to vector<4x128xf32>
    %cst_24 = arith.constant dense<0.000000e+00> : vector<128x4xf32>
    %53 = tpu.matmul %12, %1, %cst_24 {dimension_numbers = #tpu.dot_dimension_numbers<[1], [0], [0], [1], [0, 0, 1, 1], [], []>} : vector<128x16xf32>, vector<16x4xf32>, vector<128x4xf32> -> vector<128x4xf32>
    %cst_25 = arith.constant dense<0.000000e+00> : vector<128x128xf32>
    %54 = tpu.matmul %53, %52, %cst_25 {dimension_numbers = #tpu.dot_dimension_numbers<[1], [0], [0], [1], [0, 0, 1, 1], [], []>} : vector<128x4xf32>, vector<4x128xf32>, vector<128x128xf32> -> vector<128x128xf32>
    %55 = arith.mulf %54, %39 : vector<128x128xf32>
    %cst_26 = arith.constant dense<0.000000e+00> : vector<16x128xf32>
    %56 = tpu.matmul %23, %55, %cst_26 {dimension_numbers = #tpu.dot_dimension_numbers<[1], [0], [0], [1], [0, 0, 1, 1], [], []>} : vector<16x128xf32>, vector<128x128xf32>, vector<16x128xf32> -> vector<16x128xf32>
    %57 = vector.extract_strided_slice %38 {offsets = [0, 0], sizes = [128, 32], strides = [1, 1]} : vector<768x176xf32> to vector<128x32xf32>
    %58 = vector.extract_strided_slice %37 {offsets = [0, 0], sizes = [4, 32], strides = [1, 1]} : vector<33x176xf32> to vector<4x32xf32>
    %59 = vector.extract_strided_slice %37 {offsets = [32, 0], sizes = [1, 32], strides = [1, 1]} : vector<33x176xf32> to vector<1x32xf32>
    %cst_27 = arith.constant dense<0.000000e+00> : vector<16x32xf32>
    %60 = tpu.matmul %56, %57, %cst_27 {dimension_numbers = #tpu.dot_dimension_numbers<[1], [0], [0], [1], [0, 0, 1, 1], [], []>} : vector<16x128xf32>, vector<128x32xf32>, vector<16x32xf32> -> vector<16x32xf32>
    %cst_28 = arith.constant dense<0.000000e+00> : vector<16x32xf32>
    %61 = tpu.matmul %1, %58, %cst_28 {dimension_numbers = #tpu.dot_dimension_numbers<[1], [0], [0], [1], [0, 0, 1, 1], [], []>} : vector<16x4xf32>, vector<4x32xf32>, vector<16x32xf32> -> vector<16x32xf32>
    %62 = arith.addf %60, %61 : vector<16x32xf32>
    %63 = vector.broadcast %59 : vector<1x32xf32> to vector<16x32xf32>
    %64 = arith.addf %62, %63 : vector<16x32xf32>
    %cst_29 = arith.constant 0.000000e+00 : f32
    %65 = vector.broadcast %cst_29 : f32 to vector<16x32xf32>
    %66 = arith.maximumf %64, %65 : vector<16x32xf32>
    %67 = vector.extract_strided_slice %36 {offsets = [0, 128], sizes = [128, 512], strides = [1, 1]} : vector<128x768xf32> to vector<128x512xf32>
    %68 = tpu.iota {dimensions = array<i32: 1>} : vector<32x512xi32>
    %69 = tpu.iota {dimensions = array<i32: 0>} : vector<32x512xi32>
    %c16_i32 = arith.constant 16 : i32
    %70 = vector.broadcast %c16_i32 : i32 to vector<32x512xi32>
    %71 = arith.muli %69, %70 : vector<32x512xi32>
    %72 = arith.cmpi sge, %68, %71 : vector<32x512xi32>
    %c1_i32_30 = arith.constant 1 : i32
    %73 = vector.broadcast %c1_i32_30 : i32 to vector<32x512xi32>
    %74 = arith.addi %69, %73 : vector<32x512xi32>
    %c16_i32_31 = arith.constant 16 : i32
    %75 = vector.broadcast %c16_i32_31 : i32 to vector<32x512xi32>
    %76 = arith.muli %74, %75 : vector<32x512xi32>
    %77 = arith.cmpi slt, %68, %76 : vector<32x512xi32>
    %78 = arith.andi %72, %77 : vector<32x512xi1>
    %79 = arith.extui %78 : vector<32x512xi1> to vector<32x512xi32>
    %80 = arith.sitofp %79 : vector<32x512xi32> to vector<32x512xf32>
    %cst_32 = arith.constant dense<0.000000e+00> : vector<128x32xf32>
    %81 = tpu.matmul %12, %66, %cst_32 {dimension_numbers = #tpu.dot_dimension_numbers<[1], [0], [0], [1], [0, 0, 1, 1], [], []>} : vector<128x16xf32>, vector<16x32xf32>, vector<128x32xf32> -> vector<128x32xf32>
    %cst_33 = arith.constant dense<0.000000e+00> : vector<128x512xf32>
    %82 = tpu.matmul %81, %80, %cst_33 {dimension_numbers = #tpu.dot_dimension_numbers<[1], [0], [0], [1], [0, 0, 1, 1], [], []>} : vector<128x32xf32>, vector<32x512xf32>, vector<128x512xf32> -> vector<128x512xf32>
    %83 = arith.mulf %82, %67 : vector<128x512xf32>
    %cst_34 = arith.constant dense<0.000000e+00> : vector<16x512xf32>
    %84 = tpu.matmul %23, %83, %cst_34 {dimension_numbers = #tpu.dot_dimension_numbers<[1], [0], [0], [1], [0, 0, 1, 1], [], []>} : vector<16x128xf32>, vector<128x512xf32>, vector<16x512xf32> -> vector<16x512xf32>
    %85 = vector.extract_strided_slice %38 {offsets = [128, 32], sizes = [512, 16], strides = [1, 1]} : vector<768x176xf32> to vector<512x16xf32>
    %86 = vector.extract_strided_slice %37 {offsets = [0, 32], sizes = [32, 16], strides = [1, 1]} : vector<33x176xf32> to vector<32x16xf32>
    %87 = vector.extract_strided_slice %37 {offsets = [32, 32], sizes = [1, 16], strides = [1, 1]} : vector<33x176xf32> to vector<1x16xf32>
    %cst_35 = arith.constant dense<0.000000e+00> : vector<16x16xf32>
    %88 = tpu.matmul %84, %85, %cst_35 {dimension_numbers = #tpu.dot_dimension_numbers<[1], [0], [0], [1], [0, 0, 1, 1], [], []>} : vector<16x512xf32>, vector<512x16xf32>, vector<16x16xf32> -> vector<16x16xf32>
    %cst_36 = arith.constant dense<0.000000e+00> : vector<16x16xf32>
    %89 = tpu.matmul %66, %86, %cst_36 {dimension_numbers = #tpu.dot_dimension_numbers<[1], [0], [0], [1], [0, 0, 1, 1], [], []>} : vector<16x32xf32>, vector<32x16xf32>, vector<16x16xf32> -> vector<16x16xf32>
    %90 = arith.addf %88, %89 : vector<16x16xf32>
    %91 = vector.broadcast %87 : vector<1x16xf32> to vector<16x16xf32>
    %92 = arith.addf %90, %91 : vector<16x16xf32>
    %cst_37 = arith.constant 0.000000e+00 : f32
    %93 = vector.broadcast %cst_37 : f32 to vector<16x16xf32>
    %94 = arith.maximumf %92, %93 : vector<16x16xf32>
    %95 = vector.extract_strided_slice %36 {offsets = [0, 640], sizes = [128, 128], strides = [1, 1]} : vector<128x768xf32> to vector<128x128xf32>
    %96 = tpu.iota {dimensions = array<i32: 1>} : vector<16x128xi32>
    %97 = tpu.iota {dimensions = array<i32: 0>} : vector<16x128xi32>
    %c8_i32 = arith.constant 8 : i32
    %98 = vector.broadcast %c8_i32 : i32 to vector<16x128xi32>
    %99 = arith.muli %97, %98 : vector<16x128xi32>
    %100 = arith.cmpi sge, %96, %99 : vector<16x128xi32>
    %c1_i32_38 = arith.constant 1 : i32
    %101 = vector.broadcast %c1_i32_38 : i32 to vector<16x128xi32>
    %102 = arith.addi %97, %101 : vector<16x128xi32>
    %c8_i32_39 = arith.constant 8 : i32
    %103 = vector.broadcast %c8_i32_39 : i32 to vector<16x128xi32>
    %104 = arith.muli %102, %103 : vector<16x128xi32>
    %105 = arith.cmpi slt, %96, %104 : vector<16x128xi32>
    %106 = arith.andi %100, %105 : vector<16x128xi1>
    %107 = arith.extui %106 : vector<16x128xi1> to vector<16x128xi32>
    %108 = arith.sitofp %107 : vector<16x128xi32> to vector<16x128xf32>
    %cst_40 = arith.constant dense<0.000000e+00> : vector<128x16xf32>
    %109 = tpu.matmul %12, %94, %cst_40 {dimension_numbers = #tpu.dot_dimension_numbers<[1], [0], [0], [1], [0, 0, 1, 1], [], []>} : vector<128x16xf32>, vector<16x16xf32>, vector<128x16xf32> -> vector<128x16xf32>
    %cst_41 = arith.constant dense<0.000000e+00> : vector<128x128xf32>
    %110 = tpu.matmul %109, %108, %cst_41 {dimension_numbers = #tpu.dot_dimension_numbers<[1], [0], [0], [1], [0, 0, 1, 1], [], []>} : vector<128x16xf32>, vector<16x128xf32>, vector<128x128xf32> -> vector<128x128xf32>
    %111 = arith.mulf %110, %95 : vector<128x128xf32>
    %cst_42 = arith.constant dense<0.000000e+00> : vector<16x128xf32>
    %112 = tpu.matmul %23, %111, %cst_42 {dimension_numbers = #tpu.dot_dimension_numbers<[1], [0], [0], [1], [0, 0, 1, 1], [], []>} : vector<16x128xf32>, vector<128x128xf32>, vector<16x128xf32> -> vector<16x128xf32>
    %113 = vector.extract_strided_slice %38 {offsets = [640, 48], sizes = [128, 128], strides = [1, 1]} : vector<768x176xf32> to vector<128x128xf32>
    %114 = vector.extract_strided_slice %37 {offsets = [0, 48], sizes = [16, 128], strides = [1, 1]} : vector<33x176xf32> to vector<16x128xf32>
    %115 = vector.extract_strided_slice %37 {offsets = [32, 48], sizes = [1, 128], strides = [1, 1]} : vector<33x176xf32> to vector<1x128xf32>
    %cst_43 = arith.constant dense<0.000000e+00> : vector<16x128xf32>
    %116 = tpu.matmul %112, %113, %cst_43 {dimension_numbers = #tpu.dot_dimension_numbers<[1], [0], [0], [1], [0, 0, 1, 1], [], []>} : vector<16x128xf32>, vector<128x128xf32>, vector<16x128xf32> -> vector<16x128xf32>
    %cst_44 = arith.constant dense<0.000000e+00> : vector<16x128xf32>
    %117 = tpu.matmul %94, %114, %cst_44 {dimension_numbers = #tpu.dot_dimension_numbers<[1], [0], [0], [1], [0, 0, 1, 1], [], []>} : vector<16x16xf32>, vector<16x128xf32>, vector<16x128xf32> -> vector<16x128xf32>
    %118 = arith.addf %116, %117 : vector<16x128xf32>
    %119 = vector.broadcast %115 : vector<1x128xf32> to vector<16x128xf32>
    %120 = arith.addf %118, %119 : vector<16x128xf32>
    %cst_45 = arith.constant 0.000000e+00 : f32
    %121 = vector.broadcast %cst_45 : f32 to vector<16x128xf32>
    %122 = arith.maximumf %120, %121 : vector<16x128xf32>
    %c0_46 = arith.constant 0 : index
    %c0_47 = arith.constant 0 : index
    %c0_48 = arith.constant 0 : index
    %123 = vector.load %arg9[%c0_46, %c0_47, %c0_48] : memref<1x16x128xf32, #tpu.memory_space<vmem>>, vector<1x16x128xf32>
    %124 = vector.shape_cast %123 : vector<1x16x128xf32> to vector<16x128xf32>
    %125 = vector.shape_cast %122 : vector<16x128xf32> to vector<1x16x128xf32>
    tpu.vector_store %arg9[%c0_46, %c0_47, %c0_48], %125 {strides = array<i32>} : memref<1x16x128xf32, #tpu.memory_space<vmem>>, vector<1x16x128xf32>,
    return
  }
  func.func @transform_0(%arg0: i32) -> (i32, i32, i32) {
    %c0_i32 = arith.constant 0 : i32
    %c0_i32_0 = arith.constant 0 : i32
    %c0_i32_1 = arith.constant 0 : i32
    return %arg0, %c0_i32, %c0_i32_0 : i32, i32, i32
  }
  func.func @transform_1(%arg0: i32) -> (i32, i32, i32) {
    %c0_i32 = arith.constant 0 : i32
    %c0_i32_0 = arith.constant 0 : i32
    %c0_i32_1 = arith.constant 0 : i32
    return %arg0, %c0_i32, %c0_i32_0 : i32, i32, i32
  }
  func.func @transform_2(%arg0: i32) -> (i32, i32, i32) {
    %c0_i32 = arith.constant 0 : i32
    %c0_i32_0 = arith.constant 0 : i32
    %c0_i32_1 = arith.constant 0 : i32
    return %arg0, %c0_i32, %c0_i32_0 : i32, i32, i32
  }
  func.func @transform_3(%arg0: i32) -> (i32, i32, i32) {
    %c0_i32 = arith.constant 0 : i32
    %c0_i32_0 = arith.constant 0 : i32
    %c0_i32_1 = arith.constant 0 : i32
    return %arg0, %c0_i32, %c0_i32_0 : i32, i32, i32
  }
  func.func @transform_4(%arg0: i32) -> (i32, i32) {
    %c0_i32 = arith.constant 0 : i32
    %c0_i32_0 = arith.constant 0 : i32
    %c0_i32_1 = arith.constant 0 : i32
    return %c0_i32, %c0_i32_0 : i32, i32
  }
  func.func @transform_5(%arg0: i32) -> (i32, i32) {
    %c0_i32 = arith.constant 0 : i32
    %c0_i32_0 = arith.constant 0 : i32
    %c0_i32_1 = arith.constant 0 : i32
    return %c0_i32, %c0_i32_0 : i32, i32
  }
  func.func @transform_6(%arg0: i32) -> (i32, i32) {
    %c0_i32 = arith.constant 0 : i32
    %c0_i32_0 = arith.constant 0 : i32
    %c0_i32_1 = arith.constant 0 : i32
    return %c0_i32, %c0_i32_0 : i32, i32
  }
  func.func @transform_7(%arg0: i32) -> (i32, i32) {
    %c0_i32 = arith.constant 0 : i32
    %c0_i32_0 = arith.constant 0 : i32
    %c0_i32_1 = arith.constant 0 : i32
    return %c0_i32, %c0_i32_0 : i32, i32
  }
  func.func @transform_8(%arg0: i32) -> (i32, i32, i32) {
    %c0_i32 = arith.constant 0 : i32
    %c0_i32_0 = arith.constant 0 : i32
    %c0_i32_1 = arith.constant 0 : i32
    return %arg0, %c0_i32, %c0_i32_0 : i32, i32, i32
  }
}

</mosaic_0001>

<llo_original>
// kernel: gnn_encoder_forward_batched.1
$region0: #{gnn_encoder_forward_batched.1}
  #allocation0 [shape = 'u32[]', space=smem, size = 0x4, offset = 0x4, fixed_abs, tag = 'smem constant byte address 0x4 - core index']
  #allocation1 [shape = 'u32[144,128]{1,0:T(1,128)}', space=vmem, size = 0x12000, scoped, tag = 'internal scratch']
  %s0 = inlined_call_operand.vmem [shape: f32[4,16,4], index: 0, kind: input, shape index: {}]
  %s1 = inlined_call_operand.vmem [shape: f32[4,128,6], index: 1, kind: input, shape index: {}]
  %s2 = inlined_call_operand.vmem [shape: s32[4,128,1], index: 2, kind: input, shape index: {}]
  %s3 = inlined_call_operand.vmem [shape: s32[4,1,128], index: 3, kind: input, shape index: {}]
  %s4 = inlined_call_operand.vmem [shape: f32[8,768], index: 4, kind: input, shape index: {}]
  %s5 = inlined_call_operand.vmem [shape: f32[768,768], index: 5, kind: input, shape index: {}]
  %s6 = inlined_call_operand.vmem [shape: f32[33,176], index: 6, kind: input, shape index: {}]
  %s7 = inlined_call_operand.vmem [shape: f32[768,176], index: 7, kind: input, shape index: {}]
  %s8 = inlined_call_operand.vmem [shape: f32[4,16,128], index: 8, kind: output, shape index: {}]
  %s9 = sld [smem:[#allocation0]]
  $region65: #{gnn_encoder_forward_batched.1} parent=0
    _
  %s11 = ssub.s32 1, %s9
  %s12 = scalar_select 0, %s11, %s9
  loop: start=0, step=1, limit=6
  $region2: #{gnn_encoder_forward_batched.1} parent=0 // loop_pre_header
    _
  $region3: #{gnn_encoder_forward_batched.1} parent=0 // loop_header
    %s14 = sphi 0, %s18
    %p15 = scmp.ge.s32.totalorder %s14, 6
    %s24 = sphi 0, %s26
    %s27 = sphi 0, %s24
    %s28 = sphi 0, %s27
    %s44 = sphi 0, %s28
    %s50 = sphi 0, %s52
    %s53 = sphi 0, %s50
    %s54 = sphi 0, %s53
    %s70 = sphi 0, %s54
    %s76 = sphi 0, %s78
    %s79 = sphi 0, %s76
    %s80 = sphi 0, %s79
    %s96 = sphi 0, %s80
    %s102 = sphi 0, %s104
    %s105 = sphi 0, %s102
    %s106 = sphi 0, %s105
    %s122 = sphi 0, %s106
    %s126 = sphi 0, %s126
    %s128 = sphi 0, %s126
    %s129 = sphi 0, %s128
    %s143 = sphi 0, %s129
    %s147 = sphi 0, %s147
    %s149 = sphi 0, %s147
    %s150 = sphi 0, %s149
    %s164 = sphi 0, %s150
    %s168 = sphi 0, %s168
    %s170 = sphi 0, %s168
    %s171 = sphi 0, %s170
    %s185 = sphi 0, %s171
    %s189 = sphi 0, %s189
    %s191 = sphi 0, %s189
    %s192 = sphi 0, %s191
    %s206 = sphi 0, %s192
    %s212 = sphi 0, %s214
    %s215 = sphi 0, %s212
    %s216 = sphi 0, %s215
    %s232 = sphi 0, %s216
  $region4: #{gnn_encoder_forward_batched.1} parent=0 // loop_header_branch
    %17 = sbr.rel (%p15) target = $region8
  $region5: #{gnn_encoder_forward_batched.1} parent=0 // loop_body
    %s19 = ssub.s32 %s14, 1
    %s20 = ssub.s32 %s14, 2
    %s21 = sadd.s32 %s14, 1
    %s22 = ssub.s32 %s14, %s21
    %p23 = scmp.eq.s32.totalorder %s22, 0
    %s25 = sadd.s32 %s24, 1
    %s26 = scalar_select %p23, %s24, %s25
    %p29 = pneg %p23
    %p30 = scmp.eq.s32.totalorder %s14, 3
    %p31 = por %p29, %p30
    %p32 = scmp.ne.s32.totalorder %s24, %s27
    %p33 = scmp.eq.s32.totalorder %s14, 0
    %p34 = por %p32, %p33
    %p35 = scmp.ne.s32.totalorder %s24, %s27
    %p36 = scmp.eq.s32.totalorder %s19, 3
    %p37 = por %p35, %p36
    %p38 = scmp.ne.s32.totalorder %s27, %s28
    %p39 = scmp.eq.s32.totalorder %s19, 0
    %p40 = por %p38, %p39
    %p41 = scmp.ne.s32.totalorder %s27, %s28
    %p42 = scmp.eq.s32.totalorder %s20, 3
    %p43 = por %p41, %p42
    %p45 = scmp.ne.s32.totalorder %s28, %s44
    %p46 = scmp.eq.s32.totalorder %s20, 0
    %p47 = por %p45, %p46
    %s48 = ssub.s32 %s14, %s21
    %p49 = scmp.eq.s32.totalorder %s48, 0
    %s51 = sadd.s32 %s50, 1
    %s52 = scalar_select %p49, %s50, %s51
    %p55 = pneg %p49
    %p56 = scmp.eq.s32.totalorder %s14, 3
    %p57 = por %p55, %p56
    %p58 = scmp.ne.s32.totalorder %s50, %s53
    %p59 = scmp.eq.s32.totalorder %s14, 0
    %p60 = por %p58, %p59
    %p61 = scmp.ne.s32.totalorder %s50, %s53
    %p62 = scmp.eq.s32.totalorder %s19, 3
    %p63 = por %p61, %p62
    %p64 = scmp.ne.s32.totalorder %s53, %s54
    %p65 = scmp.eq.s32.totalorder %s19, 0
    %p66 = por %p64, %p65
    %p67 = scmp.ne.s32.totalorder %s53, %s54
    %p68 = scmp.eq.s32.totalorder %s20, 3
    %p69 = por %p67, %p68
    %p71 = scmp.ne.s32.totalorder %s54, %s70
    %p72 = scmp.eq.s32.totalorder %s20, 0
    %p73 = por %p71, %p72
    %s74 = ssub.s32 %s14, %s21
    %p75 = scmp.eq.s32.totalorder %s74, 0
    %s77 = sadd.s32 %s76, 1
    %s78 = scalar_select %p75, %s76, %s77
    %p81 = pneg %p75
    %p82 = scmp.eq.s32.totalorder %s14, 3
    %p83 = por %p81, %p82
    %p84 = scmp.ne.s32.totalorder %s76, %s79
    %p85 = scmp.eq.s32.totalorder %s14, 0
    %p86 = por %p84, %p85
    %p87 = scmp.ne.s32.totalorder %s76, %s79
    %p88 = scmp.eq.s32.totalorder %s19, 3
    %p89 = por %p87, %p88
    %p90 = scmp.ne.s32.totalorder %s79, %s80
    %p91 = scmp.eq.s32.totalorder %s19, 0
    %p92 = por %p90, %p91
    %p93 = scmp.ne.s32.totalorder %s79, %s80
    %p94 = scmp.eq.s32.totalorder %s20, 3
    %p95 = por %p93, %p94
    %p97 = scmp.ne.s32.totalorder %s80, %s96
    %p98 = scmp.eq.s32.totalorder %s20, 0
    %p99 = por %p97, %p98
    %s100 = ssub.s32 %s14, %s21
    %p101 = scmp.eq.s32.totalorder %s100, 0
    %s103 = sadd.s32 %s102, 1
    %s104 = scalar_select %p101, %s102, %s103
    %p107 = pneg %p101
    %p108 = scmp.eq.s32.totalorder %s14, 3
    %p109 = por %p107, %p108
    %p110 = scmp.ne.s32.totalorder %s102, %s105
    %p111 = scmp.eq.s32.totalorder %s14, 0
    %p112 = por %p110, %p111
    %p113 = scmp.ne.s32.totalorder %s102, %s105
    %p114 = scmp.eq.s32.totalorder %s19, 3
    %p115 = por %p113, %p114
    %p116 = scmp.ne.s32.totalorder %s105, %s106
    %p117 = scmp.eq.s32.totalorder %s19, 0
    %p118 = por %p116, %p117
    %p119 = scmp.ne.s32.totalorder %s105, %s106
    %p120 = scmp.eq.s32.totalorder %s20, 3
    %p121 = por %p119, %p120
    %p123 = scmp.ne.s32.totalorder %s106, %s122
    %p124 = scmp.eq.s32.totalorder %s20, 0
    %p125 = por %p123, %p124
    %s127 = sadd.s32 %s126, 1
    %p130 = scmp.eq.s32.totalorder %s14, 3
    %p131 = scmp.ne.s32.totalorder %s126, %s128
    %p132 = scmp.eq.s32.totalorder %s14, 0
    %p133 = por %p131, %p132
    %p134 = scmp.ne.s32.totalorder %s126, %s128
    %p135 = scmp.eq.s32.totalorder %s19, 3
    %p136 = por %p134, %p135
    %p137 = scmp.ne.s32.totalorder %s128, %s129
    %p138 = scmp.eq.s32.totalorder %s19, 0
    %p139 = por %p137, %p138
    %p140 = scmp.ne.s32.totalorder %s128, %s129
    %p141 = scmp.eq.s32.totalorder %s20, 3
    %p142 = por %p140, %p141
    %p144 = scmp.ne.s32.totalorder %s129, %s143
    %p145 = scmp.eq.s32.totalorder %s20, 0
    %p146 = por %p144, %p145
    %s148 = sadd.s32 %s147, 1
    %p151 = scmp.eq.s32.totalorder %s14, 3
    %p152 = scmp.ne.s32.totalorder %s147, %s149
    %p153 = scmp.eq.s32.totalorder %s14, 0
    %p154 = por %p152, %p153
    %p155 = scmp.ne.s32.totalorder %s147, %s149
    %p156 = scmp.eq.s32.totalorder %s19, 3
    %p157 = por %p155, %p156
    %p158 = scmp.ne.s32.totalorder %s149, %s150
    %p159 = scmp.eq.s32.totalorder %s19, 0
    %p160 = por %p158, %p159
    %p161 = scmp.ne.s32.totalorder %s149, %s150
    %p162 = scmp.eq.s32.totalorder %s20, 3
    %p163 = por %p161, %p162
    %p165 = scmp.ne.s32.totalorder %s150, %s164
    %p166 = scmp.eq.s32.totalorder %s20, 0
    %p167 = por %p165, %p166
    %s169 = sadd.s32 %s168, 1
    %p172 = scmp.eq.s32.totalorder %s14, 3
    %p173 = scmp.ne.s32.totalorder %s168, %s170
    %p174 = scmp.eq.s32.totalorder %s14, 0
    %p175 = por %p173, %p174
    %p176 = scmp.ne.s32.totalorder %s168, %s170
    %p177 = scmp.eq.s32.totalorder %s19, 3
    %p178 = por %p176, %p177
    %p179 = scmp.ne.s32.totalorder %s170, %s171
    %p180 = scmp.eq.s32.totalorder %s19, 0
    %p181 = por %p179, %p180
    %p182 = scmp.ne.s32.totalorder %s170, %s171
    %p183 = scmp.eq.s32.totalorder %s20, 3
    %p184 = por %p182, %p183
    %p186 = scmp.ne.s32.totalorder %s171, %s185
    %p187 = scmp.eq.s32.totalorder %s20, 0
    %p188 = por %p186, %p187
    %s190 = sadd.s32 %s189, 1
    %p193 = scmp.eq.s32.totalorder %s14, 3
    %p194 = scmp.ne.s32.totalorder %s189, %s191
    %p195 = scmp.eq.s32.totalorder %s14, 0
    %p196 = por %p194, %p195
    %p197 = scmp.ne.s32.totalorder %s189, %s191
    %p198 = scmp.eq.s32.totalorder %s19, 3
    %p199 = por %p197, %p198
    %p200 = scmp.ne.s32.totalorder %s191, %s192
    %p201 = scmp.eq.s32.totalorder %s19, 0
    %p202 = por %p200, %p201
    %p203 = scmp.ne.s32.totalorder %s191, %s192
    %p204 = scmp.eq.s32.totalorder %s20, 3
    %p205 = por %p203, %p204
    %p207 = scmp.ne.s32.totalorder %s192, %s206
    %p208 = scmp.eq.s32.totalorder %s20, 0
    %p209 = por %p207, %p208
    %s210 = ssub.s32 %s14, %s21
    %p211 = scmp.eq.s32.totalorder %s210, 0
    %s213 = sadd.s32 %s212, 1
    %s214 = scalar_select %p211, %s212, %s213
    %p217 = pneg %p211
    %p218 = scmp.eq.s32.totalorder %s14, 3
    %p219 = por %p217, %p218
    %p220 = scmp.ne.s32.totalorder %s212, %s215
    %p221 = scmp.eq.s32.totalorder %s14, 0
    %p222 = por %p220, %p221
    %p223 = scmp.ne.s32.totalorder %s212, %s215
    %p224 = scmp.eq.s32.totalorder %s19, 3
    %p225 = por %p223, %p224
    %p226 = scmp.ne.s32.totalorder %s215, %s216
    %p227 = scmp.eq.s32.totalorder %s19, 0
    %p228 = por %p226, %p227
    %p229 = scmp.ne.s32.totalorder %s215, %s216
    %p230 = scmp.eq.s32.totalorder %s20, 3
    %p231 = por %p229, %p230
    %p233 = scmp.ne.s32.totalorder %s216, %s232
    %p234 = scmp.eq.s32.totalorder %s20, 0
    %p235 = por %p233, %p234
    %p236 = scmp.le.s32.totalorder 1, %s14
    %p237 = scmp.lt.s32.totalorder %s14, 5
    %p238 = pnand %p236, %p237
    %p239 = pneg %p238
    // Predicated region
    $region9: #{gnn_encoder_forward_batched.1} parent=5 // pred_check
      _
    $region10: #{gnn_encoder_forward_batched.1} parent=5 // pred_check_branch
      %241 = sbr.rel (%p238) target = $region12
    $region11: #{gnn_encoder_forward_batched.1} parent=5 // pred_region
      %s242 = ssub.s32 %s14, 1
      // Predicated region
      $region13: #{gnn_encoder_forward_batched.1} parent=11 // pred_check
        %p243 = pneg %p139
      $region14: #{gnn_encoder_forward_batched.1} parent=11 // pred_check_branch
        %245 = sbr.rel (%p243) target = $region16
      $region15: #{gnn_encoder_forward_batched.1} parent=11 // pred_region
        _
      $region16: #{gnn_encoder_forward_batched.1} parent=11 // pred_fallthru
        _
      // Predicated region
      $region17: #{gnn_encoder_forward_batched.1} parent=11 // pred_check
        %p246 = pneg %p160
      $region18: #{gnn_encoder_forward_batched.1} parent=11 // pred_check_branch
        %248 = sbr.rel (%p246) target = $region20
      $region19: #{gnn_encoder_forward_batched.1} parent=11 // pred_region
        _
      $region20: #{gnn_encoder_forward_batched.1} parent=11 // pred_fallthru
        _
      // Predicated region
      $region21: #{gnn_encoder_forward_batched.1} parent=11 // pred_check
        %p249 = pneg %p181
      $region22: #{gnn_encoder_forward_batched.1} parent=11 // pred_check_branch
        %251 = sbr.rel (%p249) target = $region24
      $region23: #{gnn_encoder_forward_batched.1} parent=11 // pred_region
        _
      $region24: #{gnn_encoder_forward_batched.1} parent=11 // pred_fallthru
        _
      // Predicated region
      $region25: #{gnn_encoder_forward_batched.1} parent=11 // pred_check
        %p252 = pneg %p202
      $region26: #{gnn_encoder_forward_batched.1} parent=11 // pred_check_branch
        %254 = sbr.rel (%p252) target = $region28
      $region27: #{gnn_encoder_forward_batched.1} parent=11 // pred_region
        _
      $region28: #{gnn_encoder_forward_batched.1} parent=11 // pred_fallthru
        _
    $region12: #{gnn_encoder_forward_batched.1} parent=5 // pred_fallthru
      _
    %p255 = scmp.lt.s32.totalorder %s14, 4
    // Predicated region
    $region29: #{gnn_encoder_forward_batched.1} parent=5 // pred_check
      %p256 = pneg %p255
    $region30: #{gnn_encoder_forward_batched.1} parent=5 // pred_check_branch
      %258 = sbr.rel (%p256) target = $region32
    $region31: #{gnn_encoder_forward_batched.1} parent=5 // pred_region
      // Predicated region
      $region33: #{gnn_encoder_forward_batched.1} parent=31 // pred_check
        %p259 = pneg %p34
      $region34: #{gnn_encoder_forward_batched.1} parent=31 // pred_check_branch
        %261 = sbr.rel (%p259) target = $region36
      $region35: #{gnn_encoder_forward_batched.1} parent=31 // pred_region
        %p262 = scmp.lt.s32.totalorder %s14, 3
        %s263 = scalar_select %p262, %s14, 3
        %s264 = smul.addr %s263, 2
        %s265 = smul.addr %s264, 8
        %s266 = scalar_lea.vmem %s0, %s265
      $region36: #{gnn_encoder_forward_batched.1} parent=31 // pred_fallthru
        _
      // Predicated region
      $region37: #{gnn_encoder_forward_batched.1} parent=31 // pred_check
        %p267 = pneg %p60
      $region38: #{gnn_encoder_forward_batched.1} parent=31 // pred_check_branch
        %269 = sbr.rel (%p267) target = $region40
      $region39: #{gnn_encoder_forward_batched.1} parent=31 // pred_region
        %p270 = scmp.lt.s32.totalorder %s14, 3
        %s271 = scalar_select %p270, %s14, 3
        %s272 = smul.addr %s271, 16
        %s273 = smul.addr %s272, 8
        %s274 = scalar_lea.vmem %s1, %s273
      $region40: #{gnn_encoder_forward_batched.1} parent=31 // pred_fallthru
        _
      // Predicated region
      $region41: #{gnn_encoder_forward_batched.1} parent=31 // pred_check
        %p275 = pneg %p86
      $region42: #{gnn_encoder_forward_batched.1} parent=31 // pred_check_branch
        %277 = sbr.rel (%p275) target = $region44
      $region43: #{gnn_encoder_forward_batched.1} parent=31 // pred_region
        %p278 = scmp.lt.s32.totalorder %s14, 3
        %s279 = scalar_select %p278, %s14, 3
        %s280 = smul.addr %s279, 16
        %s281 = smul.addr %s280, 8
        %s282 = scalar_lea.vmem %s2, %s281
      $region44: #{gnn_encoder_forward_batched.1} parent=31 // pred_fallthru
        _
      // Predicated region
      $region45: #{gnn_encoder_forward_batched.1} parent=31 // pred_check
        %p283 = pneg %p112
      $region46: #{gnn_encoder_forward_batched.1} parent=31 // pred_check_branch
        %285 = sbr.rel (%p283) target = $region48
      $region47: #{gnn_encoder_forward_batched.1} parent=31 // pred_region
        %p286 = scmp.lt.s32.totalorder %s14, 3
        %s287 = scalar_select %p286, %s14, 3
        %s288 = scalar_lea.vmem %s3, %s287
      $region48: #{gnn_encoder_forward_batched.1} parent=31 // pred_fallthru
        _
    $region32: #{gnn_encoder_forward_batched.1} parent=5 // pred_fallthru
      _
    %p289 = scmp.le.s32.totalorder 1, %s14
    %p290 = scmp.lt.s32.totalorder %s14, 5
    %p291 = pnand %p289, %p290
    %p292 = pneg %p291
    // Predicated region
    $region49: #{gnn_encoder_forward_batched.1} parent=5 // pred_check
      _
    $region50: #{gnn_encoder_forward_batched.1} parent=5 // pred_check_branch
      %294 = sbr.rel (%p291) target = $region52
    $region51: #{gnn_encoder_forward_batched.1} parent=5 // pred_region
      %s295 = ssub.s32 %s14, 1
      %p296 = scmp.lt.s32.totalorder %s19, 3
      %s297 = scalar_select %p296, %s19, 3
      %s298 = smul.addr %s297, 2
      %s299 = smul.addr %s298, 8
      %s300 = scalar_lea.vmem %s0, %s299
      %p301 = pneg %p40
      %p302 = pneg %p37
      %p303 = scmp.lt.s32.totalorder %s19, 3
      %s304 = scalar_select %p303, %s19, 3
      %s305 = smul.addr %s304, 16
      %s306 = smul.addr %s305, 8
      %s307 = scalar_lea.vmem %s1, %s306
      %p308 = pneg %p66
      %p309 = pneg %p63
      %p310 = scmp.lt.s32.totalorder %s19, 3
      %s311 = scalar_select %p310, %s19, 3
      %s312 = smul.addr %s311, 16
      %s313 = smul.addr %s312, 8
      %s314 = scalar_lea.vmem %s2, %s313
      %p315 = pneg %p92
      %p316 = pneg %p89
      %p317 = scmp.lt.s32.totalorder %s19, 3
      %s318 = scalar_select %p317, %s19, 3
      %s319 = scalar_lea.vmem %s3, %s318
      %p320 = pneg %p118
      %p321 = pneg %p115
      %p322 = pneg %p139
      %p323 = pneg %p136
      %p324 = pneg %p160
      %p325 = pneg %p157
      %p326 = pneg %p181
      %p327 = pneg %p178
      %p328 = pneg %p202
      %p329 = pneg %p199
      %p330 = pneg %p228
      %p331 = pneg %p225
      %p332 = scmp.lt.s32.totalorder %s19, 3
      %s333 = scalar_select %p332, %s19, 3
      %s334 = smul.addr %s333, 2
      %s335 = smul.addr %s334, 8
      %s336 = scalar_lea.vmem %s8, %s335
      %p337 = scmp.lt.s32.totalorder %s19, 3
      %s338 = scalar_select %p337, %s19, 3
      %s339 = smul.addr %s338, 2
      %s340 = smul.addr %s339, 8
      %s341 = scalar_lea.vmem %s0, %s340
      %p342 = scmp.lt.s32.totalorder %s19, 3
      %s343 = scalar_select %p342, %s19, 3
      %s344 = smul.addr %s343, 16
      %s345 = smul.addr %s344, 8
      %s346 = scalar_lea.vmem %s1, %s345
      %p347 = scmp.lt.s32.totalorder %s19, 3
      %s348 = scalar_select %p347, %s19, 3
      %s349 = smul.addr %s348, 16
      %s350 = smul.addr %s349, 8
      %s351 = scalar_lea.vmem %s2, %s350
      %p352 = scmp.lt.s32.totalorder %s19, 3
      %s353 = scalar_select %p352, %s19, 3
      %s354 = scalar_lea.vmem %s3, %s353
      %p355 = scmp.lt.s32.totalorder %s19, 3
      %s356 = scalar_select %p355, %s19, 3
      %s357 = smul.addr %s356, 2
      %s358 = smul.addr %s357, 8
      %s359 = scalar_lea.vmem %s8, %s358
      %v360 = vld [vmem:[%s341] sm:$0xff]
      %v361 = vld [vmem:[%s341 + $0x8] sm:$0xff]
      %v362 = vld [vmem:[%s346] sm:$0xff]
      %v363 = vld [vmem:[%s346 + $0x8] sm:$0xff]
      %v364 = vld [vmem:[%s346 + $0x10] sm:$0xff]
      %v365 = vld [vmem:[%s346 + $0x18] sm:$0xff]
      %v366 = vld [vmem:[%s346 + $0x20] sm:$0xff]
      %v367 = vld [vmem:[%s346 + $0x28] sm:$0xff]
      %v368 = vld [vmem:[%s346 + $0x30] sm:$0xff]
      %v369 = vld [vmem:[%s346 + $0x38] sm:$0xff]
      %v370 = vld [vmem:[%s346 + $0x40] sm:$0xff]
      %v371 = vld [vmem:[%s346 + $0x48] sm:$0xff]
      %v372 = vld [vmem:[%s346 + $0x50] sm:$0xff]
      %v373 = vld [vmem:[%s346 + $0x58] sm:$0xff]
      %v374 = vld [vmem:[%s346 + $0x60] sm:$0xff]
      %v375 = vld [vmem:[%s346 + $0x68] sm:$0xff]
      %v376 = vld [vmem:[%s346 + $0x70] sm:$0xff]
      %v377 = vld [vmem:[%s346 + $0x78] sm:$0xff]
      %v378 = vld [vmem:[%s351] sm:$0xff]
      %v379 = vld [vmem:[%s351 + $0x8] sm:$0xff]
      %v380 = vld [vmem:[%s351 + $0x10] sm:$0xff]
      %v381 = vld [vmem:[%s351 + $0x18] sm:$0xff]
      %v382 = vld [vmem:[%s351 + $0x20] sm:$0xff]
      %v383 = vld [vmem:[%s351 + $0x28] sm:$0xff]
      %v384 = vld [vmem:[%s351 + $0x30] sm:$0xff]
      %v385 = vld [vmem:[%s351 + $0x38] sm:$0xff]
      %v386 = vld [vmem:[%s351 + $0x40] sm:$0xff]
      %v387 = vld [vmem:[%s351 + $0x48] sm:$0xff]
      %v388 = vld [vmem:[%s351 + $0x50] sm:$0xff]
      %v389 = vld [vmem:[%s351 + $0x58] sm:$0xff]
      %v390 = vld [vmem:[%s351 + $0x60] sm:$0xff]
      %v391 = vld [vmem:[%s351 + $0x68] sm:$0xff]
      %v392 = vld [vmem:[%s351 + $0x70] sm:$0xff]
      %v393 = vld [vmem:[%s351 + $0x78] sm:$0xff]
      %v394 = vld [vmem:[%s354] sm:$0x1]
      %v395 = vlaneseq
      %v396 = vand.u32 %v395, 127
      %397 = vset.pattern.permute.xlu0 0
      %398 = vperm.xlu0 %397, %v378
      %v399 = vpop.permute.xlu0 %398
      %400 = vset.pattern.permute.xlu0 0
      %401 = vperm.xlu0 %400, %v379
      %v402 = vpop.permute.xlu0 %401
      %403 = vset.pattern.permute.xlu0 0
      %404 = vperm.xlu0 %403, %v380
      %v405 = vpop.permute.xlu0 %404
      %406 = vset.pattern.permute.xlu0 0
      %407 = vperm.xlu0 %406, %v381
      %v408 = vpop.permute.xlu0 %407
      %409 = vset.pattern.permute.xlu0 0
      %410 = vperm.xlu0 %409, %v382
      %v411 = vpop.permute.xlu0 %410
      %412 = vset.pattern.permute.xlu0 0
      %413 = vperm.xlu0 %412, %v383
      %v414 = vpop.permute.xlu0 %413
      %415 = vset.pattern.permute.xlu0 0
      %416 = vperm.xlu0 %415, %v384
      %v417 = vpop.permute.xlu0 %416
      %418 = vset.pattern.permute.xlu0 0
      %419 = vperm.xlu0 %418, %v385
      %v420 = vpop.permute.xlu0 %419
      %421 = vset.pattern.permute.xlu0 0
      %422 = vperm.xlu0 %421, %v386
      %v423 = vpop.permute.xlu0 %422
      %424 = vset.pattern.permute.xlu0 0
      %425 = vperm.xlu0 %424, %v387
      %v426 = vpop.permute.xlu0 %425
      %427 = vset.pattern.permute.xlu0 0
      %428 = vperm.xlu0 %427, %v388
      %v429 = vpop.permute.xlu0 %428
      %430 = vset.pattern.permute.xlu0 0
      %431 = vperm.xlu0 %430, %v389
      %v432 = vpop.permute.xlu0 %431
      %433 = vset.pattern.permute.xlu0 0
      %434 = vperm.xlu0 %433, %v390
      %v435 = vpop.permute.xlu0 %434
      %436 = vset.pattern.permute.xlu0 0
      %437 = vperm.xlu0 %436, %v391
      %v438 = vpop.permute.xlu0 %437
      %439 = vset.pattern.permute.xlu0 0
      %440 = vperm.xlu0 %439, %v392
      %v441 = vpop.permute.xlu0 %440
      %442 = vset.pattern.permute.xlu0 0
      %443 = vperm.xlu0 %442, %v393
      %v444 = vpop.permute.xlu0 %443
      %vm445 = vcmp.eq.s32.totalorder %v399, %v396
      %vm446 = vcmp.eq.s32.totalorder %v402, %v396
      %vm447 = vcmp.eq.s32.totalorder %v405, %v396
      %vm448 = vcmp.eq.s32.totalorder %v408, %v396
      %vm449 = vcmp.eq.s32.totalorder %v411, %v396
      %vm450 = vcmp.eq.s32.totalorder %v414, %v396
      %vm451 = vcmp.eq.s32.totalorder %v417, %v396
      %vm452 = vcmp.eq.s32.totalorder %v420, %v396
      %vm453 = vcmp.eq.s32.totalorder %v423, %v396
      %vm454 = vcmp.eq.s32.totalorder %v426, %v396
      %vm455 = vcmp.eq.s32.totalorder %v429, %v396
      %vm456 = vcmp.eq.s32.totalorder %v432, %v396
      %vm457 = vcmp.eq.s32.totalorder %v435, %v396
      %vm458 = vcmp.eq.s32.totalorder %v438, %v396
      %vm459 = vcmp.eq.s32.totalorder %v441, %v396
      %vm460 = vcmp.eq.s32.totalorder %v444, %v396
      %v461 = vsel %vm445, 1, 0
      %v462 = vsel %vm446, 1, 0
      %v463 = vsel %vm447, 1, 0
      %v464 = vsel %vm448, 1, 0
      %v465 = vsel %vm449, 1, 0
      %v466 = vsel %vm450, 1, 0
      %v467 = vsel %vm451, 1, 0
      %v468 = vsel %vm452, 1, 0
      %v469 = vsel %vm453, 1, 0
      %v470 = vsel %vm454, 1, 0
      %v471 = vsel %vm455, 1, 0
      %v472 = vsel %vm456, 1, 0
      %v473 = vsel %vm457, 1, 0
      %v474 = vsel %vm458, 1, 0
      %v475 = vsel %vm459, 1, 0
      %v476 = vsel %vm460, 1, 0
      %v477 = vcvt.s32.f32 %v461
      %v478 = vcvt.s32.f32 %v462
      %v479 = vcvt.s32.f32 %v463
      %v480 = vcvt.s32.f32 %v464
      %v481 = vcvt.s32.f32 %v465
      %v482 = vcvt.s32.f32 %v466
      %v483 = vcvt.s32.f32 %v467
      %v484 = vcvt.s32.f32 %v468
      %v485 = vcvt.s32.f32 %v469
      %v486 = vcvt.s32.f32 %v470
      %v487 = vcvt.s32.f32 %v471
      %v488 = vcvt.s32.f32 %v472
      %v489 = vcvt.s32.f32 %v473
      %v490 = vcvt.s32.f32 %v474
      %v491 = vcvt.s32.f32 %v475
      %v492 = vcvt.s32.f32 %v476
      %v493 = vlaneseq
      %v494 = vshrl.u32 %v493, 7
      %v495 = vadd.s32 %v494, 8
      %v496 = vlaneseq
      %v497 = vshrl.u32 %v496, 7
      %v498 = vsub.s32 0, %v497
      %v499 = vrot.slane %v394, %v498
      %vm500 = vcmp.eq.s32.totalorder %v499, %v494
      %vm501 = vcmp.eq.s32.totalorder %v499, %v495
      %v502 = vsel %vm500, 1, 0
      %v503 = vsel %vm501, 1, 0
      %v504 = vcvt.s32.f32 %v502
      %v505 = vcvt.s32.f32 %v503
      %506 = vadd.xlane.f32.xlu0 %v504
      %v507 = vpop.xlane.xlu0 %506
      %508 = vadd.xlane.f32.xlu0 %v505
      %v509 = vpop.xlane.xlu0 %508
      %v510 = vmax.f32 %v507, 1.0
      %v511 = vmax.f32 %v509, 1.0
      %v512 = vrcp.pop %v510
      %v513 = vmul.f32 %v504, %v512
      %v514 = vrcp.pop %v511
      %v515 = vmul.f32 %v505, %v514
      %v516 = vld [vmem:[%s4] sm:$0xff]
      %v517 = vld [vmem:[%s4 + $0x8] sm:$0xff]
      %v518 = vld [vmem:[%s4 + $0x10] sm:$0xff]
      %v519 = vld [vmem:[%s4 + $0x18] sm:$0xff]
      %v520 = vld [vmem:[%s4 + $0x20] sm:$0xff]
      %v521 = vld [vmem:[%s4 + $0x28] sm:$0xff]
      %v522 = vlaneseq
      %v523 = vshrl.u32 %v522, 7
      %v524 = vsub.s32 6, %v523
      %v525 = vrot.slane %v516, %v524
      %v526 = vlaneseq
      %v527 = vshrl.u32 %v526, 7
      %v528 = vsub.s32 6, %v527
      %v529 = vrot.slane %v517, %v528
      %v530 = vlaneseq
      %v531 = vshrl.u32 %v530, 7
      %v532 = vsub.s32 6, %v531
      %v533 = vrot.slane %v518, %v532
      %v534 = vlaneseq
      %v535 = vshrl.u32 %v534, 7
      %v536 = vsub.s32 6, %v535
      %v537 = vrot.slane %v519, %v536
      %v538 = vlaneseq
      %v539 = vshrl.u32 %v538, 7
      %v540 = vsub.s32 6, %v539
      %v541 = vrot.slane %v520, %v540
      %v542 = vlaneseq
      %v543 = vshrl.u32 %v542, 7
      %v544 = vsub.s32 6, %v543
      %v545 = vrot.slane %v521, %v544
      %vm546 = vcmask 48128
      %v548 = vsel %vm546, %v362, 0
      %v551 = vsel %vm546, %v363, 0
      %v554 = vsel %vm546, %v364, 0
      %v557 = vsel %vm546, %v365, 0
      %v560 = vsel %vm546, %v366, 0
      %v563 = vsel %vm546, %v367, 0
      %v566 = vsel %vm546, %v368, 0
      %v569 = vsel %vm546, %v369, 0
      %v572 = vsel %vm546, %v370, 0
      %v575 = vsel %vm546, %v371, 0
      %v578 = vsel %vm546, %v372, 0
      %v581 = vsel %vm546, %v373, 0
      %v584 = vsel %vm546, %v374, 0
      %v587 = vsel %vm546, %v375, 0
      %v590 = vsel %vm546, %v376, 0
      %v593 = vsel %vm546, %v377, 0
      %vm595 = vcmask 1045504
      %v597 = vsel %vm595, %v516, 0
      %v600 = vsel %vm595, %v517, 0
      %v603 = vsel %vm595, %v518, 0
      %v606 = vsel %vm595, %v519, 0
      %v609 = vsel %vm595, %v520, 0
      %v612 = vsel %vm595, %v521, 0
      %614 = vmatprep.subr.mxu0 0.0
      %615 = vmatpush1.msra.mxu0 0.0
      %616 = vmatprep.subr.mxu0 0.0
      %617 = vmatpush1.msra.mxu0 0.0
      %618 = vmatprep.subr.mxu0 0.0
      %619 = vmatpush1.msra.mxu0 0.0
      %620 = vmatprep.subr.mxu0 0.0
      %621 = vmatpush1.msra.mxu0 0.0
      %622 = vmatprep.subr.mxu0 0.0
      %623 = vmatpush1.msra.mxu0 0.0
      %624 = vmatprep.subr.mxu0 0.0
      %625 = vmatpush1.msra.mxu0 0.0
      %626 = vmatprep.subr.mxu0 0.0
      %627 = vmatpush1.msra.mxu0 0.0
      %628 = vmatprep.subr.mxu0 0.0
      %629 = vmatpush1.msra.mxu0 0.0
      %630 = vmatprep.subr.mxu0 0.0
      %631 = vmatpush1.msra.mxu0 0.0
      %632 = vmatprep.subr.mxu0 0.0
      %633 = vmatpush1.msra.mxu0 0.0
      %634 = vmatprep.subr.mxu0 0.0
      %635 = vmatpush1.msra.mxu0 0.0
      %636 = vmatprep.subr.mxu0 0.0
      %637 = vmatpush1.msra.mxu0 0.0
      %638 = vmatprep.subr.mxu0 0.0
      %639 = vmatpush1.msra.mxu0 0.0
      %640 = vmatprep.subr.mxu0 0.0
      %641 = vmatpush1.msra.mxu0 0.0
      %642 = vmatprep.subr.mxu0 0.0
      %643 = vmatpush1.msra.mxu0 0.0
      %644 = vmatprep.subr.mxu0 %v600
      %645 = vmatpush1.msra.mxu0 %v597
      %646 = vmatprep.subr.mxu0 0.0
      %647 = vmatpush2.msra.mxu0 0.0
      %648 = vmatprep.subr.mxu0 0.0
      %649 = vmatpush2.msra.mxu0 0.0
      %650 = vmatprep.subr.mxu0 0.0
      %651 = vmatpush2.msra.mxu0 0.0
      %652 = vmatprep.subr.mxu0 0.0
      %653 = vmatpush2.msra.mxu0 0.0
      %654 = vmatprep.subr.mxu0 0.0
      %655 = vmatpush2.msra.mxu0 0.0
      %656 = vmatprep.subr.mxu0 0.0
      %657 = vmatpush2.msra.mxu0 0.0
      %658 = vmatprep.subr.mxu0 0.0
      %659 = vmatpush2.msra.mxu0 0.0
      %660 = vmatprep.subr.mxu0 0.0
      %661 = vmatpush2.msra.mxu0 0.0
      %662 = vmatprep.subr.mxu0 0.0
      %663 = vmatpush2.msra.mxu0 0.0
      %664 = vmatprep.subr.mxu0 0.0
      %665 = vmatpush2.msra.mxu0 0.0
      %666 = vmatprep.subr.mxu0 0.0
      %667 = vmatpush2.msra.mxu0 0.0
      %668 = vmatprep.subr.mxu0 0.0
      %669 = vmatpush2.msra.mxu0 0.0
      %670 = vmatprep.subr.mxu0 0.0
      %671 = vmatpush2.msra.mxu0 0.0
      %672 = vmatprep.subr.mxu0 0.0
      %673 = vmatpush2.msra.mxu0 0.0
      %674 = vmatprep.subr.mxu0 0.0
      %675 = vmatpush2.msra.mxu0 0.0
      %676 = vmatprep.subr.mxu0 0.0
      %677 = vmatpush2.msra.mxu0 0.0
      %678 = vmatprep.mubr.f32.mxu0 0.0
      %679 = vmatmul.mubr.f32.gmra.mxu0 %v548
      %v680 = vpop.f32.mrf.mxu0
      %v681 = vadd.f32 %v525, %v680
      %v682 = vpop.f32.mrf.mxu0
      %v683 = vadd.f32 %v529, %v682
      %684 = vmatprep.mubr.f32.mxu0 0.0
      %685 = vmatmul.mubr.f32.gmra.mxu0 %v551
      %v686 = vpop.f32.mrf.mxu0
      %v687 = vadd.f32 %v525, %v686
      %v688 = vpop.f32.mrf.mxu0
      %v689 = vadd.f32 %v529, %v688
      %690 = vmatprep.mubr.f32.mxu0 0.0
      %691 = vmatmul.mubr.f32.gmra.mxu0 %v554
      %v692 = vpop.f32.mrf.mxu0
      %v693 = vadd.f32 %v525, %v692
      %v694 = vpop.f32.mrf.mxu0
      %v695 = vadd.f32 %v529, %v694
      %696 = vmatprep.mubr.f32.mxu0 0.0
      %697 = vmatmul.mubr.f32.gmra.mxu0 %v557
      %v698 = vpop.f32.mrf.mxu0
      %v699 = vadd.f32 %v525, %v698
      %v700 = vpop.f32.mrf.mxu0
      %v701 = vadd.f32 %v529, %v700
      %702 = vmatprep.mubr.f32.mxu0 0.0
      %703 = vmatmul.mubr.f32.gmra.mxu0 %v560
      %v704 = vpop.f32.mrf.mxu0
      %v705 = vadd.f32 %v525, %v704
      %v706 = vpop.f32.mrf.mxu0
      %v707 = vadd.f32 %v529, %v706
      %708 = vmatprep.mubr.f32.mxu0 0.0
      %709 = vmatmul.mubr.f32.gmra.mxu0 %v563
      %v710 = vpop.f32.mrf.mxu0
      %v711 = vadd.f32 %v525, %v710
      %v712 = vpop.f32.mrf.mxu0
      %v713 = vadd.f32 %v529, %v712
      %714 = vmatprep.mubr.f32.mxu0 0.0
      %715 = vmatmul.mubr.f32.gmra.mxu0 %v566
      %v716 = vpop.f32.mrf.mxu0
      %v717 = vadd.f32 %v525, %v716
      %v718 = vpop.f32.mrf.mxu0
      %v719 = vadd.f32 %v529, %v718
      %720 = vmatprep.mubr.f32.mxu0 0.0
      %721 = vmatmul.mubr.f32.gmra.mxu0 %v569
      %v722 = vpop.f32.mrf.mxu0
      %v723 = vadd.f32 %v525, %v722
      %v724 = vpop.f32.mrf.mxu0
      %v725 = vadd.f32 %v529, %v724
      %726 = vmatprep.mubr.f32.mxu0 0.0
      %727 = vmatmul.mubr.f32.gmra.mxu0 %v572
      %v728 = vpop.f32.mrf.mxu0
      %v729 = vadd.f32 %v525, %v728
      %v730 = vpop.f32.mrf.mxu0
      %v731 = vadd.f32 %v529, %v730
      %732 = vmatprep.mubr.f32.mxu0 0.0
      %733 = vmatmul.mubr.f32.gmra.mxu0 %v575
      %v734 = vpop.f32.mrf.mxu0
      %v735 = vadd.f32 %v525, %v734
      %v736 = vpop.f32.mrf.mxu0
      %v737 = vadd.f32 %v529, %v736
      %738 = vmatprep.mubr.f32.mxu0 0.0
      %739 = vmatmul.mubr.f32.gmra.mxu0 %v578
      %v740 = vpop.f32.mrf.mxu0
      %v741 = vadd.f32 %v525, %v740
      %v742 = vpop.f32.mrf.mxu0
      %v743 = vadd.f32 %v529, %v742
      %744 = vmatprep.mubr.f32.mxu0 0.0
      %745 = vmatmul.mubr.f32.gmra.mxu0 %v581
      %v746 = vpop.f32.mrf.mxu0
      %v747 = vadd.f32 %v525, %v746
      %v748 = vpop.f32.mrf.mxu0
      %v749 = vadd.f32 %v529, %v748
      %750 = vmatprep.mubr.f32.mxu0 0.0
      %751 = vmatmul.mubr.f32.gmra.mxu0 %v584
      %v752 = vpop.f32.mrf.mxu0
      %v753 = vadd.f32 %v525, %v752
      %v754 = vpop.f32.mrf.mxu0
      %v755 = vadd.f32 %v529, %v754
      %756 = vmatprep.mubr.f32.mxu0 0.0
      %757 = vmatmul.mubr.f32.gmra.mxu0 %v587
      %v758 = vpop.f32.mrf.mxu0
      %v759 = vadd.f32 %v525, %v758
      %v760 = vpop.f32.mrf.mxu0
      %v761 = vadd.f32 %v529, %v760
      %762 = vmatprep.mubr.f32.mxu0 0.0
      %763 = vmatmul.mubr.f32.gmra.mxu0 %v590
      %v764 = vpop.f32.mrf.mxu0
      %v765 = vadd.f32 %v525, %v764
      %v766 = vpop.f32.mrf.mxu0
      %v767 = vadd.f32 %v529, %v766
      %768 = vmatprep.mubr.f32.mxu0 0.0
      %769 = vmatmul.mubr.f32.gmra.mxu0 %v593
      %v770 = vpop.f32.mrf.mxu0
      %v771 = vadd.f32 %v525, %v770
      %v772 = vpop.f32.mrf.mxu0
      %v773 = vadd.f32 %v529, %v772
      %774 = vdwg.mxu0
      %775 = vmatprep.subr.mxu0 0.0
      %776 = vmatpush1.msra.mxu0 0.0
      %777 = vmatprep.subr.mxu0 0.0
      %778 = vmatpush1.msra.mxu0 0.0
      %779 = vmatprep.subr.mxu0 0.0
      %780 = vmatpush1.msra.mxu0 0.0
      %781 = vmatprep.subr.mxu0 0.0
      %782 = vmatpush1.msra.mxu0 0.0
      %783 = vmatprep.subr.mxu0 0.0
      %784 = vmatpush1.msra.mxu0 0.0
      %785 = vmatprep.subr.mxu0 0.0
      %786 = vmatpush1.msra.mxu0 0.0
      %787 = vmatprep.subr.mxu0 0.0
      %788 = vmatpush1.msra.mxu0 0.0
      %789 = vmatprep.subr.mxu0 0.0
      %790 = vmatpush1.msra.mxu0 0.0
      %791 = vmatprep.subr.mxu0 0.0
      %792 = vmatpush1.msra.mxu0 0.0
      %793 = vmatprep.subr.mxu0 0.0
      %794 = vmatpush1.msra.mxu0 0.0
      %795 = vmatprep.subr.mxu0 0.0
      %796 = vmatpush1.msra.mxu0 0.0
      %797 = vmatprep.subr.mxu0 0.0
      %798 = vmatpush1.msra.mxu0 0.0
      %799 = vmatprep.subr.mxu0 0.0
      %800 = vmatpush1.msra.mxu0 0.0
      %801 = vmatprep.subr.mxu0 0.0
      %802 = vmatpush1.msra.mxu0 0.0
      %803 = vmatprep.subr.mxu0 0.0
      %804 = vmatpush1.msra.mxu0 0.0
      %805 = vmatprep.subr.mxu0 %v606
      %806 = vmatpush1.msra.mxu0 %v603
      %807 = vmatprep.subr.mxu0 0.0
      %808 = vmatpush2.msra.mxu0 0.0
      %809 = vmatprep.subr.mxu0 0.0
      %810 = vmatpush2.msra.mxu0 0.0
      %811 = vmatprep.subr.mxu0 0.0
      %812 = vmatpush2.msra.mxu0 0.0
      %813 = vmatprep.subr.mxu0 0.0
      %814 = vmatpush2.msra.mxu0 0.0
      %815 = vmatprep.subr.mxu0 0.0
      %816 = vmatpush2.msra.mxu0 0.0
      %817 = vmatprep.subr.mxu0 0.0
      %818 = vmatpush2.msra.mxu0 0.0
      %819 = vmatprep.subr.mxu0 0.0
      %820 = vmatpush2.msra.mxu0 0.0
      %821 = vmatprep.subr.mxu0 0.0
      %822 = vmatpush2.msra.mxu0 0.0
      %823 = vmatprep.subr.mxu0 0.0
      %824 = vmatpush2.msra.mxu0 0.0
      %825 = vmatprep.subr.mxu0 0.0
      %826 = vmatpush2.msra.mxu0 0.0
      %827 = vmatprep.subr.mxu0 0.0
      %828 = vmatpush2.msra.mxu0 0.0
      %829 = vmatprep.subr.mxu0 0.0
      %830 = vmatpush2.msra.mxu0 0.0
      %831 = vmatprep.subr.mxu0 0.0
      %832 = vmatpush2.msra.mxu0 0.0
      %833 = vmatprep.subr.mxu0 0.0
      %834 = vmatpush2.msra.mxu0 0.0
      %835 = vmatprep.subr.mxu0 0.0
      %836 = vmatpush2.msra.mxu0 0.0
      %837 = vmatprep.subr.mxu0 0.0
      %838 = vmatpush2.msra.mxu0 0.0
      %839 = vmatprep.mubr.f32.mxu0 0.0
      %840 = vmatmul.mubr.f32.gmra.mxu0 %v548
      %v841 = vpop.f32.mrf.mxu0
      %v842 = vadd.f32 %v533, %v841
      %v843 = vpop.f32.mrf.mxu0
      %v844 = vadd.f32 %v537, %v843
      %845 = vmatprep.mubr.f32.mxu0 0.0
      %846 = vmatmul.mubr.f32.gmra.mxu0 %v551
      %v847 = vpop.f32.mrf.mxu0
      %v848 = vadd.f32 %v533, %v847
      %v849 = vpop.f32.mrf.mxu0
      %v850 = vadd.f32 %v537, %v849
      %851 = vmatprep.mubr.f32.mxu0 0.0
      %852 = vmatmul.mubr.f32.gmra.mxu0 %v554
      %v853 = vpop.f32.mrf.mxu0
      %v854 = vadd.f32 %v533, %v853
      %v855 = vpop.f32.mrf.mxu0
      %v856 = vadd.f32 %v537, %v855
      %857 = vmatprep.mubr.f32.mxu0 0.0
      %858 = vmatmul.mubr.f32.gmra.mxu0 %v557
      %v859 = vpop.f32.mrf.mxu0
      %v860 = vadd.f32 %v533, %v859
      %v861 = vpop.f32.mrf.mxu0
      %v862 = vadd.f32 %v537, %v861
      %863 = vmatprep.mubr.f32.mxu0 0.0
      %864 = vmatmul.mubr.f32.gmra.mxu0 %v560
      %v865 = vpop.f32.mrf.mxu0
      %v866 = vadd.f32 %v533, %v865
      %v867 = vpop.f32.mrf.mxu0
      %v868 = vadd.f32 %v537, %v867
      %869 = vmatprep.mubr.f32.mxu0 0.0
      %870 = vmatmul.mubr.f32.gmra.mxu0 %v563
      %v871 = vpop.f32.mrf.mxu0
      %v872 = vadd.f32 %v533, %v871
      %v873 = vpop.f32.mrf.mxu0
      %v874 = vadd.f32 %v537, %v873
      %875 = vmatprep.mubr.f32.mxu0 0.0
      %876 = vmatmul.mubr.f32.gmra.mxu0 %v566
      %v877 = vpop.f32.mrf.mxu0
      %v878 = vadd.f32 %v533, %v877
      %v879 = vpop.f32.mrf.mxu0
      %v880 = vadd.f32 %v537, %v879
      %881 = vmatprep.mubr.f32.mxu0 0.0
      %882 = vmatmul.mubr.f32.gmra.mxu0 %v569
      %v883 = vpop.f32.mrf.mxu0
      %v884 = vadd.f32 %v533, %v883
      %v885 = vpop.f32.mrf.mxu0
      %v886 = vadd.f32 %v537, %v885
      %887 = vmatprep.mubr.f32.mxu0 0.0
      %888 = vmatmul.mubr.f32.gmra.mxu0 %v572
      %v889 = vpop.f32.mrf.mxu0
      %v890 = vadd.f32 %v533, %v889
      %v891 = vpop.f32.mrf.mxu0
      %v892 = vadd.f32 %v537, %v891
      %893 = vmatprep.mubr.f32.mxu0 0.0
      %894 = vmatmul.mubr.f32.gmra.mxu0 %v575
      %v895 = vpop.f32.mrf.mxu0
      %v896 = vadd.f32 %v533, %v895
      %v897 = vpop.f32.mrf.mxu0
      %v898 = vadd.f32 %v537, %v897
      %899 = vmatprep.mubr.f32.mxu0 0.0
      %900 = vmatmul.mubr.f32.gmra.mxu0 %v578
      %v901 = vpop.f32.mrf.mxu0
      %v902 = vadd.f32 %v533, %v901
      %v903 = vpop.f32.mrf.mxu0
      %v904 = vadd.f32 %v537, %v903
      %905 = vmatprep.mubr.f32.mxu0 0.0
      %906 = vmatmul.mubr.f32.gmra.mxu0 %v581
      %v907 = vpop.f32.mrf.mxu0
      %v908 = vadd.f32 %v533, %v907
      %v909 = vpop.f32.mrf.mxu0
      %v910 = vadd.f32 %v537, %v909
      %911 = vmatprep.mubr.f32.mxu0 0.0
      %912 = vmatmul.mubr.f32.gmra.mxu0 %v584
      %v913 = vpop.f32.mrf.mxu0
      %v914 = vadd.f32 %v533, %v913
      %v915 = vpop.f32.mrf.mxu0
      %v916 = vadd.f32 %v537, %v915
      %917 = vmatprep.mubr.f32.mxu0 0.0
      %918 = vmatmul.mubr.f32.gmra.mxu0 %v587
      %v919 = vpop.f32.mrf.mxu0
      %v920 = vadd.f32 %v533, %v919
      %v921 = vpop.f32.mrf.mxu0
      %v922 = vadd.f32 %v537, %v921
      %923 = vmatprep.mubr.f32.mxu0 0.0
      %924 = vmatmul.mubr.f32.gmra.mxu0 %v590
      %v925 = vpop.f32.mrf.mxu0
      %v926 = vadd.f32 %v533, %v925
      %v927 = vpop.f32.mrf.mxu0
      %v928 = vadd.f32 %v537, %v927
      %929 = vmatprep.mubr.f32.mxu0 0.0
      %930 = vmatmul.mubr.f32.gmra.mxu0 %v593
      %v931 = vpop.f32.mrf.mxu0
      %v932 = vadd.f32 %v533, %v931
      %v933 = vpop.f32.mrf.mxu0
      %v934 = vadd.f32 %v537, %v933
      %935 = vdwg.mxu0
      %936 = vmatprep.subr.mxu0 0.0
      %937 = vmatpush1.msra.mxu0 0.0
      %938 = vmatprep.subr.mxu0 0.0
      %939 = vmatpush1.msra.mxu0 0.0
      %940 = vmatprep.subr.mxu0 0.0
      %941 = vmatpush1.msra.mxu0 0.0
      %942 = vmatprep.subr.mxu0 0.0
      %943 = vmatpush1.msra.mxu0 0.0
      %944 = vmatprep.subr.mxu0 0.0
      %945 = vmatpush1.msra.mxu0 0.0
      %946 = vmatprep.subr.mxu0 0.0
      %947 = vmatpush1.msra.mxu0 0.0
      %948 = vmatprep.subr.mxu0 0.0
      %949 = vmatpush1.msra.mxu0 0.0
      %950 = vmatprep.subr.mxu0 0.0
      %951 = vmatpush1.msra.mxu0 0.0
      %952 = vmatprep.subr.mxu0 0.0
      %953 = vmatpush1.msra.mxu0 0.0
      %954 = vmatprep.subr.mxu0 0.0
      %955 = vmatpush1.msra.mxu0 0.0
      %956 = vmatprep.subr.mxu0 0.0
      %957 = vmatpush1.msra.mxu0 0.0
      %958 = vmatprep.subr.mxu0 0.0
      %959 = vmatpush1.msra.mxu0 0.0
      %960 = vmatprep.subr.mxu0 0.0
      %961 = vmatpush1.msra.mxu0 0.0
      %962 = vmatprep.subr.mxu0 0.0
      %963 = vmatpush1.msra.mxu0 0.0
      %964 = vmatprep.subr.mxu0 0.0
      %965 = vmatpush1.msra.mxu0 0.0
      %966 = vmatprep.subr.mxu0 %v612
      %967 = vmatpush1.msra.mxu0 %v609
      %968 = vmatprep.subr.mxu0 0.0
      %969 = vmatpush2.msra.mxu0 0.0
      %970 = vmatprep.subr.mxu0 0.0
      %971 = vmatpush2.msra.mxu0 0.0
      %972 = vmatprep.subr.mxu0 0.0
      %973 = vmatpush2.msra.mxu0 0.0
      %974 = vmatprep.subr.mxu0 0.0
      %975 = vmatpush2.msra.mxu0 0.0
      %976 = vmatprep.subr.mxu0 0.0
      %977 = vmatpush2.msra.mxu0 0.0
      %978 = vmatprep.subr.mxu0 0.0
      %979 = vmatpush2.msra.mxu0 0.0
      %980 = vmatprep.subr.mxu0 0.0
      %981 = vmatpush2.msra.mxu0 0.0
      %982 = vmatprep.subr.mxu0 0.0
      %983 = vmatpush2.msra.mxu0 0.0
      %984 = vmatprep.subr.mxu0 0.0
      %985 = vmatpush2.msra.mxu0 0.0
      %986 = vmatprep.subr.mxu0 0.0
      %987 = vmatpush2.msra.mxu0 0.0
      %988 = vmatprep.subr.mxu0 0.0
      %989 = vmatpush2.msra.mxu0 0.0
      %990 = vmatprep.subr.mxu0 0.0
      %991 = vmatpush2.msra.mxu0 0.0
      %992 = vmatprep.subr.mxu0 0.0
      %993 = vmatpush2.msra.mxu0 0.0
      %994 = vmatprep.subr.mxu0 0.0
      %995 = vmatpush2.msra.mxu0 0.0
      %996 = vmatprep.subr.mxu0 0.0
      %997 = vmatpush2.msra.mxu0 0.0
      %998 = vmatprep.subr.mxu0 0.0
      %999 = vmatpush2.msra.mxu0 0.0
      %1000 = vmatprep.mubr.f32.mxu0 0.0
      %1001 = vmatmul.mubr.f32.gmra.mxu0 %v548
      %v1002 = vpop.f32.mrf.mxu0
      %v1003 = vadd.f32 %v541, %v1002
      %v1004 = vpop.f32.mrf.mxu0
      %v1005 = vadd.f32 %v545, %v1004
      %1006 = vmatprep.mubr.f32.mxu0 0.0
      %1007 = vmatmul.mubr.f32.gmra.mxu0 %v551
      %v1008 = vpop.f32.mrf.mxu0
      %v1009 = vadd.f32 %v541, %v1008
      %v1010 = vpop.f32.mrf.mxu0
      %v1011 = vadd.f32 %v545, %v1010
      %1012 = vmatprep.mubr.f32.mxu0 0.0
      %1013 = vmatmul.mubr.f32.gmra.mxu0 %v554
      %v1014 = vpop.f32.mrf.mxu0
      %v1015 = vadd.f32 %v541, %v1014
      %v1016 = vpop.f32.mrf.mxu0
      %v1017 = vadd.f32 %v545, %v1016
      %1018 = vmatprep.mubr.f32.mxu0 0.0
      %1019 = vmatmul.mubr.f32.gmra.mxu0 %v557
      %v1020 = vpop.f32.mrf.mxu0
      %v1021 = vadd.f32 %v541, %v1020
      %v1022 = vpop.f32.mrf.mxu0
      %v1023 = vadd.f32 %v545, %v1022
      %1024 = vmatprep.mubr.f32.mxu0 0.0
      %1025 = vmatmul.mubr.f32.gmra.mxu0 %v560
      %v1026 = vpop.f32.mrf.mxu0
      %v1027 = vadd.f32 %v541, %v1026
      %v1028 = vpop.f32.mrf.mxu0
      %v1029 = vadd.f32 %v545, %v1028
      %1030 = vmatprep.mubr.f32.mxu0 0.0
      %1031 = vmatmul.mubr.f32.gmra.mxu0 %v563
      %v1032 = vpop.f32.mrf.mxu0
      %v1033 = vadd.f32 %v541, %v1032
      %v1034 = vpop.f32.mrf.mxu0
      %v1035 = vadd.f32 %v545, %v1034
      %1036 = vmatprep.mubr.f32.mxu0 0.0
      %1037 = vmatmul.mubr.f32.gmra.mxu0 %v566
      %v1038 = vpop.f32.mrf.mxu0
      %v1039 = vadd.f32 %v541, %v1038
      %v1040 = vpop.f32.mrf.mxu0
      %v1041 = vadd.f32 %v545, %v1040
      %1042 = vmatprep.mubr.f32.mxu0 0.0
      %1043 = vmatmul.mubr.f32.gmra.mxu0 %v569
      %v1044 = vpop.f32.mrf.mxu0
      %v1045 = vadd.f32 %v541, %v1044
      %v1046 = vpop.f32.mrf.mxu0
      %v1047 = vadd.f32 %v545, %v1046
      %1048 = vmatprep.mubr.f32.mxu0 0.0
      %1049 = vmatmul.mubr.f32.gmra.mxu0 %v572
      %v1050 = vpop.f32.mrf.mxu0
      %v1051 = vadd.f32 %v541, %v1050
      %v1052 = vpop.f32.mrf.mxu0
      %v1053 = vadd.f32 %v545, %v1052
      %1054 = vmatprep.mubr.f32.mxu0 0.0
      %1055 = vmatmul.mubr.f32.gmra.mxu0 %v575
      %v1056 = vpop.f32.mrf.mxu0
      %v1057 = vadd.f32 %v541, %v1056
      %v1058 = vpop.f32.mrf.mxu0
      %v1059 = vadd.f32 %v545, %v1058
      %1060 = vmatprep.mubr.f32.mxu0 0.0
      %1061 = vmatmul.mubr.f32.gmra.mxu0 %v578
      %v1062 = vpop.f32.mrf.mxu0
      %v1063 = vadd.f32 %v541, %v1062
      %v1064 = vpop.f32.mrf.mxu0
      %v1065 = vadd.f32 %v545, %v1064
      %1066 = vmatprep.mubr.f32.mxu0 0.0
      %1067 = vmatmul.mubr.f32.gmra.mxu0 %v581
      %v1068 = vpop.f32.mrf.mxu0
      %v1069 = vadd.f32 %v541, %v1068
      %v1070 = vpop.f32.mrf.mxu0
      %v1071 = vadd.f32 %v545, %v1070
      %1072 = vmatprep.mubr.f32.mxu0 0.0
      %1073 = vmatmul.mubr.f32.gmra.mxu0 %v584
      %v1074 = vpop.f32.mrf.mxu0
      %v1075 = vadd.f32 %v541, %v1074
      %v1076 = vpop.f32.mrf.mxu0
      %v1077 = vadd.f32 %v545, %v1076
      %1078 = vmatprep.mubr.f32.mxu0 0.0
      %1079 = vmatmul.mubr.f32.gmra.mxu0 %v587
      %v1080 = vpop.f32.mrf.mxu0
      %v1081 = vadd.f32 %v541, %v1080
      %v1082 = vpop.f32.mrf.mxu0
      %v1083 = vadd.f32 %v545, %v1082
      %1084 = vmatprep.mubr.f32.mxu0 0.0
      %1085 = vmatmul.mubr.f32.gmra.mxu0 %v590
      %v1086 = vpop.f32.mrf.mxu0
      %v1087 = vadd.f32 %v541, %v1086
      %v1088 = vpop.f32.mrf.mxu0
      %v1089 = vadd.f32 %v545, %v1088
      %1090 = vmatprep.mubr.f32.mxu0 0.0
      %1091 = vmatmul.mubr.f32.gmra.mxu0 %v593
      %v1092 = vpop.f32.mrf.mxu0
      %v1093 = vadd.f32 %v541, %v1092
      %v1094 = vpop.f32.mrf.mxu0
      %v1095 = vadd.f32 %v545, %v1094
      %1096 = vdwg.mxu0
      %v1097 = vmax.f32 %v681, 0.0
      %v1098 = vmax.f32 %v683, 0.0
      %v1099 = vmax.f32 %v842, 0.0
      %v1100 = vmax.f32 %v844, 0.0
      %v1101 = vmax.f32 %v1003, 0.0
      %v1102 = vmax.f32 %v1005, 0.0
      %v1103 = vmax.f32 %v687, 0.0
      %v1104 = vmax.f32 %v689, 0.0
      %v1105 = vmax.f32 %v848, 0.0
      %v1106 = vmax.f32 %v850, 0.0
      %v1107 = vmax.f32 %v1009, 0.0
      %v1108 = vmax.f32 %v1011, 0.0
      %v1109 = vmax.f32 %v693, 0.0
      %v1110 = vmax.f32 %v695, 0.0
      %v1111 = vmax.f32 %v854, 0.0
      %v1112 = vmax.f32 %v856, 0.0
      %v1113 = vmax.f32 %v1015, 0.0
      %v1114 = vmax.f32 %v1017, 0.0
      %v1115 = vmax.f32 %v699, 0.0
      %v1116 = vmax.f32 %v701, 0.0
      %v1117 = vmax.f32 %v860, 0.0
      %v1118 = vmax.f32 %v862, 0.0
      %v1119 = vmax.f32 %v1021, 0.0
      %v1120 = vmax.f32 %v1023, 0.0
      %v1121 = vmax.f32 %v705, 0.0
      %v1122 = vmax.f32 %v707, 0.0
      %v1123 = vmax.f32 %v866, 0.0
      %v1124 = vmax.f32 %v868, 0.0
      %v1125 = vmax.f32 %v1027, 0.0
      %v1126 = vmax.f32 %v1029, 0.0
      %v1127 = vmax.f32 %v711, 0.0
      %v1128 = vmax.f32 %v713, 0.0
      %v1129 = vmax.f32 %v872, 0.0
      %v1130 = vmax.f32 %v874, 0.0
      %v1131 = vmax.f32 %v1033, 0.0
      %v1132 = vmax.f32 %v1035, 0.0
      %v1133 = vmax.f32 %v717, 0.0
      %v1134 = vmax.f32 %v719, 0.0
      %v1135 = vmax.f32 %v878, 0.0
      %v1136 = vmax.f32 %v880, 0.0
      %v1137 = vmax.f32 %v1039, 0.0
      %v1138 = vmax.f32 %v1041, 0.0
      %v1139 = vmax.f32 %v723, 0.0
      %v1140 = vmax.f32 %v725, 0.0
      %v1141 = vmax.f32 %v884, 0.0
      %v1142 = vmax.f32 %v886, 0.0
      %v1143 = vmax.f32 %v1045, 0.0
      %v1144 = vmax.f32 %v1047, 0.0
      %v1145 = vmax.f32 %v729, 0.0
      %v1146 = vmax.f32 %v731, 0.0
      %v1147 = vmax.f32 %v890, 0.0
      %v1148 = vmax.f32 %v892, 0.0
      %v1149 = vmax.f32 %v1051, 0.0
      %v1150 = vmax.f32 %v1053, 0.0
      %v1151 = vmax.f32 %v735, 0.0
      %v1152 = vmax.f32 %v737, 0.0
      %v1153 = vmax.f32 %v896, 0.0
      %v1154 = vmax.f32 %v898, 0.0
      %v1155 = vmax.f32 %v1057, 0.0
      %v1156 = vmax.f32 %v1059, 0.0
      %v1157 = vmax.f32 %v741, 0.0
      %v1158 = vmax.f32 %v743, 0.0
      %v1159 = vmax.f32 %v902, 0.0
      %v1160 = vmax.f32 %v904, 0.0
      %v1161 = vmax.f32 %v1063, 0.0
      %v1162 = vmax.f32 %v1065, 0.0
      %v1163 = vmax.f32 %v747, 0.0
      %v1164 = vmax.f32 %v749, 0.0
      %v1165 = vmax.f32 %v908, 0.0
      %v1166 = vmax.f32 %v910, 0.0
      %v1167 = vmax.f32 %v1069, 0.0
      %v1168 = vmax.f32 %v1071, 0.0
      %v1169 = vmax.f32 %v753, 0.0
      %v1170 = vmax.f32 %v755, 0.0
      %v1171 = vmax.f32 %v914, 0.0
      %v1172 = vmax.f32 %v916, 0.0
      %v1173 = vmax.f32 %v1075, 0.0
      %v1174 = vmax.f32 %v1077, 0.0
      %v1175 = vmax.f32 %v759, 0.0
      %v1176 = vmax.f32 %v761, 0.0
      %v1177 = vmax.f32 %v920, 0.0
      %v1178 = vmax.f32 %v922, 0.0
      %v1179 = vmax.f32 %v1081, 0.0
      %v1180 = vmax.f32 %v1083, 0.0
      %v1181 = vmax.f32 %v765, 0.0
      %v1182 = vmax.f32 %v767, 0.0
      %v1183 = vmax.f32 %v926, 0.0
      %v1184 = vmax.f32 %v928, 0.0
      %v1185 = vmax.f32 %v1087, 0.0
      %v1186 = vmax.f32 %v1089, 0.0
      %v1187 = vmax.f32 %v771, 0.0
      %v1188 = vmax.f32 %v773, 0.0
      %v1189 = vmax.f32 %v932, 0.0
      %v1190 = vmax.f32 %v934, 0.0
      %v1191 = vmax.f32 %v1093, 0.0
      %v1192 = vmax.f32 %v1095, 0.0
      %v1193 = vld [vmem:[%s5] sm:$0xff]
      %v1194 = vld [vmem:[%s5 + $0x8] sm:$0xff]
      %v1195 = vld [vmem:[%s5 + $0x10] sm:$0xff]
      %v1196 = vld [vmem:[%s5 + $0x18] sm:$0xff]
      %v1197 = vld [vmem:[%s5 + $0x20] sm:$0xff]
      %v1198 = vld [vmem:[%s5 + $0x28] sm:$0xff]
      %v1199 = vld [vmem:[%s5 + $0x30] sm:$0xff]
      %v1200 = vld [vmem:[%s5 + $0x38] sm:$0xff]
      %v1201 = vld [vmem:[%s5 + $0x40] sm:$0xff]
      %v1202 = vld [vmem:[%s5 + $0x48] sm:$0xff]
      %v1203 = vld [vmem:[%s5 + $0x50] sm:$0xff]
      %v1204 = vld [vmem:[%s5 + $0x58] sm:$0xff]
      %v1205 = vld [vmem:[%s5 + $0x60] sm:$0xff]
      %v1206 = vld [vmem:[%s5 + $0x68] sm:$0xff]
      %v1207 = vld [vmem:[%s5 + $0x70] sm:$0xff]
      %v1208 = vld [vmem:[%s5 + $0x78] sm:$0xff]
      %v1209 = vld [vmem:[%s5 + $0x80] sm:$0xff]
      %v1210 = vld [vmem:[%s5 + $0x88] sm:$0xff]
      %v1211 = vld [vmem:[%s5 + $0x90] sm:$0xff]
      %v1212 = vld [vmem:[%s5 + $0x98] sm:$0xff]
      %v1213 = vld [vmem:[%s5 + $0xa0] sm:$0xff]
      %v1214 = vld [vmem:[%s5 + $0xa8] sm:$0xff]
      %v1215 = vld [vmem:[%s5 + $0xb0] sm:$0xff]
      %v1216 = vld [vmem:[%s5 + $0xb8] sm:$0xff]
      %v1217 = vld [vmem:[%s5 + $0xc0] sm:$0xff]
      %v1218 = vld [vmem:[%s5 + $0xc8] sm:$0xff]
      %v1219 = vld [vmem:[%s5 + $0xd0] sm:$0xff]
      %v1220 = vld [vmem:[%s5 + $0xd8] sm:$0xff]
      %v1221 = vld [vmem:[%s5 + $0xe0] sm:$0xff]
      %v1222 = vld [vmem:[%s5 + $0xe8] sm:$0xff]
      %v1223 = vld [vmem:[%s5 + $0xf0] sm:$0xff]
      %v1224 = vld [vmem:[%s5 + $0xf8] sm:$0xff]
      %v1225 = vld [vmem:[%s5 + $0x100] sm:$0xff]
      %v1226 = vld [vmem:[%s5 + $0x108] sm:$0xff]
      %v1227 = vld [vmem:[%s5 + $0x110] sm:$0xff]
      %v1228 = vld [vmem:[%s5 + $0x118] sm:$0xff]
      %v1229 = vld [vmem:[%s5 + $0x120] sm:$0xff]
      %v1230 = vld [vmem:[%s5 + $0x128] sm:$0xff]
      %v1231 = vld [vmem:[%s5 + $0x130] sm:$0xff]
      %v1232 = vld [vmem:[%s5 + $0x138] sm:$0xff]
      %v1233 = vld [vmem:[%s5 + $0x140] sm:$0xff]
      %v1234 = vld [vmem:[%s5 + $0x148] sm:$0xff]
      %v1235 = vld [vmem:[%s5 + $0x150] sm:$0xff]
      %v1236 = vld [vmem:[%s5 + $0x158] sm:$0xff]
      %v1237 = vld [vmem:[%s5 + $0x160] sm:$0xff]
      %v1238 = vld [vmem:[%s5 + $0x168] sm:$0xff]
      %v1239 = vld [vmem:[%s5 + $0x170] sm:$0xff]
      %v1240 = vld [vmem:[%s5 + $0x178] sm:$0xff]
      %v1241 = vld [vmem:[%s5 + $0x180] sm:$0xff]
      %v1242 = vld [vmem:[%s5 + $0x188] sm:$0xff]
      %v1243 = vld [vmem:[%s5 + $0x190] sm:$0xff]
      %v1244 = vld [vmem:[%s5 + $0x198] sm:$0xff]
      %v1245 = vld [vmem:[%s5 + $0x1a0] sm:$0xff]
      %v1246 = vld [vmem:[%s5 + $0x1a8] sm:$0xff]
      %v1247 = vld [vmem:[%s5 + $0x1b0] sm:$0xff]
      %v1248 = vld [vmem:[%s5 + $0x1b8] sm:$0xff]
      %v1249 = vld [vmem:[%s5 + $0x1c0] sm:$0xff]
      %v1250 = vld [vmem:[%s5 + $0x1c8] sm:$0xff]
      %v1251 = vld [vmem:[%s5 + $0x1d0] sm:$0xff]
      %v1252 = vld [vmem:[%s5 + $0x1d8] sm:$0xff]
      %v1253 = vld [vmem:[%s5 + $0x1e0] sm:$0xff]
      %v1254 = vld [vmem:[%s5 + $0x1e8] sm:$0xff]
      %v1255 = vld [vmem:[%s5 + $0x1f0] sm:$0xff]
      %v1256 = vld [vmem:[%s5 + $0x1f8] sm:$0xff]
      %v1257 = vld [vmem:[%s5 + $0x200] sm:$0xff]
      %v1258 = vld [vmem:[%s5 + $0x208] sm:$0xff]
      %v1259 = vld [vmem:[%s5 + $0x210] sm:$0xff]
      %v1260 = vld [vmem:[%s5 + $0x218] sm:$0xff]
      %v1261 = vld [vmem:[%s5 + $0x220] sm:$0xff]
      %v1262 = vld [vmem:[%s5 + $0x228] sm:$0xff]
      %v1263 = vld [vmem:[%s5 + $0x230] sm:$0xff]
      %v1264 = vld [vmem:[%s5 + $0x238] sm:$0xff]
      %v1265 = vld [vmem:[%s5 + $0x240] sm:$0xff]
      %v1266 = vld [vmem:[%s5 + $0x248] sm:$0xff]
      %v1267 = vld [vmem:[%s5 + $0x250] sm:$0xff]
      %v1268 = vld [vmem:[%s5 + $0x258] sm:$0xff]
      %v1269 = vld [vmem:[%s5 + $0x260] sm:$0xff]
      %v1270 = vld [vmem:[%s5 + $0x268] sm:$0xff]
      %v1271 = vld [vmem:[%s5 + $0x270] sm:$0xff]
      %v1272 = vld [vmem:[%s5 + $0x278] sm:$0xff]
      %v1273 = vld [vmem:[%s5 + $0x280] sm:$0xff]
      %v1274 = vld [vmem:[%s5 + $0x288] sm:$0xff]
      %v1275 = vld [vmem:[%s5 + $0x290] sm:$0xff]
      %v1276 = vld [vmem:[%s5 + $0x298] sm:$0xff]
      %v1277 = vld [vmem:[%s5 + $0x2a0] sm:$0xff]
      %v1278 = vld [vmem:[%s5 + $0x2a8] sm:$0xff]
      %v1279 = vld [vmem:[%s5 + $0x2b0] sm:$0xff]
      %v1280 = vld [vmem:[%s5 + $0x2b8] sm:$0xff]
      %v1281 = vld [vmem:[%s5 + $0x2c0] sm:$0xff]
      %v1282 = vld [vmem:[%s5 + $0x2c8] sm:$0xff]
      %v1283 = vld [vmem:[%s5 + $0x2d0] sm:$0xff]
      %v1284 = vld [vmem:[%s5 + $0x2d8] sm:$0xff]
      %v1285 = vld [vmem:[%s5 + $0x2e0] sm:$0xff]
      %v1286 = vld [vmem:[%s5 + $0x2e8] sm:$0xff]
      %v1287 = vld [vmem:[%s5 + $0x2f0] sm:$0xff]
      %v1288 = vld [vmem:[%s5 + $0x2f8] sm:$0xff]
      %v1289 = vld [vmem:[%s5 + $0x300] sm:$0xff]
      %v1290 = vld [vmem:[%s5 + $0x308] sm:$0xff]
      %v1291 = vld [vmem:[%s5 + $0x310] sm:$0xff]
      %v1292 = vld [vmem:[%s5 + $0x318] sm:$0xff]
      %v1293 = vld [vmem:[%s5 + $0x320] sm:$0xff]
      %v1294 = vld [vmem:[%s5 + $0x328] sm:$0xff]
      %v1295 = vld [vmem:[%s5 + $0x330] sm:$0xff]
      %v1296 = vld [vmem:[%s5 + $0x338] sm:$0xff]
      %v1297 = vld [vmem:[%s5 + $0x340] sm:$0xff]
      %v1298 = vld [vmem:[%s5 + $0x348] sm:$0xff]
      %v1299 = vld [vmem:[%s5 + $0x350] sm:$0xff]
      %v1300 = vld [vmem:[%s5 + $0x358] sm:$0xff]
      %v1301 = vld [vmem:[%s5 + $0x360] sm:$0xff]
      %v1302 = vld [vmem:[%s5 + $0x368] sm:$0xff]
      %v1303 = vld [vmem:[%s5 + $0x370] sm:$0xff]
      %v1304 = vld [vmem:[%s5 + $0x378] sm:$0xff]
      %v1305 = vld [vmem:[%s5 + $0x380] sm:$0xff]
      %v1306 = vld [vmem:[%s5 + $0x388] sm:$0xff]
      %v1307 = vld [vmem:[%s5 + $0x390] sm:$0xff]
      %v1308 = vld [vmem:[%s5 + $0x398] sm:$0xff]
      %v1309 = vld [vmem:[%s5 + $0x3a0] sm:$0xff]
      %v1310 = vld [vmem:[%s5 + $0x3a8] sm:$0xff]
      %v1311 = vld [vmem:[%s5 + $0x3b0] sm:$0xff]
      %v1312 = vld [vmem:[%s5 + $0x3b8] sm:$0xff]
      %v1313 = vld [vmem:[%s5 + $0x3c0] sm:$0xff]
      %v1314 = vld [vmem:[%s5 + $0x3c8] sm:$0xff]
      %v1315 = vld [vmem:[%s5 + $0x3d0] sm:$0xff]
      %v1316 = vld [vmem:[%s5 + $0x3d8] sm:$0xff]
      %v1317 = vld [vmem:[%s5 + $0x3e0] sm:$0xff]
      %v1318 = vld [vmem:[%s5 + $0x3e8] sm:$0xff]
      %v1319 = vld [vmem:[%s5 + $0x3f0] sm:$0xff]
      %v1320 = vld [vmem:[%s5 + $0x3f8] sm:$0xff]
      %v1321 = vld [vmem:[%s5 + $0x400] sm:$0xff]
      %v1322 = vld [vmem:[%s5 + $0x408] sm:$0xff]
      %v1323 = vld [vmem:[%s5 + $0x410] sm:$0xff]
      %v1324 = vld [vmem:[%s5 + $0x418] sm:$0xff]
      %v1325 = vld [vmem:[%s5 + $0x420] sm:$0xff]
      %v1326 = vld [vmem:[%s5 + $0x428] sm:$0xff]
      %v1327 = vld [vmem:[%s5 + $0x430] sm:$0xff]
      %v1328 = vld [vmem:[%s5 + $0x438] sm:$0xff]
      %v1329 = vld [vmem:[%s5 + $0x440] sm:$0xff]
      %v1330 = vld [vmem:[%s5 + $0x448] sm:$0xff]
      %v1331 = vld [vmem:[%s5 + $0x450] sm:$0xff]
      %v1332 = vld [vmem:[%s5 + $0x458] sm:$0xff]
      %v1333 = vld [vmem:[%s5 + $0x460] sm:$0xff]
      %v1334 = vld [vmem:[%s5 + $0x468] sm:$0xff]
      %v1335 = vld [vmem:[%s5 + $0x470] sm:$0xff]
      %v1336 = vld [vmem:[%s5 + $0x478] sm:$0xff]
      %v1337 = vld [vmem:[%s5 + $0x480] sm:$0xff]
      %v1338 = vld [vmem:[%s5 + $0x488] sm:$0xff]
      %v1339 = vld [vmem:[%s5 + $0x490] sm:$0xff]
      %v1340 = vld [vmem:[%s5 + $0x498] sm:$0xff]
      %v1341 = vld [vmem:[%s5 + $0x4a0] sm:$0xff]
      %v1342 = vld [vmem:[%s5 + $0x4a8] sm:$0xff]
      %v1343 = vld [vmem:[%s5 + $0x4b0] sm:$0xff]
      %v1344 = vld [vmem:[%s5 + $0x4b8] sm:$0xff]
      %v1345 = vld [vmem:[%s5 + $0x4c0] sm:$0xff]
      %v1346 = vld [vmem:[%s5 + $0x4c8] sm:$0xff]
      %v1347 = vld [vmem:[%s5 + $0x4d0] sm:$0xff]
      %v1348 = vld [vmem:[%s5 + $0x4d8] sm:$0xff]
      %v1349 = vld [vmem:[%s5 + $0x4e0] sm:$0xff]
      %v1350 = vld [vmem:[%s5 + $0x4e8] sm:$0xff]
      %v1351 = vld [vmem:[%s5 + $0x4f0] sm:$0xff]
      %v1352 = vld [vmem:[%s5 + $0x4f8] sm:$0xff]
      %v1353 = vld [vmem:[%s5 + $0x500] sm:$0xff]
      %v1354 = vld [vmem:[%s5 + $0x508] sm:$0xff]
      %v1355 = vld [vmem:[%s5 + $0x510] sm:$0xff]
      %v1356 = vld [vmem:[%s5 + $0x518] sm:$0xff]
      %v1357 = vld [vmem:[%s5 + $0x520] sm:$0xff]
      %v1358 = vld [vmem:[%s5 + $0x528] sm:$0xff]
      %v1359 = vld [vmem:[%s5 + $0x530] sm:$0xff]
      %v1360 = vld [vmem:[%s5 + $0x538] sm:$0xff]
      %v1361 = vld [vmem:[%s5 + $0x540] sm:$0xff]
      %v1362 = vld [vmem:[%s5 + $0x548] sm:$0xff]
      %v1363 = vld [vmem:[%s5 + $0x550] sm:$0xff]
      %v1364 = vld [vmem:[%s5 + $0x558] sm:$0xff]
      %v1365 = vld [vmem:[%s5 + $0x560] sm:$0xff]
      %v1366 = vld [vmem:[%s5 + $0x568] sm:$0xff]
      %v1367 = vld [vmem:[%s5 + $0x570] sm:$0xff]
      %v1368 = vld [vmem:[%s5 + $0x578] sm:$0xff]
      %v1369 = vld [vmem:[%s5 + $0x580] sm:$0xff]
      %v1370 = vld [vmem:[%s5 + $0x588] sm:$0xff]
      %v1371 = vld [vmem:[%s5 + $0x590] sm:$0xff]
      %v1372 = vld [vmem:[%s5 + $0x598] sm:$0xff]
      %v1373 = vld [vmem:[%s5 + $0x5a0] sm:$0xff]
      %v1374 = vld [vmem:[%s5 + $0x5a8] sm:$0xff]
      %v1375 = vld [vmem:[%s5 + $0x5b0] sm:$0xff]
      %v1376 = vld [vmem:[%s5 + $0x5b8] sm:$0xff]
      %v1377 = vld [vmem:[%s5 + $0x5c0] sm:$0xff]
      %v1378 = vld [vmem:[%s5 + $0x5c8] sm:$0xff]
      %v1379 = vld [vmem:[%s5 + $0x5d0] sm:$0xff]
      %v1380 = vld [vmem:[%s5 + $0x5d8] sm:$0xff]
      %v1381 = vld [vmem:[%s5 + $0x5e0] sm:$0xff]
      %v1382 = vld [vmem:[%s5 + $0x5e8] sm:$0xff]
      %v1383 = vld [vmem:[%s5 + $0x5f0] sm:$0xff]
      %v1384 = vld [vmem:[%s5 + $0x5f8] sm:$0xff]
      %v1385 = vld [vmem:[%s5 + $0x600] sm:$0xff]
      %v1386 = vld [vmem:[%s5 + $0x608] sm:$0xff]
      %v1387 = vld [vmem:[%s5 + $0x610] sm:$0xff]
      %v1388 = vld [vmem:[%s5 + $0x618] sm:$0xff]
      %v1389 = vld [vmem:[%s5 + $0x620] sm:$0xff]
      %v1390 = vld [vmem:[%s5 + $0x628] sm:$0xff]
      %v1391 = vld [vmem:[%s5 + $0x630] sm:$0xff]
      %v1392 = vld [vmem:[%s5 + $0x638] sm:$0xff]
      %v1393 = vld [vmem:[%s5 + $0x640] sm:$0xff]
      %v1394 = vld [vmem:[%s5 + $0x648] sm:$0xff]
      %v1395 = vld [vmem:[%s5 + $0x650] sm:$0xff]
      %v1396 = vld [vmem:[%s5 + $0x658] sm:$0xff]
      %v1397 = vld [vmem:[%s5 + $0x660] sm:$0xff]
      %v1398 = vld [vmem:[%s5 + $0x668] sm:$0xff]
      %v1399 = vld [vmem:[%s5 + $0x670] sm:$0xff]
      %v1400 = vld [vmem:[%s5 + $0x678] sm:$0xff]
      %v1401 = vld [vmem:[%s5 + $0x680] sm:$0xff]
      %v1402 = vld [vmem:[%s5 + $0x688] sm:$0xff]
      %v1403 = vld [vmem:[%s5 + $0x690] sm:$0xff]
      %v1404 = vld [vmem:[%s5 + $0x698] sm:$0xff]
      %v1405 = vld [vmem:[%s5 + $0x6a0] sm:$0xff]
      %v1406 = vld [vmem:[%s5 + $0x6a8] sm:$0xff]
      %v1407 = vld [vmem:[%s5 + $0x6b0] sm:$0xff]
      %v1408 = vld [vmem:[%s5 + $0x6b8] sm:$0xff]
      %v1409 = vld [vmem:[%s5 + $0x6c0] sm:$0xff]
      %v1410 = vld [vmem:[%s5 + $0x6c8] sm:$0xff]
      %v1411 = vld [vmem:[%s5 + $0x6d0] sm:$0xff]
      %v1412 = vld [vmem:[%s5 + $0x6d8] sm:$0xff]
      %v1413 = vld [vmem:[%s5 + $0x6e0] sm:$0xff]
      %v1414 = vld [vmem:[%s5 + $0x6e8] sm:$0xff]
      %v1415 = vld [vmem:[%s5 + $0x6f0] sm:$0xff]
      %v1416 = vld [vmem:[%s5 + $0x6f8] sm:$0xff]
      %v1417 = vld [vmem:[%s5 + $0x700] sm:$0xff]
      %v1418 = vld [vmem:[%s5 + $0x708] sm:$0xff]
      %v1419 = vld [vmem:[%s5 + $0x710] sm:$0xff]
      %v1420 = vld [vmem:[%s5 + $0x718] sm:$0xff]
      %v1421 = vld [vmem:[%s5 + $0x720] sm:$0xff]
      %v1422 = vld [vmem:[%s5 + $0x728] sm:$0xff]
      %v1423 = vld [vmem:[%s5 + $0x730] sm:$0xff]
      %v1424 = vld [vmem:[%s5 + $0x738] sm:$0xff]
      %v1425 = vld [vmem:[%s5 + $0x740] sm:$0xff]
      %v1426 = vld [vmem:[%s5 + $0x748] sm:$0xff]
      %v1427 = vld [vmem:[%s5 + $0x750] sm:$0xff]
      %v1428 = vld [vmem:[%s5 + $0x758] sm:$0xff]
      %v1429 = vld [vmem:[%s5 + $0x760] sm:$0xff]
      %v1430 = vld [vmem:[%s5 + $0x768] sm:$0xff]
      %v1431 = vld [vmem:[%s5 + $0x770] sm:$0xff]
      %v1432 = vld [vmem:[%s5 + $0x778] sm:$0xff]
      %v1433 = vld [vmem:[%s5 + $0x780] sm:$0xff]
      %v1434 = vld [vmem:[%s5 + $0x788] sm:$0xff]
      %v1435 = vld [vmem:[%s5 + $0x790] sm:$0xff]
      %v1436 = vld [vmem:[%s5 + $0x798] sm:$0xff]
      %v1437 = vld [vmem:[%s5 + $0x7a0] sm:$0xff]
      %v1438 = vld [vmem:[%s5 + $0x7a8] sm:$0xff]
      %v1439 = vld [vmem:[%s5 + $0x7b0] sm:$0xff]
      %v1440 = vld [vmem:[%s5 + $0x7b8] sm:$0xff]
      %v1441 = vld [vmem:[%s5 + $0x7c0] sm:$0xff]
      %v1442 = vld [vmem:[%s5 + $0x7c8] sm:$0xff]
      %v1443 = vld [vmem:[%s5 + $0x7d0] sm:$0xff]
      %v1444 = vld [vmem:[%s5 + $0x7d8] sm:$0xff]
      %v1445 = vld [vmem:[%s5 + $0x7e0] sm:$0xff]
      %v1446 = vld [vmem:[%s5 + $0x7e8] sm:$0xff]
      %v1447 = vld [vmem:[%s5 + $0x7f0] sm:$0xff]
      %v1448 = vld [vmem:[%s5 + $0x7f8] sm:$0xff]
      %v1449 = vld [vmem:[%s5 + $0x800] sm:$0xff]
      %v1450 = vld [vmem:[%s5 + $0x808] sm:$0xff]
      %v1451 = vld [vmem:[%s5 + $0x810] sm:$0xff]
      %v1452 = vld [vmem:[%s5 + $0x818] sm:$0xff]
      %v1453 = vld [vmem:[%s5 + $0x820] sm:$0xff]
      %v1454 = vld [vmem:[%s5 + $0x828] sm:$0xff]
      %v1455 = vld [vmem:[%s5 + $0x830] sm:$0xff]
      %v1456 = vld [vmem:[%s5 + $0x838] sm:$0xff]
      %v1457 = vld [vmem:[%s5 + $0x840] sm:$0xff]
      %v1458 = vld [vmem:[%s5 + $0x848] sm:$0xff]
      %v1459 = vld [vmem:[%s5 + $0x850] sm:$0xff]
      %v1460 = vld [vmem:[%s5 + $0x858] sm:$0xff]
      %v1461 = vld [vmem:[%s5 + $0x860] sm:$0xff]
      %v1462 = vld [vmem:[%s5 + $0x868] sm:$0xff]
      %v1463 = vld [vmem:[%s5 + $0x870] sm:$0xff]
      %v1464 = vld [vmem:[%s5 + $0x878] sm:$0xff]
      %v1465 = vld [vmem:[%s5 + $0x880] sm:$0xff]
      %v1466 = vld [vmem:[%s5 + $0x888] sm:$0xff]
      %v1467 = vld [vmem:[%s5 + $0x890] sm:$0xff]
      %v1468 = vld [vmem:[%s5 + $0x898] sm:$0xff]
      %v1469 = vld [vmem:[%s5 + $0x8a0] sm:$0xff]
      %v1470 = vld [vmem:[%s5 + $0x8a8] sm:$0xff]
      %v1471 = vld [vmem:[%s5 + $0x8b0] sm:$0xff]
      %v1472 = vld [vmem:[%s5 + $0x8b8] sm:$0xff]
      %v1473 = vld [vmem:[%s5 + $0x8c0] sm:$0xff]
      %v1474 = vld [vmem:[%s5 + $0x8c8] sm:$0xff]
      %v1475 = vld [vmem:[%s5 + $0x8d0] sm:$0xff]
      %v1476 = vld [vmem:[%s5 + $0x8d8] sm:$0xff]
      %v1477 = vld [vmem:[%s5 + $0x8e0] sm:$0xff]
      %v1478 = vld [vmem:[%s5 + $0x8e8] sm:$0xff]
      %v1479 = vld [vmem:[%s5 + $0x8f0] sm:$0xff]
      %v1480 = vld [vmem:[%s5 + $0x8f8] sm:$0xff]
      %v1481 = vld [vmem:[%s5 + $0x900] sm:$0xff]
      %v1482 = vld [vmem:[%s5 + $0x908] sm:$0xff]
      %v1483 = vld [vmem:[%s5 + $0x910] sm:$0xff]
      %v1484 = vld [vmem:[%s5 + $0x918] sm:$0xff]
      %v1485 = vld [vmem:[%s5 + $0x920] sm:$0xff]
      %v1486 = vld [vmem:[%s5 + $0x928] sm:$0xff]
      %v1487 = vld [vmem:[%s5 + $0x930] sm:$0xff]
      %v1488 = vld [vmem:[%s5 + $0x938] sm:$0xff]
      %v1489 = vld [vmem:[%s5 + $0x940] sm:$0xff]
      %v1490 = vld [vmem:[%s5 + $0x948] sm:$0xff]
      %v1491 = vld [vmem:[%s5 + $0x950] sm:$0xff]
      %v1492 = vld [vmem:[%s5 + $0x958] sm:$0xff]
      %v1493 = vld [vmem:[%s5 + $0x960] sm:$0xff]
      %v1494 = vld [vmem:[%s5 + $0x968] sm:$0xff]
      %v1495 = vld [vmem:[%s5 + $0x970] sm:$0xff]
      %v1496 = vld [vmem:[%s5 + $0x978] sm:$0xff]
      %v1497 = vld [vmem:[%s5 + $0x980] sm:$0xff]
      %v1498 = vld [vmem:[%s5 + $0x988] sm:$0xff]
      %v1499 = vld [vmem:[%s5 + $0x990] sm:$0xff]
      %v1500 = vld [vmem:[%s5 + $0x998] sm:$0xff]
      %v1501 = vld [vmem:[%s5 + $0x9a0] sm:$0xff]
      %v1502 = vld [vmem:[%s5 + $0x9a8] sm:$0xff]
      %v1503 = vld [vmem:[%s5 + $0x9b0] sm:$0xff]
      %v1504 = vld [vmem:[%s5 + $0x9b8] sm:$0xff]
      %v1505 = vld [vmem:[%s5 + $0x9c0] sm:$0xff]
      %v1506 = vld [vmem:[%s5 + $0x9c8] sm:$0xff]
      %v1507 = vld [vmem:[%s5 + $0x9d0] sm:$0xff]
      %v1508 = vld [vmem:[%s5 + $0x9d8] sm:$0xff]
      %v1509 = vld [vmem:[%s5 + $0x9e0] sm:$0xff]
      %v1510 = vld [vmem:[%s5 + $0x9e8] sm:$0xff]
      %v1511 = vld [vmem:[%s5 + $0x9f0] sm:$0xff]
      %v1512 = vld [vmem:[%s5 + $0x9f8] sm:$0xff]
      %v1513 = vld [vmem:[%s5 + $0xa00] sm:$0xff]
      %v1514 = vld [vmem:[%s5 + $0xa08] sm:$0xff]
      %v1515 = vld [vmem:[%s5 + $0xa10] sm:$0xff]
      %v1516 = vld [vmem:[%s5 + $0xa18] sm:$0xff]
      %v1517 = vld [vmem:[%s5 + $0xa20] sm:$0xff]
      %v1518 = vld [vmem:[%s5 + $0xa28] sm:$0xff]
      %v1519 = vld [vmem:[%s5 + $0xa30] sm:$0xff]
      %v1520 = vld [vmem:[%s5 + $0xa38] sm:$0xff]
      %v1521 = vld [vmem:[%s5 + $0xa40] sm:$0xff]
      %v1522 = vld [vmem:[%s5 + $0xa48] sm:$0xff]
      %v1523 = vld [vmem:[%s5 + $0xa50] sm:$0xff]
      %v1524 = vld [vmem:[%s5 + $0xa58] sm:$0xff]
      %v1525 = vld [vmem:[%s5 + $0xa60] sm:$0xff]
      %v1526 = vld [vmem:[%s5 + $0xa68] sm:$0xff]
      %v1527 = vld [vmem:[%s5 + $0xa70] sm:$0xff]
      %v1528 = vld [vmem:[%s5 + $0xa78] sm:$0xff]
      %v1529 = vld [vmem:[%s5 + $0xa80] sm:$0xff]
      %v1530 = vld [vmem:[%s5 + $0xa88] sm:$0xff]
      %v1531 = vld [vmem:[%s5 + $0xa90] sm:$0xff]
      %v1532 = vld [vmem:[%s5 + $0xa98] sm:$0xff]
      %v1533 = vld [vmem:[%s5 + $0xaa0] sm:$0xff]
      %v1534 = vld [vmem:[%s5 + $0xaa8] sm:$0xff]
      %v1535 = vld [vmem:[%s5 + $0xab0] sm:$0xff]
      %v1536 = vld [vmem:[%s5 + $0xab8] sm:$0xff]
      %v1537 = vld [vmem:[%s5 + $0xac0] sm:$0xff]
      %v1538 = vld [vmem:[%s5 + $0xac8] sm:$0xff]
      %v1539 = vld [vmem:[%s5 + $0xad0] sm:$0xff]
      %v1540 = vld [vmem:[%s5 + $0xad8] sm:$0xff]
      %v1541 = vld [vmem:[%s5 + $0xae0] sm:$0xff]
      %v1542 = vld [vmem:[%s5 + $0xae8] sm:$0xff]
      %v1543 = vld [vmem:[%s5 + $0xaf0] sm:$0xff]
      %v1544 = vld [vmem:[%s5 + $0xaf8] sm:$0xff]
      %v1545 = vld [vmem:[%s5 + $0xb00] sm:$0xff]
      %v1546 = vld [vmem:[%s5 + $0xb08] sm:$0xff]
      %v1547 = vld [vmem:[%s5 + $0xb10] sm:$0xff]
      %v1548 = vld [vmem:[%s5 + $0xb18] sm:$0xff]
      %v1549 = vld [vmem:[%s5 + $0xb20] sm:$0xff]
      %v1550 = vld [vmem:[%s5 + $0xb28] sm:$0xff]
      %v1551 = vld [vmem:[%s5 + $0xb30] sm:$0xff]
      %v1552 = vld [vmem:[%s5 + $0xb38] sm:$0xff]
      %v1553 = vld [vmem:[%s5 + $0xb40] sm:$0xff]
      %v1554 = vld [vmem:[%s5 + $0xb48] sm:$0xff]
      %v1555 = vld [vmem:[%s5 + $0xb50] sm:$0xff]
      %v1556 = vld [vmem:[%s5 + $0xb58] sm:$0xff]
      %v1557 = vld [vmem:[%s5 + $0xb60] sm:$0xff]
      %v1558 = vld [vmem:[%s5 + $0xb68] sm:$0xff]
      %v1559 = vld [vmem:[%s5 + $0xb70] sm:$0xff]
      %v1560 = vld [vmem:[%s5 + $0xb78] sm:$0xff]
      %v1561 = vld [vmem:[%s5 + $0xb80] sm:$0xff]
      %v1562 = vld [vmem:[%s5 + $0xb88] sm:$0xff]
      %v1563 = vld [vmem:[%s5 + $0xb90] sm:$0xff]
      %v1564 = vld [vmem:[%s5 + $0xb98] sm:$0xff]
      %v1565 = vld [vmem:[%s5 + $0xba0] sm:$0xff]
      %v1566 = vld [vmem:[%s5 + $0xba8] sm:$0xff]
      %v1567 = vld [vmem:[%s5 + $0xbb0] sm:$0xff]
      %v1568 = vld [vmem:[%s5 + $0xbb8] sm:$0xff]
      %v1569 = vld [vmem:[%s5 + $0xbc0] sm:$0xff]
      %v1570 = vld [vmem:[%s5 + $0xbc8] sm:$0xff]
      %v1571 = vld [vmem:[%s5 + $0xbd0] sm:$0xff]
      %v1572 = vld [vmem:[%s5 + $0xbd8] sm:$0xff]
      %v1573 = vld [vmem:[%s5 + $0xbe0] sm:$0xff]
      %v1574 = vld [vmem:[%s5 + $0xbe8] sm:$0xff]
      %v1575 = vld [vmem:[%s5 + $0xbf0] sm:$0xff]
      %v1576 = vld [vmem:[%s5 + $0xbf8] sm:$0xff]
      %v1577 = vld [vmem:[%s5 + $0xc00] sm:$0xff]
      %v1578 = vld [vmem:[%s5 + $0xc08] sm:$0xff]
      %v1579 = vld [vmem:[%s5 + $0xc10] sm:$0xff]
      %v1580 = vld [vmem:[%s5 + $0xc18] sm:$0xff]
      %v1581 = vld [vmem:[%s5 + $0xc20] sm:$0xff]
      %v1582 = vld [vmem:[%s5 + $0xc28] sm:$0xff]
      %v1583 = vld [vmem:[%s5 + $0xc30] sm:$0xff]
      %v1584 = vld [vmem:[%s5 + $0xc38] sm:$0xff]
      %v1585 = vld [vmem:[%s5 + $0xc40] sm:$0xff]
      %v1586 = vld [vmem:[%s5 + $0xc48] sm:$0xff]
      %v1587 = vld [vmem:[%s5 + $0xc50] sm:$0xff]
      %v1588 = vld [vmem:[%s5 + $0xc58] sm:$0xff]
      %v1589 = vld [vmem:[%s5 + $0xc60] sm:$0xff]
      %v1590 = vld [vmem:[%s5 + $0xc68] sm:$0xff]
      %v1591 = vld [vmem:[%s5 + $0xc70] sm:$0xff]
      %v1592 = vld [vmem:[%s5 + $0xc78] sm:$0xff]
      %v1593 = vld [vmem:[%s5 + $0xc80] sm:$0xff]
      %v1594 = vld [vmem:[%s5 + $0xc88] sm:$0xff]
      %v1595 = vld [vmem:[%s5 + $0xc90] sm:$0xff]
      %v1596 = vld [vmem:[%s5 + $0xc98] sm:$0xff]
      %v1597 = vld [vmem:[%s5 + $0xca0] sm:$0xff]
      %v1598 = vld [vmem:[%s5 + $0xca8] sm:$0xff]
      %v1599 = vld [vmem:[%s5 + $0xcb0] sm:$0xff]
      %v1600 = vld [vmem:[%s5 + $0xcb8] sm:$0xff]
      %v1601 = vld [vmem:[%s5 + $0xcc0] sm:$0xff]
      %v1602 = vld [vmem:[%s5 + $0xcc8] sm:$0xff]
      %v1603 = vld [vmem:[%s5 + $0xcd0] sm:$0xff]
      %v1604 = vld [vmem:[%s5 + $0xcd8] sm:$0xff]
      %v1605 = vld [vmem:[%s5 + $0xce0] sm:$0xff]
      %v1606 = vld [vmem:[%s5 + $0xce8] sm:$0xff]
      %v1607 = vld [vmem:[%s5 + $0xcf0] sm:$0xff]
      %v1608 = vld [vmem:[%s5 + $0xcf8] sm:$0xff]
      %v1609 = vld [vmem:[%s5 + $0xd00] sm:$0xff]
      %v1610 = vld [vmem:[%s5 + $0xd08] sm:$0xff]
      %v1611 = vld [vmem:[%s5 + $0xd10] sm:$0xff]
      %v1612 = vld [vmem:[%s5 + $0xd18] sm:$0xff]
      %v1613 = vld [vmem:[%s5 + $0xd20] sm:$0xff]
      %v1614 = vld [vmem:[%s5 + $0xd28] sm:$0xff]
      %v1615 = vld [vmem:[%s5 + $0xd30] sm:$0xff]
      %v1616 = vld [vmem:[%s5 + $0xd38] sm:$0xff]
      %v1617 = vld [vmem:[%s5 + $0xd40] sm:$0xff]
      %v1618 = vld [vmem:[%s5 + $0xd48] sm:$0xff]
      %v1619 = vld [vmem:[%s5 + $0xd50] sm:$0xff]
      %v1620 = vld [vmem:[%s5 + $0xd58] sm:$0xff]
      %v1621 = vld [vmem:[%s5 + $0xd60] sm:$0xff]
      %v1622 = vld [vmem:[%s5 + $0xd68] sm:$0xff]
      %v1623 = vld [vmem:[%s5 + $0xd70] sm:$0xff]
      %v1624 = vld [vmem:[%s5 + $0xd78] sm:$0xff]
      %v1625 = vld [vmem:[%s5 + $0xd80] sm:$0xff]
      %v1626 = vld [vmem:[%s5 + $0xd88] sm:$0xff]
      %v1627 = vld [vmem:[%s5 + $0xd90] sm:$0xff]
      %v1628 = vld [vmem:[%s5 + $0xd98] sm:$0xff]
      %v1629 = vld [vmem:[%s5 + $0xda0] sm:$0xff]
      %v1630 = vld [vmem:[%s5 + $0xda8] sm:$0xff]
      %v1631 = vld [vmem:[%s5 + $0xdb0] sm:$0xff]
      %v1632 = vld [vmem:[%s5 + $0xdb8] sm:$0xff]
      %v1633 = vld [vmem:[%s5 + $0xdc0] sm:$0xff]
      %v1634 = vld [vmem:[%s5 + $0xdc8] sm:$0xff]
      %v1635 = vld [vmem:[%s5 + $0xdd0] sm:$0xff]
      %v1636 = vld [vmem:[%s5 + $0xdd8] sm:$0xff]
      %v1637 = vld [vmem:[%s5 + $0xde0] sm:$0xff]
      %v1638 = vld [vmem:[%s5 + $0xde8] sm:$0xff]
      %v1639 = vld [vmem:[%s5 + $0xdf0] sm:$0xff]
      %v1640 = vld [vmem:[%s5 + $0xdf8] sm:$0xff]
      %v1641 = vld [vmem:[%s5 + $0xe00] sm:$0xff]
      %v1642 = vld [vmem:[%s5 + $0xe08] sm:$0xff]
      %v1643 = vld [vmem:[%s5 + $0xe10] sm:$0xff]
      %v1644 = vld [vmem:[%s5 + $0xe18] sm:$0xff]
      %v1645 = vld [vmem:[%s5 + $0xe20] sm:$0xff]
      %v1646 = vld [vmem:[%s5 + $0xe28] sm:$0xff]
      %v1647 = vld [vmem:[%s5 + $0xe30] sm:$0xff]
      %v1648 = vld [vmem:[%s5 + $0xe38] sm:$0xff]
      %v1649 = vld [vmem:[%s5 + $0xe40] sm:$0xff]
      %v1650 = vld [vmem:[%s5 + $0xe48] sm:$0xff]
      %v1651 = vld [vmem:[%s5 + $0xe50] sm:$0xff]
      %v1652 = vld [vmem:[%s5 + $0xe58] sm:$0xff]
      %v1653 = vld [vmem:[%s5 + $0xe60] sm:$0xff]
      %v1654 = vld [vmem:[%s5 + $0xe68] sm:$0xff]
      %v1655 = vld [vmem:[%s5 + $0xe70] sm:$0xff]
      %v1656 = vld [vmem:[%s5 + $0xe78] sm:$0xff]
      %v1657 = vld [vmem:[%s5 + $0xe80] sm:$0xff]
      %v1658 = vld [vmem:[%s5 + $0xe88] sm:$0xff]
      %v1659 = vld [vmem:[%s5 + $0xe90] sm:$0xff]
      %v1660 = vld [vmem:[%s5 + $0xe98] sm:$0xff]
      %v1661 = vld [vmem:[%s5 + $0xea0] sm:$0xff]
      %v1662 = vld [vmem:[%s5 + $0xea8] sm:$0xff]
      %v1663 = vld [vmem:[%s5 + $0xeb0] sm:$0xff]
      %v1664 = vld [vmem:[%s5 + $0xeb8] sm:$0xff]
      %v1665 = vld [vmem:[%s5 + $0xec0] sm:$0xff]
      %v1666 = vld [vmem:[%s5 + $0xec8] sm:$0xff]
      %v1667 = vld [vmem:[%s5 + $0xed0] sm:$0xff]
      %v1668 = vld [vmem:[%s5 + $0xed8] sm:$0xff]
      %v1669 = vld [vmem:[%s5 + $0xee0] sm:$0xff]
      %v1670 = vld [vmem:[%s5 + $0xee8] sm:$0xff]
      %v1671 = vld [vmem:[%s5 + $0xef0] sm:$0xff]
      %v1672 = vld [vmem:[%s5 + $0xef8] sm:$0xff]
      %v1673 = vld [vmem:[%s5 + $0xf00] sm:$0xff]
      %v1674 = vld [vmem:[%s5 + $0xf08] sm:$0xff]
      %v1675 = vld [vmem:[%s5 + $0xf10] sm:$0xff]
      %v1676 = vld [vmem:[%s5 + $0xf18] sm:$0xff]
      %v1677 = vld [vmem:[%s5 + $0xf20] sm:$0xff]
      %v1678 = vld [vmem:[%s5 + $0xf28] sm:$0xff]
      %v1679 = vld [vmem:[%s5 + $0xf30] sm:$0xff]
      %v1680 = vld [vmem:[%s5 + $0xf38] sm:$0xff]
      %v1681 = vld [vmem:[%s5 + $0xf40] sm:$0xff]
      %v1682 = vld [vmem:[%s5 + $0xf48] sm:$0xff]
      %v1683 = vld [vmem:[%s5 + $0xf50] sm:$0xff]
      %v1684 = vld [vmem:[%s5 + $0xf58] sm:$0xff]
      %v1685 = vld [vmem:[%s5 + $0xf60] sm:$0xff]
      %v1686 = vld [vmem:[%s5 + $0xf68] sm:$0xff]
      %v1687 = vld [vmem:[%s5 + $0xf70] sm:$0xff]
      %v1688 = vld [vmem:[%s5 + $0xf78] sm:$0xff]
      %v1689 = vld [vmem:[%s5 + $0xf80] sm:$0xff]
      %v1690 = vld [vmem:[%s5 + $0xf88] sm:$0xff]
      %v1691 = vld [vmem:[%s5 + $0xf90] sm:$0xff]
      %v1692 = vld [vmem:[%s5 + $0xf98] sm:$0xff]
      %v1693 = vld [vmem:[%s5 + $0xfa0] sm:$0xff]
      %v1694 = vld [vmem:[%s5 + $0xfa8] sm:$0xff]
      %v1695 = vld [vmem:[%s5 + $0xfb0] sm:$0xff]
      %v1696 = vld [vmem:[%s5 + $0xfb8] sm:$0xff]
      %v1697 = vld [vmem:[%s5 + $0xfc0] sm:$0xff]
      %v1698 = vld [vmem:[%s5 + $0xfc8] sm:$0xff]
      %v1699 = vld [vmem:[%s5 + $0xfd0] sm:$0xff]
      %v1700 = vld [vmem:[%s5 + $0xfd8] sm:$0xff]
      %v1701 = vld [vmem:[%s5 + $0xfe0] sm:$0xff]
      %v1702 = vld [vmem:[%s5 + $0xfe8] sm:$0xff]
      %v1703 = vld [vmem:[%s5 + $0xff0] sm:$0xff]
      %v1704 = vld [vmem:[%s5 + $0xff8] sm:$0xff]
      %v1705 = vld [vmem:[%s5 + $0x1000] sm:$0xff]
      %v1706 = vld [vmem:[%s5 + $0x1008] sm:$0xff]
      %v1707 = vld [vmem:[%s5 + $0x1010] sm:$0xff]
      %v1708 = vld [vmem:[%s5 + $0x1018] sm:$0xff]
      %v1709 = vld [vmem:[%s5 + $0x1020] sm:$0xff]
      %v1710 = vld [vmem:[%s5 + $0x1028] sm:$0xff]
      %v1711 = vld [vmem:[%s5 + $0x1030] sm:$0xff]
      %v1712 = vld [vmem:[%s5 + $0x1038] sm:$0xff]
      %v1713 = vld [vmem:[%s5 + $0x1040] sm:$0xff]
      %v1714 = vld [vmem:[%s5 + $0x1048] sm:$0xff]
      %v1715 = vld [vmem:[%s5 + $0x1050] sm:$0xff]
      %v1716 = vld [vmem:[%s5 + $0x1058] sm:$0xff]
      %v1717 = vld [vmem:[%s5 + $0x1060] sm:$0xff]
      %v1718 = vld [vmem:[%s5 + $0x1068] sm:$0xff]
      %v1719 = vld [vmem:[%s5 + $0x1070] sm:$0xff]
      %v1720 = vld [vmem:[%s5 + $0x1078] sm:$0xff]
      %v1721 = vld [vmem:[%s5 + $0x1080] sm:$0xff]
      %v1722 = vld [vmem:[%s5 + $0x1088] sm:$0xff]
      %v1723 = vld [vmem:[%s5 + $0x1090] sm:$0xff]
      %v1724 = vld [vmem:[%s5 + $0x1098] sm:$0xff]
      %v1725 = vld [vmem:[%s5 + $0x10a0] sm:$0xff]
      %v1726 = vld [vmem:[%s5 + $0x10a8] sm:$0xff]
      %v1727 = vld [vmem:[%s5 + $0x10b0] sm:$0xff]
      %v1728 = vld [vmem:[%s5 + $0x10b8] sm:$0xff]
      %v1729 = vld [vmem:[%s5 + $0x10c0] sm:$0xff]
      %v1730 = vld [vmem:[%s5 + $0x10c8] sm:$0xff]
      %v1731 = vld [vmem:[%s5 + $0x10d0] sm:$0xff]
      %v1732 = vld [vmem:[%s5 + $0x10d8] sm:$0xff]
      %v1733 = vld [vmem:[%s5 + $0x10e0] sm:$0xff]
      %v1734 = vld [vmem:[%s5 + $0x10e8] sm:$0xff]
      %v1735 = vld [vmem:[%s5 + $0x10f0] sm:$0xff]
      %v1736 = vld [vmem:[%s5 + $0x10f8] sm:$0xff]
      %v1737 = vld [vmem:[%s5 + $0x1100] sm:$0xff]
      %v1738 = vld [vmem:[%s5 + $0x1108] sm:$0xff]
      %v1739 = vld [vmem:[%s5 + $0x1110] sm:$0xff]
      %v1740 = vld [vmem:[%s5 + $0x1118] sm:$0xff]
      %v1741 = vld [vmem:[%s5 + $0x1120] sm:$0xff]
      %v1742 = vld [vmem:[%s5 + $0x1128] sm:$0xff]
      %v1743 = vld [vmem:[%s5 + $0x1130] sm:$0xff]
      %v1744 = vld [vmem:[%s5 + $0x1138] sm:$0xff]
      %v1745 = vld [vmem:[%s5 + $0x1140] sm:$0xff]
      %v1746 = vld [vmem:[%s5 + $0x1148] sm:$0xff]
      %v1747 = vld [vmem:[%s5 + $0x1150] sm:$0xff]
      %v1748 = vld [vmem:[%s5 + $0x1158] sm:$0xff]
      %v1749 = vld [vmem:[%s5 + $0x1160] sm:$0xff]
      %v1750 = vld [vmem:[%s5 + $0x1168] sm:$0xff]
      %v1751 = vld [vmem:[%s5 + $0x1170] sm:$0xff]
      %v1752 = vld [vmem:[%s5 + $0x1178] sm:$0xff]
      %v1753 = vld [vmem:[%s5 + $0x1180] sm:$0xff]
      %v1754 = vld [vmem:[%s5 + $0x1188] sm:$0xff]
      %v1755 = vld [vmem:[%s5 + $0x1190] sm:$0xff]
      %v1756 = vld [vmem:[%s5 + $0x1198] sm:$0xff]
      %v1757 = vld [vmem:[%s5 + $0x11a0] sm:$0xff]
      %v1758 = vld [vmem:[%s5 + $0x11a8] sm:$0xff]
      %v1759 = vld [vmem:[%s5 + $0x11b0] sm:$0xff]
      %v1760 = vld [vmem:[%s5 + $0x11b8] sm:$0xff]
      %v1761 = vld [vmem:[%s5 + $0x11c0] sm:$0xff]
      %v1762 = vld [vmem:[%s5 + $0x11c8] sm:$0xff]
      %v1763 = vld [vmem:[%s5 + $0x11d0] sm:$0xff]
      %v1764 = vld [vmem:[%s5 + $0x11d8] sm:$0xff]
      %v1765 = vld [vmem:[%s5 + $0x11e0] sm:$0xff]
      %v1766 = vld [vmem:[%s5 + $0x11e8] sm:$0xff]
      %v1767 = vld [vmem:[%s5 + $0x11f0] sm:$0xff]
      %v1768 = vld [vmem:[%s5 + $0x11f8] sm:$0xff]
      %v1769 = vlaneseq
      %v1770 = vshrl.u32 %v1769, 7
      %v1771 = vsub.s32 7, %v1770
      %v1772 = vrot.slane %v516, %v1771
      %v1773 = vlaneseq
      %v1774 = vshrl.u32 %v1773, 7
      %v1775 = vsub.s32 7, %v1774
      %v1776 = vrot.slane %v517, %v1775
      %v1777 = vlaneseq
      %v1778 = vshrl.u32 %v1777, 7
      %v1779 = vsub.s32 7, %v1778
      %v1780 = vrot.slane %v518, %v1779
      %v1781 = vlaneseq
      %v1782 = vshrl.u32 %v1781, 7
      %v1783 = vsub.s32 7, %v1782
      %v1784 = vrot.slane %v519, %v1783
      %v1785 = vlaneseq
      %v1786 = vshrl.u32 %v1785, 7
      %v1787 = vsub.s32 7, %v1786
      %v1788 = vrot.slane %v520, %v1787
      %v1789 = vlaneseq
      %v1790 = vshrl.u32 %v1789, 7
      %v1791 = vsub.s32 7, %v1790
      %v1792 = vrot.slane %v521, %v1791
      %1793 = vmatprep.subr.mxu0 %v1284
      %1794 = vmatpush1.msra.mxu0 %v1283
      %1795 = vmatprep.subr.mxu0 %v1278
      %1796 = vmatpush1.msra.mxu0 %v1277
      %1797 = vmatprep.subr.mxu0 %v1272
      %1798 = vmatpush1.msra.mxu0 %v1271
      %1799 = vmatprep.subr.mxu0 %v1266
      %1800 = vmatpush1.msra.mxu0 %v1265
      %1801 = vmatprep.subr.mxu0 %v1260
      %1802 = vmatpush1.msra.mxu0 %v1259
      %1803 = vmatprep.subr.mxu0 %v1254
      %1804 = vmatpush1.msra.mxu0 %v1253
      %1805 = vmatprep.subr.mxu0 %v1248
      %1806 = vmatpush1.msra.mxu0 %v1247
      %1807 = vmatprep.subr.mxu0 %v1242
      %1808 = vmatpush1.msra.mxu0 %v1241
      %1809 = vmatprep.subr.mxu0 %v1236
      %1810 = vmatpush1.msra.mxu0 %v1235
      %1811 = vmatprep.subr.mxu0 %v1230
      %1812 = vmatpush1.msra.mxu0 %v1229
      %1813 = vmatprep.subr.mxu0 %v1224
      %1814 = vmatpush1.msra.mxu0 %v1223
      %1815 = vmatprep.subr.mxu0 %v1218
      %1816 = vmatpush1.msra.mxu0 %v1217
      %1817 = vmatprep.subr.mxu0 %v1212
      %1818 = vmatpush1.msra.mxu0 %v1211
      %1819 = vmatprep.subr.mxu0 %v1206
      %1820 = vmatpush1.msra.mxu0 %v1205
      %1821 = vmatprep.subr.mxu0 %v1200
      %1822 = vmatpush1.msra.mxu0 %v1199
      %1823 = vmatprep.subr.mxu0 %v1194
      %1824 = vmatpush1.msra.mxu0 %v1193
      %1825 = vmatprep.subr.mxu0 %v1380
      %1826 = vmatpush2.msra.mxu0 %v1379
      %1827 = vmatprep.subr.mxu0 %v1374
      %1828 = vmatpush2.msra.mxu0 %v1373
      %1829 = vmatprep.subr.mxu0 %v1368
      %1830 = vmatpush2.msra.mxu0 %v1367
      %1831 = vmatprep.subr.mxu0 %v1362
      %1832 = vmatpush2.msra.mxu0 %v1361
      %1833 = vmatprep.subr.mxu0 %v1356
      %1834 = vmatpush2.msra.mxu0 %v1355
      %1835 = vmatprep.subr.mxu0 %v1350
      %1836 = vmatpush2.msra.mxu0 %v1349
      %1837 = vmatprep.subr.mxu0 %v1344
      %1838 = vmatpush2.msra.mxu0 %v1343
      %1839 = vmatprep.subr.mxu0 %v1338
      %1840 = vmatpush2.msra.mxu0 %v1337
      %1841 = vmatprep.subr.mxu0 %v1332
      %1842 = vmatpush2.msra.mxu0 %v1331
      %1843 = vmatprep.subr.mxu0 %v1326
      %1844 = vmatpush2.msra.mxu0 %v1325
      %1845 = vmatprep.subr.mxu0 %v1320
      %1846 = vmatpush2.msra.mxu0 %v1319
      %1847 = vmatprep.subr.mxu0 %v1314
      %1848 = vmatpush2.msra.mxu0 %v1313
      %1849 = vmatprep.subr.mxu0 %v1308
      %1850 = vmatpush2.msra.mxu0 %v1307
      %1851 = vmatprep.subr.mxu0 %v1302
      %1852 = vmatpush2.msra.mxu0 %v1301
      %1853 = vmatprep.subr.mxu0 %v1296
      %1854 = vmatpush2.msra.mxu0 %v1295
      %1855 = vmatprep.subr.mxu0 %v1290
      %1856 = vmatpush2.msra.mxu0 %v1289
      %1857 = vmatprep.mubr.f32.mxu0 %v1098
      %1858 = vmatmul.mubr.f32.gmra.mxu0 %v1097
      %v1859 = vpop.f32.mrf.mxu0
      %v1860 = vadd.f32 %v1772, %v1859
      %v1861 = vpop.f32.mrf.mxu0
      %v1862 = vadd.f32 %v1776, %v1861
      %1863 = vmatprep.mubr.f32.mxu0 %v1104
      %1864 = vmatmul.mubr.f32.gmra.mxu0 %v1103
      %v1865 = vpop.f32.mrf.mxu0
      %v1866 = vadd.f32 %v1772, %v1865
      %v1867 = vpop.f32.mrf.mxu0
      %v1868 = vadd.f32 %v1776, %v1867
      %1869 = vmatprep.mubr.f32.mxu0 %v1110
      %1870 = vmatmul.mubr.f32.gmra.mxu0 %v1109
      %v1871 = vpop.f32.mrf.mxu0
      %v1872 = vadd.f32 %v1772, %v1871
      %v1873 = vpop.f32.mrf.mxu0
      %v1874 = vadd.f32 %v1776, %v1873
      %1875 = vmatprep.mubr.f32.mxu0 %v1116
      %1876 = vmatmul.mubr.f32.gmra.mxu0 %v1115
      %v1877 = vpop.f32.mrf.mxu0
      %v1878 = vadd.f32 %v1772, %v1877
      %v1879 = vpop.f32.mrf.mxu0
      %v1880 = vadd.f32 %v1776, %v1879
      %1881 = vmatprep.mubr.f32.mxu0 %v1122
      %1882 = vmatmul.mubr.f32.gmra.mxu0 %v1121
      %v1883 = vpop.f32.mrf.mxu0
      %v1884 = vadd.f32 %v1772, %v1883
      %v1885 = vpop.f32.mrf.mxu0
      %v1886 = vadd.f32 %v1776, %v1885
      %1887 = vmatprep.mubr.f32.mxu0 %v1128
      %1888 = vmatmul.mubr.f32.gmra.mxu0 %v1127
      %v1889 = vpop.f32.mrf.mxu0
      %v1890 = vadd.f32 %v1772, %v1889
      %v1891 = vpop.f32.mrf.mxu0
      %v1892 = vadd.f32 %v1776, %v1891
      %1893 = vmatprep.mubr.f32.mxu0 %v1134
      %1894 = vmatmul.mubr.f32.gmra.mxu0 %v1133
      %v1895 = vpop.f32.mrf.mxu0
      %v1896 = vadd.f32 %v1772, %v1895
      %v1897 = vpop.f32.mrf.mxu0
      %v1898 = vadd.f32 %v1776, %v1897
      %1899 = vmatprep.mubr.f32.mxu0 %v1140
      %1900 = vmatmul.mubr.f32.gmra.mxu0 %v1139
      %v1901 = vpop.f32.mrf.mxu0
      %v1902 = vadd.f32 %v1772, %v1901
      %v1903 = vpop.f32.mrf.mxu0
      %v1904 = vadd.f32 %v1776, %v1903
      %1905 = vmatprep.mubr.f32.mxu0 %v1146
      %1906 = vmatmul.mubr.f32.gmra.mxu0 %v1145
      %v1907 = vpop.f32.mrf.mxu0
      %v1908 = vadd.f32 %v1772, %v1907
      %v1909 = vpop.f32.mrf.mxu0
      %v1910 = vadd.f32 %v1776, %v1909
      %1911 = vmatprep.mubr.f32.mxu0 %v1152
      %1912 = vmatmul.mubr.f32.gmra.mxu0 %v1151
      %v1913 = vpop.f32.mrf.mxu0
      %v1914 = vadd.f32 %v1772, %v1913
      %v1915 = vpop.f32.mrf.mxu0
      %v1916 = vadd.f32 %v1776, %v1915
      %1917 = vmatprep.mubr.f32.mxu0 %v1158
      %1918 = vmatmul.mubr.f32.gmra.mxu0 %v1157
      %v1919 = vpop.f32.mrf.mxu0
      %v1920 = vadd.f32 %v1772, %v1919
      %v1921 = vpop.f32.mrf.mxu0
      %v1922 = vadd.f32 %v1776, %v1921
      %1923 = vmatprep.mubr.f32.mxu0 %v1164
      %1924 = vmatmul.mubr.f32.gmra.mxu0 %v1163
      %v1925 = vpop.f32.mrf.mxu0
      %v1926 = vadd.f32 %v1772, %v1925
      %v1927 = vpop.f32.mrf.mxu0
      %v1928 = vadd.f32 %v1776, %v1927
      %1929 = vmatprep.mubr.f32.mxu0 %v1170
      %1930 = vmatmul.mubr.f32.gmra.mxu0 %v1169
      %v1931 = vpop.f32.mrf.mxu0
      %v1932 = vadd.f32 %v1772, %v1931
      %v1933 = vpop.f32.mrf.mxu0
      %v1934 = vadd.f32 %v1776, %v1933
      %1935 = vmatprep.mubr.f32.mxu0 %v1176
      %1936 = vmatmul.mubr.f32.gmra.mxu0 %v1175
      %v1937 = vpop.f32.mrf.mxu0
      %v1938 = vadd.f32 %v1772, %v1937
      %v1939 = vpop.f32.mrf.mxu0
      %v1940 = vadd.f32 %v1776, %v1939
      %1941 = vmatprep.mubr.f32.mxu0 %v1182
      %1942 = vmatmul.mubr.f32.gmra.mxu0 %v1181
      %v1943 = vpop.f32.mrf.mxu0
      %v1944 = vadd.f32 %v1772, %v1943
      %v1945 = vpop.f32.mrf.mxu0
      %v1946 = vadd.f32 %v1776, %v1945
      %1947 = vmatprep.mubr.f32.mxu0 %v1188
      %1948 = vmatmul.mubr.f32.gmra.mxu0 %v1187
      %v1949 = vpop.f32.mrf.mxu0
      %v1950 = vadd.f32 %v1772, %v1949
      %v1951 = vpop.f32.mrf.mxu0
      %v1952 = vadd.f32 %v1776, %v1951
      %1953 = vdwg.mxu0
      %1954 = vmatprep.subr.mxu0 %v1476
      %1955 = vmatpush1.msra.mxu0 %v1475
      %1956 = vmatprep.subr.mxu0 %v1470
      %1957 = vmatpush1.msra.mxu0 %v1469
      %1958 = vmatprep.subr.mxu0 %v1464
      %1959 = vmatpush1.msra.mxu0 %v1463
      %1960 = vmatprep.subr.mxu0 %v1458
      %1961 = vmatpush1.msra.mxu0 %v1457
      %1962 = vmatprep.subr.mxu0 %v1452
      %1963 = vmatpush1.msra.mxu0 %v1451
      %1964 = vmatprep.subr.mxu0 %v1446
      %1965 = vmatpush1.msra.mxu0 %v1445
      %1966 = vmatprep.subr.mxu0 %v1440
      %1967 = vmatpush1.msra.mxu0 %v1439
      %1968 = vmatprep.subr.mxu0 %v1434
      %1969 = vmatpush1.msra.mxu0 %v1433
      %1970 = vmatprep.subr.mxu0 %v1428
      %1971 = vmatpush1.msra.mxu0 %v1427
      %1972 = vmatprep.subr.mxu0 %v1422
      %1973 = vmatpush1.msra.mxu0 %v1421
      %1974 = vmatprep.subr.mxu0 %v1416
      %1975 = vmatpush1.msra.mxu0 %v1415
      %1976 = vmatprep.subr.mxu0 %v1410
      %1977 = vmatpush1.msra.mxu0 %v1409
      %1978 = vmatprep.subr.mxu0 %v1404
      %1979 = vmatpush1.msra.mxu0 %v1403
      %1980 = vmatprep.subr.mxu0 %v1398
      %1981 = vmatpush1.msra.mxu0 %v1397
      %1982 = vmatprep.subr.mxu0 %v1392
      %1983 = vmatpush1.msra.mxu0 %v1391
      %1984 = vmatprep.subr.mxu0 %v1386
      %1985 = vmatpush1.msra.mxu0 %v1385
      %1986 = vmatprep.subr.mxu0 %v1572
      %1987 = vmatpush2.msra.mxu0 %v1571
      %1988 = vmatprep.subr.mxu0 %v1566
      %1989 = vmatpush2.msra.mxu0 %v1565
      %1990 = vmatprep.subr.mxu0 %v1560
      %1991 = vmatpush2.msra.mxu0 %v1559
      %1992 = vmatprep.subr.mxu0 %v1554
      %1993 = vmatpush2.msra.mxu0 %v1553
      %1994 = vmatprep.subr.mxu0 %v1548
      %1995 = vmatpush2.msra.mxu0 %v1547
      %1996 = vmatprep.subr.mxu0 %v1542
      %1997 = vmatpush2.msra.mxu0 %v1541
      %1998 = vmatprep.subr.mxu0 %v1536
      %1999 = vmatpush2.msra.mxu0 %v1535
      %2000 = vmatprep.subr.mxu0 %v1530
      %2001 = vmatpush2.msra.mxu0 %v1529
      %2002 = vmatprep.subr.mxu0 %v1524
      %2003 = vmatpush2.msra.mxu0 %v1523
      %2004 = vmatprep.subr.mxu0 %v1518
      %2005 = vmatpush2.msra.mxu0 %v1517
      %2006 = vmatprep.subr.mxu0 %v1512
      %2007 = vmatpush2.msra.mxu0 %v1511
      %2008 = vmatprep.subr.mxu0 %v1506
      %2009 = vmatpush2.msra.mxu0 %v1505
      %2010 = vmatprep.subr.mxu0 %v1500
      %2011 = vmatpush2.msra.mxu0 %v1499
      %2012 = vmatprep.subr.mxu0 %v1494
      %2013 = vmatpush2.msra.mxu0 %v1493
      %2014 = vmatprep.subr.mxu0 %v1488
      %2015 = vmatpush2.msra.mxu0 %v1487
      %2016 = vmatprep.subr.mxu0 %v1482
      %2017 = vmatpush2.msra.mxu0 %v1481
      %2018 = vmatprep.mubr.f32.mxu0 %v1100
      %2019 = vmatmul.mubr.f32.gmra.mxu0 %v1099
      %v2020 = vpop.f32.mrf.mxu0
      %v2021 = vadd.f32 %v1860, %v2020
      %v2022 = vpop.f32.mrf.mxu0
      %v2023 = vadd.f32 %v1862, %v2022
      %2024 = vmatprep.mubr.f32.mxu0 %v1106
      %2025 = vmatmul.mubr.f32.gmra.mxu0 %v1105
      %v2026 = vpop.f32.mrf.mxu0
      %v2027 = vadd.f32 %v1866, %v2026
      %v2028 = vpop.f32.mrf.mxu0
      %v2029 = vadd.f32 %v1868, %v2028
      %2030 = vmatprep.mubr.f32.mxu0 %v1112
      %2031 = vmatmul.mubr.f32.gmra.mxu0 %v1111
      %v2032 = vpop.f32.mrf.mxu0
      %v2033 = vadd.f32 %v1872, %v2032
      %v2034 = vpop.f32.mrf.mxu0
      %v2035 = vadd.f32 %v1874, %v2034
      %2036 = vmatprep.mubr.f32.mxu0 %v1118
      %2037 = vmatmul.mubr.f32.gmra.mxu0 %v1117
      %v2038 = vpop.f32.mrf.mxu0
      %v2039 = vadd.f32 %v1878, %v2038
      %v2040 = vpop.f32.mrf.mxu0
      %v2041 = vadd.f32 %v1880, %v2040
      %2042 = vmatprep.mubr.f32.mxu0 %v1124
      %2043 = vmatmul.mubr.f32.gmra.mxu0 %v1123
      %v2044 = vpop.f32.mrf.mxu0
      %v2045 = vadd.f32 %v1884, %v2044
      %v2046 = vpop.f32.mrf.mxu0
      %v2047 = vadd.f32 %v1886, %v2046
      %2048 = vmatprep.mubr.f32.mxu0 %v1130
      %2049 = vmatmul.mubr.f32.gmra.mxu0 %v1129
      %v2050 = vpop.f32.mrf.mxu0
      %v2051 = vadd.f32 %v1890, %v2050
      %v2052 = vpop.f32.mrf.mxu0
      %v2053 = vadd.f32 %v1892, %v2052
      %2054 = vmatprep.mubr.f32.mxu0 %v1136
      %2055 = vmatmul.mubr.f32.gmra.mxu0 %v1135
      %v2056 = vpop.f32.mrf.mxu0
      %v2057 = vadd.f32 %v1896, %v2056
      %v2058 = vpop.f32.mrf.mxu0
      %v2059 = vadd.f32 %v1898, %v2058
      %2060 = vmatprep.mubr.f32.mxu0 %v1142
      %2061 = vmatmul.mubr.f32.gmra.mxu0 %v1141
      %v2062 = vpop.f32.mrf.mxu0
      %v2063 = vadd.f32 %v1902, %v2062
      %v2064 = vpop.f32.mrf.mxu0
      %v2065 = vadd.f32 %v1904, %v2064
      %2066 = vmatprep.mubr.f32.mxu0 %v1148
      %2067 = vmatmul.mubr.f32.gmra.mxu0 %v1147
      %v2068 = vpop.f32.mrf.mxu0
      %v2069 = vadd.f32 %v1908, %v2068
      %v2070 = vpop.f32.mrf.mxu0
      %v2071 = vadd.f32 %v1910, %v2070
      %2072 = vmatprep.mubr.f32.mxu0 %v1154
      %2073 = vmatmul.mubr.f32.gmra.mxu0 %v1153
      %v2074 = vpop.f32.mrf.mxu0
      %v2075 = vadd.f32 %v1914, %v2074
      %v2076 = vpop.f32.mrf.mxu0
      %v2077 = vadd.f32 %v1916, %v2076
      %2078 = vmatprep.mubr.f32.mxu0 %v1160
      %2079 = vmatmul.mubr.f32.gmra.mxu0 %v1159
      %v2080 = vpop.f32.mrf.mxu0
      %v2081 = vadd.f32 %v1920, %v2080
      %v2082 = vpop.f32.mrf.mxu0
      %v2083 = vadd.f32 %v1922, %v2082
      %2084 = vmatprep.mubr.f32.mxu0 %v1166
      %2085 = vmatmul.mubr.f32.gmra.mxu0 %v1165
      %v2086 = vpop.f32.mrf.mxu0
      %v2087 = vadd.f32 %v1926, %v2086
      %v2088 = vpop.f32.mrf.mxu0
      %v2089 = vadd.f32 %v1928, %v2088
      %2090 = vmatprep.mubr.f32.mxu0 %v1172
      %2091 = vmatmul.mubr.f32.gmra.mxu0 %v1171
      %v2092 = vpop.f32.mrf.mxu0
      %v2093 = vadd.f32 %v1932, %v2092
      %v2094 = vpop.f32.mrf.mxu0
      %v2095 = vadd.f32 %v1934, %v2094
      %2096 = vmatprep.mubr.f32.mxu0 %v1178
      %2097 = vmatmul.mubr.f32.gmra.mxu0 %v1177
      %v2098 = vpop.f32.mrf.mxu0
      %v2099 = vadd.f32 %v1938, %v2098
      %v2100 = vpop.f32.mrf.mxu0
      %v2101 = vadd.f32 %v1940, %v2100
      %2102 = vmatprep.mubr.f32.mxu0 %v1184
      %2103 = vmatmul.mubr.f32.gmra.mxu0 %v1183
      %v2104 = vpop.f32.mrf.mxu0
      %v2105 = vadd.f32 %v1944, %v2104
      %v2106 = vpop.f32.mrf.mxu0
      %v2107 = vadd.f32 %v1946, %v2106
      %2108 = vmatprep.mubr.f32.mxu0 %v1190
      %2109 = vmatmul.mubr.f32.gmra.mxu0 %v1189
      %v2110 = vpop.f32.mrf.mxu0
      %v2111 = vadd.f32 %v1950, %v2110
      %v2112 = vpop.f32.mrf.mxu0
      %v2113 = vadd.f32 %v1952, %v2112
      %2114 = vdwg.mxu0
      %2115 = vmatprep.subr.mxu0 %v1668
      %2116 = vmatpush1.msra.mxu0 %v1667
      %2117 = vmatprep.subr.mxu0 %v1662
      %2118 = vmatpush1.msra.mxu0 %v1661
      %2119 = vmatprep.subr.mxu0 %v1656
      %2120 = vmatpush1.msra.mxu0 %v1655
      %2121 = vmatprep.subr.mxu0 %v1650
      %2122 = vmatpush1.msra.mxu0 %v1649
      %2123 = vmatprep.subr.mxu0 %v1644
      %2124 = vmatpush1.msra.mxu0 %v1643
      %2125 = vmatprep.subr.mxu0 %v1638
      %2126 = vmatpush1.msra.mxu0 %v1637
      %2127 = vmatprep.subr.mxu0 %v1632
      %2128 = vmatpush1.msra.mxu0 %v1631
      %2129 = vmatprep.subr.mxu0 %v1626
      %2130 = vmatpush1.msra.mxu0 %v1625
      %2131 = vmatprep.subr.mxu0 %v1620
      %2132 = vmatpush1.msra.mxu0 %v1619
      %2133 = vmatprep.subr.mxu0 %v1614
      %2134 = vmatpush1.msra.mxu0 %v1613
      %2135 = vmatprep.subr.mxu0 %v1608
      %2136 = vmatpush1.msra.mxu0 %v1607
      %2137 = vmatprep.subr.mxu0 %v1602
      %2138 = vmatpush1.msra.mxu0 %v1601
      %2139 = vmatprep.subr.mxu0 %v1596
      %2140 = vmatpush1.msra.mxu0 %v1595
      %2141 = vmatprep.subr.mxu0 %v1590
      %2142 = vmatpush1.msra.mxu0 %v1589
      %2143 = vmatprep.subr.mxu0 %v1584
      %2144 = vmatpush1.msra.mxu0 %v1583
      %2145 = vmatprep.subr.mxu0 %v1578
      %2146 = vmatpush1.msra.mxu0 %v1577
      %2147 = vmatprep.subr.mxu0 %v1764
      %2148 = vmatpush2.msra.mxu0 %v1763
      %2149 = vmatprep.subr.mxu0 %v1758
      %2150 = vmatpush2.msra.mxu0 %v1757
      %2151 = vmatprep.subr.mxu0 %v1752
      %2152 = vmatpush2.msra.mxu0 %v1751
      %2153 = vmatprep.subr.mxu0 %v1746
      %2154 = vmatpush2.msra.mxu0 %v1745
      %2155 = vmatprep.subr.mxu0 %v1740
      %2156 = vmatpush2.msra.mxu0 %v1739
      %2157 = vmatprep.subr.mxu0 %v1734
      %2158 = vmatpush2.msra.mxu0 %v1733
      %2159 = vmatprep.subr.mxu0 %v1728
      %2160 = vmatpush2.msra.mxu0 %v1727
      %2161 = vmatprep.subr.mxu0 %v1722
      %2162 = vmatpush2.msra.mxu0 %v1721
      %2163 = vmatprep.subr.mxu0 %v1716
      %2164 = vmatpush2.msra.mxu0 %v1715
      %2165 = vmatprep.subr.mxu0 %v1710
      %2166 = vmatpush2.msra.mxu0 %v1709
      %2167 = vmatprep.subr.mxu0 %v1704
      %2168 = vmatpush2.msra.mxu0 %v1703
      %2169 = vmatprep.subr.mxu0 %v1698
      %2170 = vmatpush2.msra.mxu0 %v1697
      %2171 = vmatprep.subr.mxu0 %v1692
      %2172 = vmatpush2.msra.mxu0 %v1691
      %2173 = vmatprep.subr.mxu0 %v1686
      %2174 = vmatpush2.msra.mxu0 %v1685
      %2175 = vmatprep.subr.mxu0 %v1680
      %2176 = vmatpush2.msra.mxu0 %v1679
      %2177 = vmatprep.subr.mxu0 %v1674
      %2178 = vmatpush2.msra.mxu0 %v1673
      %2179 = vmatprep.mubr.f32.mxu0 %v1102
      %2180 = vmatmul.mubr.f32.gmra.mxu0 %v1101
      %v2181 = vpop.f32.mrf.mxu0
      %v2182 = vadd.f32 %v2021, %v2181
      %v2183 = vpop.f32.mrf.mxu0
      %v2184 = vadd.f32 %v2023, %v2183
      %2185 = vmatprep.mubr.f32.mxu0 %v1108
      %2186 = vmatmul.mubr.f32.gmra.mxu0 %v1107
      %v2187 = vpop.f32.mrf.mxu0
      %v2188 = vadd.f32 %v2027, %v2187
      %v2189 = vpop.f32.mrf.mxu0
      %v2190 = vadd.f32 %v2029, %v2189
      %2191 = vmatprep.mubr.f32.mxu0 %v1114
      %2192 = vmatmul.mubr.f32.gmra.mxu0 %v1113
      %v2193 = vpop.f32.mrf.mxu0
      %v2194 = vadd.f32 %v2033, %v2193
      %v2195 = vpop.f32.mrf.mxu0
      %v2196 = vadd.f32 %v2035, %v2195
      %2197 = vmatprep.mubr.f32.mxu0 %v1120
      %2198 = vmatmul.mubr.f32.gmra.mxu0 %v1119
      %v2199 = vpop.f32.mrf.mxu0
      %v2200 = vadd.f32 %v2039, %v2199
      %v2201 = vpop.f32.mrf.mxu0
      %v2202 = vadd.f32 %v2041, %v2201
      %2203 = vmatprep.mubr.f32.mxu0 %v1126
      %2204 = vmatmul.mubr.f32.gmra.mxu0 %v1125
      %v2205 = vpop.f32.mrf.mxu0
      %v2206 = vadd.f32 %v2045, %v2205
      %v2207 = vpop.f32.mrf.mxu0
      %v2208 = vadd.f32 %v2047, %v2207
      %2209 = vmatprep.mubr.f32.mxu0 %v1132
      %2210 = vmatmul.mubr.f32.gmra.mxu0 %v1131
      %v2211 = vpop.f32.mrf.mxu0
      %v2212 = vadd.f32 %v2051, %v2211
      %v2213 = vpop.f32.mrf.mxu0
      %v2214 = vadd.f32 %v2053, %v2213
      %2215 = vmatprep.mubr.f32.mxu0 %v1138
      %2216 = vmatmul.mubr.f32.gmra.mxu0 %v1137
      %v2217 = vpop.f32.mrf.mxu0
      %v2218 = vadd.f32 %v2057, %v2217
      %v2219 = vpop.f32.mrf.mxu0
      %v2220 = vadd.f32 %v2059, %v2219
      %2221 = vmatprep.mubr.f32.mxu0 %v1144
      %2222 = vmatmul.mubr.f32.gmra.mxu0 %v1143
      %v2223 = vpop.f32.mrf.mxu0
      %v2224 = vadd.f32 %v2063, %v2223
      %v2225 = vpop.f32.mrf.mxu0
      %v2226 = vadd.f32 %v2065, %v2225
      %2227 = vmatprep.mubr.f32.mxu0 %v1150
      %2228 = vmatmul.mubr.f32.gmra.mxu0 %v1149
      %v2229 = vpop.f32.mrf.mxu0
      %v2230 = vadd.f32 %v2069, %v2229
      %v2231 = vpop.f32.mrf.mxu0
      %v2232 = vadd.f32 %v2071, %v2231
      %2233 = vmatprep.mubr.f32.mxu0 %v1156
      %2234 = vmatmul.mubr.f32.gmra.mxu0 %v1155
      %v2235 = vpop.f32.mrf.mxu0
      %v2236 = vadd.f32 %v2075, %v2235
      %v2237 = vpop.f32.mrf.mxu0
      %v2238 = vadd.f32 %v2077, %v2237
      %2239 = vmatprep.mubr.f32.mxu0 %v1162
      %2240 = vmatmul.mubr.f32.gmra.mxu0 %v1161
      %v2241 = vpop.f32.mrf.mxu0
      %v2242 = vadd.f32 %v2081, %v2241
      %v2243 = vpop.f32.mrf.mxu0
      %v2244 = vadd.f32 %v2083, %v2243
      %2245 = vmatprep.mubr.f32.mxu0 %v1168
      %2246 = vmatmul.mubr.f32.gmra.mxu0 %v1167
      %v2247 = vpop.f32.mrf.mxu0
      %v2248 = vadd.f32 %v2087, %v2247
      %v2249 = vpop.f32.mrf.mxu0
      %v2250 = vadd.f32 %v2089, %v2249
      %2251 = vmatprep.mubr.f32.mxu0 %v1174
      %2252 = vmatmul.mubr.f32.gmra.mxu0 %v1173
      %v2253 = vpop.f32.mrf.mxu0
      %v2254 = vadd.f32 %v2093, %v2253
      %v2255 = vpop.f32.mrf.mxu0
      %v2256 = vadd.f32 %v2095, %v2255
      %2257 = vmatprep.mubr.f32.mxu0 %v1180
      %2258 = vmatmul.mubr.f32.gmra.mxu0 %v1179
      %v2259 = vpop.f32.mrf.mxu0
      %v2260 = vadd.f32 %v2099, %v2259
      %v2261 = vpop.f32.mrf.mxu0
      %v2262 = vadd.f32 %v2101, %v2261
      %2263 = vmatprep.mubr.f32.mxu0 %v1186
      %2264 = vmatmul.mubr.f32.gmra.mxu0 %v1185
      %v2265 = vpop.f32.mrf.mxu0
      %v2266 = vadd.f32 %v2105, %v2265
      %v2267 = vpop.f32.mrf.mxu0
      %v2268 = vadd.f32 %v2107, %v2267
      %2269 = vmatprep.mubr.f32.mxu0 %v1192
      %2270 = vmatmul.mubr.f32.gmra.mxu0 %v1191
      %v2271 = vpop.f32.mrf.mxu0
      %v2272 = vadd.f32 %v2111, %v2271
      %v2273 = vpop.f32.mrf.mxu0
      %v2274 = vadd.f32 %v2113, %v2273
      %2275 = vdwg.mxu0
      %2276 = vmatprep.subr.mxu0 %v1286
      %2277 = vmatpush1.msra.mxu0 %v1285
      %2278 = vmatprep.subr.mxu0 %v1280
      %2279 = vmatpush1.msra.mxu0 %v1279
      %2280 = vmatprep.subr.mxu0 %v1274
      %2281 = vmatpush1.msra.mxu0 %v1273
      %2282 = vmatprep.subr.mxu0 %v1268
      %2283 = vmatpush1.msra.mxu0 %v1267
      %2284 = vmatprep.subr.mxu0 %v1262
      %2285 = vmatpush1.msra.mxu0 %v1261
      %2286 = vmatprep.subr.mxu0 %v1256
      %2287 = vmatpush1.msra.mxu0 %v1255
      %2288 = vmatprep.subr.mxu0 %v1250
      %2289 = vmatpush1.msra.mxu0 %v1249
      %2290 = vmatprep.subr.mxu0 %v1244
      %2291 = vmatpush1.msra.mxu0 %v1243
      %2292 = vmatprep.subr.mxu0 %v1238
      %2293 = vmatpush1.msra.mxu0 %v1237
      %2294 = vmatprep.subr.mxu0 %v1232
      %2295 = vmatpush1.msra.mxu0 %v1231
      %2296 = vmatprep.subr.mxu0 %v1226
      %2297 = vmatpush1.msra.mxu0 %v1225
      %2298 = vmatprep.subr.mxu0 %v1220
      %2299 = vmatpush1.msra.mxu0 %v1219
      %2300 = vmatprep.subr.mxu0 %v1214
      %2301 = vmatpush1.msra.mxu0 %v1213
      %2302 = vmatprep.subr.mxu0 %v1208
      %2303 = vmatpush1.msra.mxu0 %v1207
      %2304 = vmatprep.subr.mxu0 %v1202
      %2305 = vmatpush1.msra.mxu0 %v1201
      %2306 = vmatprep.subr.mxu0 %v1196
      %2307 = vmatpush1.msra.mxu0 %v1195
      %2308 = vmatprep.subr.mxu0 %v1382
      %2309 = vmatpush2.msra.mxu0 %v1381
      %2310 = vmatprep.subr.mxu0 %v1376
      %2311 = vmatpush2.msra.mxu0 %v1375
      %2312 = vmatprep.subr.mxu0 %v1370
      %2313 = vmatpush2.msra.mxu0 %v1369
      %2314 = vmatprep.subr.mxu0 %v1364
      %2315 = vmatpush2.msra.mxu0 %v1363
      %2316 = vmatprep.subr.mxu0 %v1358
      %2317 = vmatpush2.msra.mxu0 %v1357
      %2318 = vmatprep.subr.mxu0 %v1352
      %2319 = vmatpush2.msra.mxu0 %v1351
      %2320 = vmatprep.subr.mxu0 %v1346
      %2321 = vmatpush2.msra.mxu0 %v1345
      %2322 = vmatprep.subr.mxu0 %v1340
      %2323 = vmatpush2.msra.mxu0 %v1339
      %2324 = vmatprep.subr.mxu0 %v1334
      %2325 = vmatpush2.msra.mxu0 %v1333
      %2326 = vmatprep.subr.mxu0 %v1328
      %2327 = vmatpush2.msra.mxu0 %v1327
      %2328 = vmatprep.subr.mxu0 %v1322
      %2329 = vmatpush2.msra.mxu0 %v1321
      %2330 = vmatprep.subr.mxu0 %v1316
      %2331 = vmatpush2.msra.mxu0 %v1315
      %2332 = vmatprep.subr.mxu0 %v1310
      %2333 = vmatpush2.msra.mxu0 %v1309
      %2334 = vmatprep.subr.mxu0 %v1304
      %2335 = vmatpush2.msra.mxu0 %v1303
      %2336 = vmatprep.subr.mxu0 %v1298
      %2337 = vmatpush2.msra.mxu0 %v1297
      %2338 = vmatprep.subr.mxu0 %v1292
      %2339 = vmatpush2.msra.mxu0 %v1291
      %2340 = vmatprep.mubr.f32.mxu0 %v1098
      %2341 = vmatmul.mubr.f32.gmra.mxu0 %v1097
      %v2342 = vpop.f32.mrf.mxu0
      %v2343 = vadd.f32 %v1780, %v2342
      %v2344 = vpop.f32.mrf.mxu0
      %v2345 = vadd.f32 %v1784, %v2344
      %2346 = vmatprep.mubr.f32.mxu0 %v1104
      %2347 = vmatmul.mubr.f32.gmra.mxu0 %v1103
      %v2348 = vpop.f32.mrf.mxu0
      %v2349 = vadd.f32 %v1780, %v2348
      %v2350 = vpop.f32.mrf.mxu0
      %v2351 = vadd.f32 %v1784, %v2350
      %2352 = vmatprep.mubr.f32.mxu0 %v1110
      %2353 = vmatmul.mubr.f32.gmra.mxu0 %v1109
      %v2354 = vpop.f32.mrf.mxu0
      %v2355 = vadd.f32 %v1780, %v2354
      %v2356 = vpop.f32.mrf.mxu0
      %v2357 = vadd.f32 %v1784, %v2356
      %2358 = vmatprep.mubr.f32.mxu0 %v1116
      %2359 = vmatmul.mubr.f32.gmra.mxu0 %v1115
      %v2360 = vpop.f32.mrf.mxu0
      %v2361 = vadd.f32 %v1780, %v2360
      %v2362 = vpop.f32.mrf.mxu0
      %v2363 = vadd.f32 %v1784, %v2362
      %2364 = vmatprep.mubr.f32.mxu0 %v1122
      %2365 = vmatmul.mubr.f32.gmra.mxu0 %v1121
      %v2366 = vpop.f32.mrf.mxu0
      %v2367 = vadd.f32 %v1780, %v2366
      %v2368 = vpop.f32.mrf.mxu0
      %v2369 = vadd.f32 %v1784, %v2368
      %2370 = vmatprep.mubr.f32.mxu0 %v1128
      %2371 = vmatmul.mubr.f32.gmra.mxu0 %v1127
      %v2372 = vpop.f32.mrf.mxu0
      %v2373 = vadd.f32 %v1780, %v2372
      %v2374 = vpop.f32.mrf.mxu0
      %v2375 = vadd.f32 %v1784, %v2374
      %2376 = vmatprep.mubr.f32.mxu0 %v1134
      %2377 = vmatmul.mubr.f32.gmra.mxu0 %v1133
      %v2378 = vpop.f32.mrf.mxu0
      %v2379 = vadd.f32 %v1780, %v2378
      %v2380 = vpop.f32.mrf.mxu0
      %v2381 = vadd.f32 %v1784, %v2380
      %2382 = vmatprep.mubr.f32.mxu0 %v1140
      %2383 = vmatmul.mubr.f32.gmra.mxu0 %v1139
      %v2384 = vpop.f32.mrf.mxu0
      %v2385 = vadd.f32 %v1780, %v2384
      %v2386 = vpop.f32.mrf.mxu0
      %v2387 = vadd.f32 %v1784, %v2386
      %2388 = vmatprep.mubr.f32.mxu0 %v1146
      %2389 = vmatmul.mubr.f32.gmra.mxu0 %v1145
      %v2390 = vpop.f32.mrf.mxu0
      %v2391 = vadd.f32 %v1780, %v2390
      %v2392 = vpop.f32.mrf.mxu0
      %v2393 = vadd.f32 %v1784, %v2392
      %2394 = vmatprep.mubr.f32.mxu0 %v1152
      %2395 = vmatmul.mubr.f32.gmra.mxu0 %v1151
      %v2396 = vpop.f32.mrf.mxu0
      %v2397 = vadd.f32 %v1780, %v2396
      %v2398 = vpop.f32.mrf.mxu0
      %v2399 = vadd.f32 %v1784, %v2398
      %2400 = vmatprep.mubr.f32.mxu0 %v1158
      %2401 = vmatmul.mubr.f32.gmra.mxu0 %v1157
      %v2402 = vpop.f32.mrf.mxu0
      %v2403 = vadd.f32 %v1780, %v2402
      %v2404 = vpop.f32.mrf.mxu0
      %v2405 = vadd.f32 %v1784, %v2404
      %2406 = vmatprep.mubr.f32.mxu0 %v1164
      %2407 = vmatmul.mubr.f32.gmra.mxu0 %v1163
      %v2408 = vpop.f32.mrf.mxu0
      %v2409 = vadd.f32 %v1780, %v2408
      %v2410 = vpop.f32.mrf.mxu0
      %v2411 = vadd.f32 %v1784, %v2410
      %2412 = vmatprep.mubr.f32.mxu0 %v1170
      %2413 = vmatmul.mubr.f32.gmra.mxu0 %v1169
      %v2414 = vpop.f32.mrf.mxu0
      %v2415 = vadd.f32 %v1780, %v2414
      %v2416 = vpop.f32.mrf.mxu0
      %v2417 = vadd.f32 %v1784, %v2416
      %2418 = vmatprep.mubr.f32.mxu0 %v1176
      %2419 = vmatmul.mubr.f32.gmra.mxu0 %v1175
      %v2420 = vpop.f32.mrf.mxu0
      %v2421 = vadd.f32 %v1780, %v2420
      %v2422 = vpop.f32.mrf.mxu0
      %v2423 = vadd.f32 %v1784, %v2422
      %2424 = vmatprep.mubr.f32.mxu0 %v1182
      %2425 = vmatmul.mubr.f32.gmra.mxu0 %v1181
      %v2426 = vpop.f32.mrf.mxu0
      %v2427 = vadd.f32 %v1780, %v2426
      %v2428 = vpop.f32.mrf.mxu0
      %v2429 = vadd.f32 %v1784, %v2428
      %2430 = vmatprep.mubr.f32.mxu0 %v1188
      %2431 = vmatmul.mubr.f32.gmra.mxu0 %v1187
      %v2432 = vpop.f32.mrf.mxu0
      %v2433 = vadd.f32 %v1780, %v2432
      %v2434 = vpop.f32.mrf.mxu0
      %v2435 = vadd.f32 %v1784, %v2434
      %2436 = vdwg.mxu0
      %2437 = vmatprep.subr.mxu0 %v1478
      %2438 = vmatpush1.msra.mxu0 %v1477
      %2439 = vmatprep.subr.mxu0 %v1472
      %2440 = vmatpush1.msra.mxu0 %v1471
      %2441 = vmatprep.subr.mxu0 %v1466
      %2442 = vmatpush1.msra.mxu0 %v1465
      %2443 = vmatprep.subr.mxu0 %v1460
      %2444 = vmatpush1.msra.mxu0 %v1459
      %2445 = vmatprep.subr.mxu0 %v1454
      %2446 = vmatpush1.msra.mxu0 %v1453
      %2447 = vmatprep.subr.mxu0 %v1448
      %2448 = vmatpush1.msra.mxu0 %v1447
      %2449 = vmatprep.subr.mxu0 %v1442
      %2450 = vmatpush1.msra.mxu0 %v1441
      %2451 = vmatprep.subr.mxu0 %v1436
      %2452 = vmatpush1.msra.mxu0 %v1435
      %2453 = vmatprep.subr.mxu0 %v1430
      %2454 = vmatpush1.msra.mxu0 %v1429
      %2455 = vmatprep.subr.mxu0 %v1424
      %2456 = vmatpush1.msra.mxu0 %v1423
      %2457 = vmatprep.subr.mxu0 %v1418
      %2458 = vmatpush1.msra.mxu0 %v1417
      %2459 = vmatprep.subr.mxu0 %v1412
      %2460 = vmatpush1.msra.mxu0 %v1411
      %2461 = vmatprep.subr.mxu0 %v1406
      %2462 = vmatpush1.msra.mxu0 %v1405
      %2463 = vmatprep.subr.mxu0 %v1400
      %2464 = vmatpush1.msra.mxu0 %v1399
      %2465 = vmatprep.subr.mxu0 %v1394
      %2466 = vmatpush1.msra.mxu0 %v1393
      %2467 = vmatprep.subr.mxu0 %v1388
      %2468 = vmatpush1.msra.mxu0 %v1387
      %2469 = vmatprep.subr.mxu0 %v1574
      %2470 = vmatpush2.msra.mxu0 %v1573
      %2471 = vmatprep.subr.mxu0 %v1568
      %2472 = vmatpush2.msra.mxu0 %v1567
      %2473 = vmatprep.subr.mxu0 %v1562
      %2474 = vmatpush2.msra.mxu0 %v1561
      %2475 = vmatprep.subr.mxu0 %v1556
      %2476 = vmatpush2.msra.mxu0 %v1555
      %2477 = vmatprep.subr.mxu0 %v1550
      %2478 = vmatpush2.msra.mxu0 %v1549
      %2479 = vmatprep.subr.mxu0 %v1544
      %2480 = vmatpush2.msra.mxu0 %v1543
      %2481 = vmatprep.subr.mxu0 %v1538
      %2482 = vmatpush2.msra.mxu0 %v1537
      %2483 = vmatprep.subr.mxu0 %v1532
      %2484 = vmatpush2.msra.mxu0 %v1531
      %2485 = vmatprep.subr.mxu0 %v1526
      %2486 = vmatpush2.msra.mxu0 %v1525
      %2487 = vmatprep.subr.mxu0 %v1520
      %2488 = vmatpush2.msra.mxu0 %v1519
      %2489 = vmatprep.subr.mxu0 %v1514
      %2490 = vmatpush2.msra.mxu0 %v1513
      %2491 = vmatprep.subr.mxu0 %v1508
      %2492 = vmatpush2.msra.mxu0 %v1507
      %2493 = vmatprep.subr.mxu0 %v1502
      %2494 = vmatpush2.msra.mxu0 %v1501
      %2495 = vmatprep.subr.mxu0 %v1496
      %2496 = vmatpush2.msra.mxu0 %v1495
      %2497 = vmatprep.subr.mxu0 %v1490
      %2498 = vmatpush2.msra.mxu0 %v1489
      %2499 = vmatprep.subr.mxu0 %v1484
      %2500 = vmatpush2.msra.mxu0 %v1483
      %2501 = vmatprep.mubr.f32.mxu0 %v1100
      %2502 = vmatmul.mubr.f32.gmra.mxu0 %v1099
      %v2503 = vpop.f32.mrf.mxu0
      %v2504 = vadd.f32 %v2343, %v2503
      %v2505 = vpop.f32.mrf.mxu0
      %v2506 = vadd.f32 %v2345, %v2505
      %2507 = vmatprep.mubr.f32.mxu0 %v1106
      %2508 = vmatmul.mubr.f32.gmra.mxu0 %v1105
      %v2509 = vpop.f32.mrf.mxu0
      %v2510 = vadd.f32 %v2349, %v2509
      %v2511 = vpop.f32.mrf.mxu0
      %v2512 = vadd.f32 %v2351, %v2511
      %2513 = vmatprep.mubr.f32.mxu0 %v1112
      %2514 = vmatmul.mubr.f32.gmra.mxu0 %v1111
      %v2515 = vpop.f32.mrf.mxu0
      %v2516 = vadd.f32 %v2355, %v2515
      %v2517 = vpop.f32.mrf.mxu0
      %v2518 = vadd.f32 %v2357, %v2517
      %2519 = vmatprep.mubr.f32.mxu0 %v1118
      %2520 = vmatmul.mubr.f32.gmra.mxu0 %v1117
      %v2521 = vpop.f32.mrf.mxu0
      %v2522 = vadd.f32 %v2361, %v2521
      %v2523 = vpop.f32.mrf.mxu0
      %v2524 = vadd.f32 %v2363, %v2523
      %2525 = vmatprep.mubr.f32.mxu0 %v1124
      %2526 = vmatmul.mubr.f32.gmra.mxu0 %v1123
      %v2527 = vpop.f32.mrf.mxu0
      %v2528 = vadd.f32 %v2367, %v2527
      %v2529 = vpop.f32.mrf.mxu0
      %v2530 = vadd.f32 %v2369, %v2529
      %2531 = vmatprep.mubr.f32.mxu0 %v1130
      %2532 = vmatmul.mubr.f32.gmra.mxu0 %v1129
      %v2533 = vpop.f32.mrf.mxu0
      %v2534 = vadd.f32 %v2373, %v2533
      %v2535 = vpop.f32.mrf.mxu0
      %v2536 = vadd.f32 %v2375, %v2535
      %2537 = vmatprep.mubr.f32.mxu0 %v1136
      %2538 = vmatmul.mubr.f32.gmra.mxu0 %v1135
      %v2539 = vpop.f32.mrf.mxu0
      %v2540 = vadd.f32 %v2379, %v2539
      %v2541 = vpop.f32.mrf.mxu0
      %v2542 = vadd.f32 %v2381, %v2541
      %2543 = vmatprep.mubr.f32.mxu0 %v1142
      %2544 = vmatmul.mubr.f32.gmra.mxu0 %v1141
      %v2545 = vpop.f32.mrf.mxu0
      %v2546 = vadd.f32 %v2385, %v2545
      %v2547 = vpop.f32.mrf.mxu0
      %v2548 = vadd.f32 %v2387, %v2547
      %2549 = vmatprep.mubr.f32.mxu0 %v1148
      %2550 = vmatmul.mubr.f32.gmra.mxu0 %v1147
      %v2551 = vpop.f32.mrf.mxu0
      %v2552 = vadd.f32 %v2391, %v2551
      %v2553 = vpop.f32.mrf.mxu0
      %v2554 = vadd.f32 %v2393, %v2553
      %2555 = vmatprep.mubr.f32.mxu0 %v1154
      %2556 = vmatmul.mubr.f32.gmra.mxu0 %v1153
      %v2557 = vpop.f32.mrf.mxu0
      %v2558 = vadd.f32 %v2397, %v2557
      %v2559 = vpop.f32.mrf.mxu0
      %v2560 = vadd.f32 %v2399, %v2559
      %2561 = vmatprep.mubr.f32.mxu0 %v1160
      %2562 = vmatmul.mubr.f32.gmra.mxu0 %v1159
      %v2563 = vpop.f32.mrf.mxu0
      %v2564 = vadd.f32 %v2403, %v2563
      %v2565 = vpop.f32.mrf.mxu0
      %v2566 = vadd.f32 %v2405, %v2565
      %2567 = vmatprep.mubr.f32.mxu0 %v1166
      %2568 = vmatmul.mubr.f32.gmra.mxu0 %v1165
      %v2569 = vpop.f32.mrf.mxu0
      %v2570 = vadd.f32 %v2409, %v2569
      %v2571 = vpop.f32.mrf.mxu0
      %v2572 = vadd.f32 %v2411, %v2571
      %2573 = vmatprep.mubr.f32.mxu0 %v1172
      %2574 = vmatmul.mubr.f32.gmra.mxu0 %v1171
      %v2575 = vpop.f32.mrf.mxu0
      %v2576 = vadd.f32 %v2415, %v2575
      %v2577 = vpop.f32.mrf.mxu0
      %v2578 = vadd.f32 %v2417, %v2577
      %2579 = vmatprep.mubr.f32.mxu0 %v1178
      %2580 = vmatmul.mubr.f32.gmra.mxu0 %v1177
      %v2581 = vpop.f32.mrf.mxu0
      %v2582 = vadd.f32 %v2421, %v2581
      %v2583 = vpop.f32.mrf.mxu0
      %v2584 = vadd.f32 %v2423, %v2583
      %2585 = vmatprep.mubr.f32.mxu0 %v1184
      %2586 = vmatmul.mubr.f32.gmra.mxu0 %v1183
      %v2587 = vpop.f32.mrf.mxu0
      %v2588 = vadd.f32 %v2427, %v2587
      %v2589 = vpop.f32.mrf.mxu0
      %v2590 = vadd.f32 %v2429, %v2589
      %2591 = vmatprep.mubr.f32.mxu0 %v1190
      %2592 = vmatmul.mubr.f32.gmra.mxu0 %v1189
      %v2593 = vpop.f32.mrf.mxu0
      %v2594 = vadd.f32 %v2433, %v2593
      %v2595 = vpop.f32.mrf.mxu0
      %v2596 = vadd.f32 %v2435, %v2595
      %2597 = vdwg.mxu0
      %2598 = vmatprep.subr.mxu0 %v1670
      %2599 = vmatpush1.msra.mxu0 %v1669
      %2600 = vmatprep.subr.mxu0 %v1664
      %2601 = vmatpush1.msra.mxu0 %v1663
      %2602 = vmatprep.subr.mxu0 %v1658
      %2603 = vmatpush1.msra.mxu0 %v1657
      %2604 = vmatprep.subr.mxu0 %v1652
      %2605 = vmatpush1.msra.mxu0 %v1651
      %2606 = vmatprep.subr.mxu0 %v1646
      %2607 = vmatpush1.msra.mxu0 %v1645
      %2608 = vmatprep.subr.mxu0 %v1640
      %2609 = vmatpush1.msra.mxu0 %v1639
      %2610 = vmatprep.subr.mxu0 %v1634
      %2611 = vmatpush1.msra.mxu0 %v1633
      %2612 = vmatprep.subr.mxu0 %v1628
      %2613 = vmatpush1.msra.mxu0 %v1627
      %2614 = vmatprep.subr.mxu0 %v1622
      %2615 = vmatpush1.msra.mxu0 %v1621
      %2616 = vmatprep.subr.mxu0 %v1616
      %2617 = vmatpush1.msra.mxu0 %v1615
      %2618 = vmatprep.subr.mxu0 %v1610
      %2619 = vmatpush1.msra.mxu0 %v1609
      %2620 = vmatprep.subr.mxu0 %v1604
      %2621 = vmatpush1.msra.mxu0 %v1603
      %2622 = vmatprep.subr.mxu0 %v1598
      %2623 = vmatpush1.msra.mxu0 %v1597
      %2624 = vmatprep.subr.mxu0 %v1592
      %2625 = vmatpush1.msra.mxu0 %v1591
      %2626 = vmatprep.subr.mxu0 %v1586
      %2627 = vmatpush1.msra.mxu0 %v1585
      %2628 = vmatprep.subr.mxu0 %v1580
      %2629 = vmatpush1.msra.mxu0 %v1579
      %2630 = vmatprep.subr.mxu0 %v1766
      %2631 = vmatpush2.msra.mxu0 %v1765
      %2632 = vmatprep.subr.mxu0 %v1760
      %2633 = vmatpush2.msra.mxu0 %v1759
      %2634 = vmatprep.subr.mxu0 %v1754
      %2635 = vmatpush2.msra.mxu0 %v1753
      %2636 = vmatprep.subr.mxu0 %v1748
      %2637 = vmatpush2.msra.mxu0 %v1747
      %2638 = vmatprep.subr.mxu0 %v1742
      %2639 = vmatpush2.msra.mxu0 %v1741
      %2640 = vmatprep.subr.mxu0 %v1736
      %2641 = vmatpush2.msra.mxu0 %v1735
      %2642 = vmatprep.subr.mxu0 %v1730
      %2643 = vmatpush2.msra.mxu0 %v1729
      %2644 = vmatprep.subr.mxu0 %v1724
      %2645 = vmatpush2.msra.mxu0 %v1723
      %2646 = vmatprep.subr.mxu0 %v1718
      %2647 = vmatpush2.msra.mxu0 %v1717
      %2648 = vmatprep.subr.mxu0 %v1712
      %2649 = vmatpush2.msra.mxu0 %v1711
      %2650 = vmatprep.subr.mxu0 %v1706
      %2651 = vmatpush2.msra.mxu0 %v1705
      %2652 = vmatprep.subr.mxu0 %v1700
      %2653 = vmatpush2.msra.mxu0 %v1699
      %2654 = vmatprep.subr.mxu0 %v1694
      %2655 = vmatpush2.msra.mxu0 %v1693
      %2656 = vmatprep.subr.mxu0 %v1688
      %2657 = vmatpush2.msra.mxu0 %v1687
      %2658 = vmatprep.subr.mxu0 %v1682
      %2659 = vmatpush2.msra.mxu0 %v1681
      %2660 = vmatprep.subr.mxu0 %v1676
      %2661 = vmatpush2.msra.mxu0 %v1675
      %2662 = vmatprep.mubr.f32.mxu0 %v1102
      %2663 = vmatmul.mubr.f32.gmra.mxu0 %v1101
      %v2664 = vpop.f32.mrf.mxu0
      %v2665 = vadd.f32 %v2504, %v2664
      %v2666 = vpop.f32.mrf.mxu0
      %v2667 = vadd.f32 %v2506, %v2666
      %2668 = vmatprep.mubr.f32.mxu0 %v1108
      %2669 = vmatmul.mubr.f32.gmra.mxu0 %v1107
      %v2670 = vpop.f32.mrf.mxu0
      %v2671 = vadd.f32 %v2510, %v2670
      %v2672 = vpop.f32.mrf.mxu0
      %v2673 = vadd.f32 %v2512, %v2672
      %2674 = vmatprep.mubr.f32.mxu0 %v1114
      %2675 = vmatmul.mubr.f32.gmra.mxu0 %v1113
      %v2676 = vpop.f32.mrf.mxu0
      %v2677 = vadd.f32 %v2516, %v2676
      %v2678 = vpop.f32.mrf.mxu0
      %v2679 = vadd.f32 %v2518, %v2678
      %2680 = vmatprep.mubr.f32.mxu0 %v1120
      %2681 = vmatmul.mubr.f32.gmra.mxu0 %v1119
      %v2682 = vpop.f32.mrf.mxu0
      %v2683 = vadd.f32 %v2522, %v2682
      %v2684 = vpop.f32.mrf.mxu0
      %v2685 = vadd.f32 %v2524, %v2684
      %2686 = vmatprep.mubr.f32.mxu0 %v1126
      %2687 = vmatmul.mubr.f32.gmra.mxu0 %v1125
      %v2688 = vpop.f32.mrf.mxu0
      %v2689 = vadd.f32 %v2528, %v2688
      %v2690 = vpop.f32.mrf.mxu0
      %v2691 = vadd.f32 %v2530, %v2690
      %2692 = vmatprep.mubr.f32.mxu0 %v1132
      %2693 = vmatmul.mubr.f32.gmra.mxu0 %v1131
      %v2694 = vpop.f32.mrf.mxu0
      %v2695 = vadd.f32 %v2534, %v2694
      %v2696 = vpop.f32.mrf.mxu0
      %v2697 = vadd.f32 %v2536, %v2696
      %2698 = vmatprep.mubr.f32.mxu0 %v1138
      %2699 = vmatmul.mubr.f32.gmra.mxu0 %v1137
      %v2700 = vpop.f32.mrf.mxu0
      %v2701 = vadd.f32 %v2540, %v2700
      %v2702 = vpop.f32.mrf.mxu0
      %v2703 = vadd.f32 %v2542, %v2702
      %2704 = vmatprep.mubr.f32.mxu0 %v1144
      %2705 = vmatmul.mubr.f32.gmra.mxu0 %v1143
      %v2706 = vpop.f32.mrf.mxu0
      %v2707 = vadd.f32 %v2546, %v2706
      %v2708 = vpop.f32.mrf.mxu0
      %v2709 = vadd.f32 %v2548, %v2708
      %2710 = vmatprep.mubr.f32.mxu0 %v1150
      %2711 = vmatmul.mubr.f32.gmra.mxu0 %v1149
      %v2712 = vpop.f32.mrf.mxu0
      %v2713 = vadd.f32 %v2552, %v2712
      %v2714 = vpop.f32.mrf.mxu0
      %v2715 = vadd.f32 %v2554, %v2714
      %2716 = vmatprep.mubr.f32.mxu0 %v1156
      %2717 = vmatmul.mubr.f32.gmra.mxu0 %v1155
      %v2718 = vpop.f32.mrf.mxu0
      %v2719 = vadd.f32 %v2558, %v2718
      %v2720 = vpop.f32.mrf.mxu0
      %v2721 = vadd.f32 %v2560, %v2720
      %2722 = vmatprep.mubr.f32.mxu0 %v1162
      %2723 = vmatmul.mubr.f32.gmra.mxu0 %v1161
      %v2724 = vpop.f32.mrf.mxu0
      %v2725 = vadd.f32 %v2564, %v2724
      %v2726 = vpop.f32.mrf.mxu0
      %v2727 = vadd.f32 %v2566, %v2726
      %2728 = vmatprep.mubr.f32.mxu0 %v1168
      %2729 = vmatmul.mubr.f32.gmra.mxu0 %v1167
      %v2730 = vpop.f32.mrf.mxu0
      %v2731 = vadd.f32 %v2570, %v2730
      %v2732 = vpop.f32.mrf.mxu0
      %v2733 = vadd.f32 %v2572, %v2732
      %2734 = vmatprep.mubr.f32.mxu0 %v1174
      %2735 = vmatmul.mubr.f32.gmra.mxu0 %v1173
      %v2736 = vpop.f32.mrf.mxu0
      %v2737 = vadd.f32 %v2576, %v2736
      %v2738 = vpop.f32.mrf.mxu0
      %v2739 = vadd.f32 %v2578, %v2738
      %2740 = vmatprep.mubr.f32.mxu0 %v1180
      %2741 = vmatmul.mubr.f32.gmra.mxu0 %v1179
      %v2742 = vpop.f32.mrf.mxu0
      %v2743 = vadd.f32 %v2582, %v2742
      %v2744 = vpop.f32.mrf.mxu0
      %v2745 = vadd.f32 %v2584, %v2744
      %2746 = vmatprep.mubr.f32.mxu0 %v1186
      %2747 = vmatmul.mubr.f32.gmra.mxu0 %v1185
      %v2748 = vpop.f32.mrf.mxu0
      %v2749 = vadd.f32 %v2588, %v2748
      %v2750 = vpop.f32.mrf.mxu0
      %v2751 = vadd.f32 %v2590, %v2750
      %2752 = vmatprep.mubr.f32.mxu0 %v1192
      %2753 = vmatmul.mubr.f32.gmra.mxu0 %v1191
      %v2754 = vpop.f32.mrf.mxu0
      %v2755 = vadd.f32 %v2594, %v2754
      %v2756 = vpop.f32.mrf.mxu0
      %v2757 = vadd.f32 %v2596, %v2756
      %2758 = vdwg.mxu0
      %2759 = vmatprep.subr.mxu0 %v1288
      %2760 = vmatpush1.msra.mxu0 %v1287
      %2761 = vmatprep.subr.mxu0 %v1282
      %2762 = vmatpush1.msra.mxu0 %v1281
      %2763 = vmatprep.subr.mxu0 %v1276
      %2764 = vmatpush1.msra.mxu0 %v1275
      %2765 = vmatprep.subr.mxu0 %v1270
      %2766 = vmatpush1.msra.mxu0 %v1269
      %2767 = vmatprep.subr.mxu0 %v1264
      %2768 = vmatpush1.msra.mxu0 %v1263
      %2769 = vmatprep.subr.mxu0 %v1258
      %2770 = vmatpush1.msra.mxu0 %v1257
      %2771 = vmatprep.subr.mxu0 %v1252
      %2772 = vmatpush1.msra.mxu0 %v1251
      %2773 = vmatprep.subr.mxu0 %v1246
      %2774 = vmatpush1.msra.mxu0 %v1245
      %2775 = vmatprep.subr.mxu0 %v1240
      %2776 = vmatpush1.msra.mxu0 %v1239
      %2777 = vmatprep.subr.mxu0 %v1234
      %2778 = vmatpush1.msra.mxu0 %v1233
      %2779 = vmatprep.subr.mxu0 %v1228
      %2780 = vmatpush1.msra.mxu0 %v1227
      %2781 = vmatprep.subr.mxu0 %v1222
      %2782 = vmatpush1.msra.mxu0 %v1221
      %2783 = vmatprep.subr.mxu0 %v1216
      %2784 = vmatpush1.msra.mxu0 %v1215
      %2785 = vmatprep.subr.mxu0 %v1210
      %2786 = vmatpush1.msra.mxu0 %v1209
      %2787 = vmatprep.subr.mxu0 %v1204
      %2788 = vmatpush1.msra.mxu0 %v1203
      %2789 = vmatprep.subr.mxu0 %v1198
      %2790 = vmatpush1.msra.mxu0 %v1197
      %2791 = vmatprep.subr.mxu0 %v1384
      %2792 = vmatpush2.msra.mxu0 %v1383
      %2793 = vmatprep.subr.mxu0 %v1378
      %2794 = vmatpush2.msra.mxu0 %v1377
      %2795 = vmatprep.subr.mxu0 %v1372
      %2796 = vmatpush2.msra.mxu0 %v1371
      %2797 = vmatprep.subr.mxu0 %v1366
      %2798 = vmatpush2.msra.mxu0 %v1365
      %2799 = vmatprep.subr.mxu0 %v1360
      %2800 = vmatpush2.msra.mxu0 %v1359
      %2801 = vmatprep.subr.mxu0 %v1354
      %2802 = vmatpush2.msra.mxu0 %v1353
      %2803 = vmatprep.subr.mxu0 %v1348
      %2804 = vmatpush2.msra.mxu0 %v1347
      %2805 = vmatprep.subr.mxu0 %v1342
      %2806 = vmatpush2.msra.mxu0 %v1341
      %2807 = vmatprep.subr.mxu0 %v1336
      %2808 = vmatpush2.msra.mxu0 %v1335
      %2809 = vmatprep.subr.mxu0 %v1330
      %2810 = vmatpush2.msra.mxu0 %v1329
      %2811 = vmatprep.subr.mxu0 %v1324
      %2812 = vmatpush2.msra.mxu0 %v1323
      %2813 = vmatprep.subr.mxu0 %v1318
      %2814 = vmatpush2.msra.mxu0 %v1317
      %2815 = vmatprep.subr.mxu0 %v1312
      %2816 = vmatpush2.msra.mxu0 %v1311
      %2817 = vmatprep.subr.mxu0 %v1306
      %2818 = vmatpush2.msra.mxu0 %v1305
      %2819 = vmatprep.subr.mxu0 %v1300
      %2820 = vmatpush2.msra.mxu0 %v1299
      %2821 = vmatprep.subr.mxu0 %v1294
      %2822 = vmatpush2.msra.mxu0 %v1293
      %2823 = vmatprep.mubr.f32.mxu0 %v1098
      %2824 = vmatmul.mubr.f32.gmra.mxu0 %v1097
      %v2825 = vpop.f32.mrf.mxu0
      %v2826 = vadd.f32 %v1788, %v2825
      %v2827 = vpop.f32.mrf.mxu0
      %v2828 = vadd.f32 %v1792, %v2827
      %2829 = vmatprep.mubr.f32.mxu0 %v1104
      %2830 = vmatmul.mubr.f32.gmra.mxu0 %v1103
      %v2831 = vpop.f32.mrf.mxu0
      %v2832 = vadd.f32 %v1788, %v2831
      %v2833 = vpop.f32.mrf.mxu0
      %v2834 = vadd.f32 %v1792, %v2833
      %2835 = vmatprep.mubr.f32.mxu0 %v1110
      %2836 = vmatmul.mubr.f32.gmra.mxu0 %v1109
      %v2837 = vpop.f32.mrf.mxu0
      %v2838 = vadd.f32 %v1788, %v2837
      %v2839 = vpop.f32.mrf.mxu0
      %v2840 = vadd.f32 %v1792, %v2839
      %2841 = vmatprep.mubr.f32.mxu0 %v1116
      %2842 = vmatmul.mubr.f32.gmra.mxu0 %v1115
      %v2843 = vpop.f32.mrf.mxu0
      %v2844 = vadd.f32 %v1788, %v2843
      %v2845 = vpop.f32.mrf.mxu0
      %v2846 = vadd.f32 %v1792, %v2845
      %2847 = vmatprep.mubr.f32.mxu0 %v1122
      %2848 = vmatmul.mubr.f32.gmra.mxu0 %v1121
      %v2849 = vpop.f32.mrf.mxu0
      %v2850 = vadd.f32 %v1788, %v2849
      %v2851 = vpop.f32.mrf.mxu0
      %v2852 = vadd.f32 %v1792, %v2851
      %2853 = vmatprep.mubr.f32.mxu0 %v1128
      %2854 = vmatmul.mubr.f32.gmra.mxu0 %v1127
      %v2855 = vpop.f32.mrf.mxu0
      %v2856 = vadd.f32 %v1788, %v2855
      %v2857 = vpop.f32.mrf.mxu0
      %v2858 = vadd.f32 %v1792, %v2857
      %2859 = vmatprep.mubr.f32.mxu0 %v1134
      %2860 = vmatmul.mubr.f32.gmra.mxu0 %v1133
      %v2861 = vpop.f32.mrf.mxu0
      %v2862 = vadd.f32 %v1788, %v2861
      %v2863 = vpop.f32.mrf.mxu0
      %v2864 = vadd.f32 %v1792, %v2863
      %2865 = vmatprep.mubr.f32.mxu0 %v1140
      %2866 = vmatmul.mubr.f32.gmra.mxu0 %v1139
      %v2867 = vpop.f32.mrf.mxu0
      %v2868 = vadd.f32 %v1788, %v2867
      %v2869 = vpop.f32.mrf.mxu0
      %v2870 = vadd.f32 %v1792, %v2869
      %2871 = vmatprep.mubr.f32.mxu0 %v1146
      %2872 = vmatmul.mubr.f32.gmra.mxu0 %v1145
      %v2873 = vpop.f32.mrf.mxu0
      %v2874 = vadd.f32 %v1788, %v2873
      %v2875 = vpop.f32.mrf.mxu0
      %v2876 = vadd.f32 %v1792, %v2875
      %2877 = vmatprep.mubr.f32.mxu0 %v1152
      %2878 = vmatmul.mubr.f32.gmra.mxu0 %v1151
      %v2879 = vpop.f32.mrf.mxu0
      %v2880 = vadd.f32 %v1788, %v2879
      %v2881 = vpop.f32.mrf.mxu0
      %v2882 = vadd.f32 %v1792, %v2881
      %2883 = vmatprep.mubr.f32.mxu0 %v1158
      %2884 = vmatmul.mubr.f32.gmra.mxu0 %v1157
      %v2885 = vpop.f32.mrf.mxu0
      %v2886 = vadd.f32 %v1788, %v2885
      %v2887 = vpop.f32.mrf.mxu0
      %v2888 = vadd.f32 %v1792, %v2887
      %2889 = vmatprep.mubr.f32.mxu0 %v1164
      %2890 = vmatmul.mubr.f32.gmra.mxu0 %v1163
      %v2891 = vpop.f32.mrf.mxu0
      %v2892 = vadd.f32 %v1788, %v2891
      %v2893 = vpop.f32.mrf.mxu0
      %v2894 = vadd.f32 %v1792, %v2893
      %2895 = vmatprep.mubr.f32.mxu0 %v1170
      %2896 = vmatmul.mubr.f32.gmra.mxu0 %v1169
      %v2897 = vpop.f32.mrf.mxu0
      %v2898 = vadd.f32 %v1788, %v2897
      %v2899 = vpop.f32.mrf.mxu0
      %v2900 = vadd.f32 %v1792, %v2899
      %2901 = vmatprep.mubr.f32.mxu0 %v1176
      %2902 = vmatmul.mubr.f32.gmra.mxu0 %v1175
      %v2903 = vpop.f32.mrf.mxu0
      %v2904 = vadd.f32 %v1788, %v2903
      %v2905 = vpop.f32.mrf.mxu0
      %v2906 = vadd.f32 %v1792, %v2905
      %2907 = vmatprep.mubr.f32.mxu0 %v1182
      %2908 = vmatmul.mubr.f32.gmra.mxu0 %v1181
      %v2909 = vpop.f32.mrf.mxu0
      %v2910 = vadd.f32 %v1788, %v2909
      %v2911 = vpop.f32.mrf.mxu0
      %v2912 = vadd.f32 %v1792, %v2911
      %2913 = vmatprep.mubr.f32.mxu0 %v1188
      %2914 = vmatmul.mubr.f32.gmra.mxu0 %v1187
      %v2915 = vpop.f32.mrf.mxu0
      %v2916 = vadd.f32 %v1788, %v2915
      %v2917 = vpop.f32.mrf.mxu0
      %v2918 = vadd.f32 %v1792, %v2917
      %2919 = vdwg.mxu0
      %2920 = vmatprep.subr.mxu0 %v1480
      %2921 = vmatpush1.msra.mxu0 %v1479
      %2922 = vmatprep.subr.mxu0 %v1474
      %2923 = vmatpush1.msra.mxu0 %v1473
      %2924 = vmatprep.subr.mxu0 %v1468
      %2925 = vmatpush1.msra.mxu0 %v1467
      %2926 = vmatprep.subr.mxu0 %v1462
      %2927 = vmatpush1.msra.mxu0 %v1461
      %2928 = vmatprep.subr.mxu0 %v1456
      %2929 = vmatpush1.msra.mxu0 %v1455
      %2930 = vmatprep.subr.mxu0 %v1450
      %2931 = vmatpush1.msra.mxu0 %v1449
      %2932 = vmatprep.subr.mxu0 %v1444
      %2933 = vmatpush1.msra.mxu0 %v1443
      %2934 = vmatprep.subr.mxu0 %v1438
      %2935 = vmatpush1.msra.mxu0 %v1437
      %2936 = vmatprep.subr.mxu0 %v1432
      %2937 = vmatpush1.msra.mxu0 %v1431
      %2938 = vmatprep.subr.mxu0 %v1426
      %2939 = vmatpush1.msra.mxu0 %v1425
      %2940 = vmatprep.subr.mxu0 %v1420
      %2941 = vmatpush1.msra.mxu0 %v1419
      %2942 = vmatprep.subr.mxu0 %v1414
      %2943 = vmatpush1.msra.mxu0 %v1413
      %2944 = vmatprep.subr.mxu0 %v1408
      %2945 = vmatpush1.msra.mxu0 %v1407
      %2946 = vmatprep.subr.mxu0 %v1402
      %2947 = vmatpush1.msra.mxu0 %v1401
      %2948 = vmatprep.subr.mxu0 %v1396
      %2949 = vmatpush1.msra.mxu0 %v1395
      %2950 = vmatprep.subr.mxu0 %v1390
      %2951 = vmatpush1.msra.mxu0 %v1389
      %2952 = vmatprep.subr.mxu0 %v1576
      %2953 = vmatpush2.msra.mxu0 %v1575
      %2954 = vmatprep.subr.mxu0 %v1570
      %2955 = vmatpush2.msra.mxu0 %v1569
      %2956 = vmatprep.subr.mxu0 %v1564
      %2957 = vmatpush2.msra.mxu0 %v1563
      %2958 = vmatprep.subr.mxu0 %v1558
      %2959 = vmatpush2.msra.mxu0 %v1557
      %2960 = vmatprep.subr.mxu0 %v1552
      %2961 = vmatpush2.msra.mxu0 %v1551
      %2962 = vmatprep.subr.mxu0 %v1546
      %2963 = vmatpush2.msra.mxu0 %v1545
      %2964 = vmatprep.subr.mxu0 %v1540
      %2965 = vmatpush2.msra.mxu0 %v1539
      %2966 = vmatprep.subr.mxu0 %v1534
      %2967 = vmatpush2.msra.mxu0 %v1533
      %2968 = vmatprep.subr.mxu0 %v1528
      %2969 = vmatpush2.msra.mxu0 %v1527
      %2970 = vmatprep.subr.mxu0 %v1522
      %2971 = vmatpush2.msra.mxu0 %v1521
      %2972 = vmatprep.subr.mxu0 %v1516
      %2973 = vmatpush2.msra.mxu0 %v1515
      %2974 = vmatprep.subr.mxu0 %v1510
      %2975 = vmatpush2.msra.mxu0 %v1509
      %2976 = vmatprep.subr.mxu0 %v1504
      %2977 = vmatpush2.msra.mxu0 %v1503
      %2978 = vmatprep.subr.mxu0 %v1498
      %2979 = vmatpush2.msra.mxu0 %v1497
      %2980 = vmatprep.subr.mxu0 %v1492
      %2981 = vmatpush2.msra.mxu0 %v1491
      %2982 = vmatprep.subr.mxu0 %v1486
      %2983 = vmatpush2.msra.mxu0 %v1485
      %2984 = vmatprep.mubr.f32.mxu0 %v1100
      %2985 = vmatmul.mubr.f32.gmra.mxu0 %v1099
      %v2986 = vpop.f32.mrf.mxu0
      %v2987 = vadd.f32 %v2826, %v2986
      %v2988 = vpop.f32.mrf.mxu0
      %v2989 = vadd.f32 %v2828, %v2988
      %2990 = vmatprep.mubr.f32.mxu0 %v1106
      %2991 = vmatmul.mubr.f32.gmra.mxu0 %v1105
      %v2992 = vpop.f32.mrf.mxu0
      %v2993 = vadd.f32 %v2832, %v2992
      %v2994 = vpop.f32.mrf.mxu0
      %v2995 = vadd.f32 %v2834, %v2994
      %2996 = vmatprep.mubr.f32.mxu0 %v1112
      %2997 = vmatmul.mubr.f32.gmra.mxu0 %v1111
      %v2998 = vpop.f32.mrf.mxu0
      %v2999 = vadd.f32 %v2838, %v2998
      %v3000 = vpop.f32.mrf.mxu0
      %v3001 = vadd.f32 %v2840, %v3000
      %3002 = vmatprep.mubr.f32.mxu0 %v1118
      %3003 = vmatmul.mubr.f32.gmra.mxu0 %v1117
      %v3004 = vpop.f32.mrf.mxu0
      %v3005 = vadd.f32 %v2844, %v3004
      %v3006 = vpop.f32.mrf.mxu0
      %v3007 = vadd.f32 %v2846, %v3006
      %3008 = vmatprep.mubr.f32.mxu0 %v1124
      %3009 = vmatmul.mubr.f32.gmra.mxu0 %v1123
      %v3010 = vpop.f32.mrf.mxu0
      %v3011 = vadd.f32 %v2850, %v3010
      %v3012 = vpop.f32.mrf.mxu0
      %v3013 = vadd.f32 %v2852, %v3012
      %3014 = vmatprep.mubr.f32.mxu0 %v1130
      %3015 = vmatmul.mubr.f32.gmra.mxu0 %v1129
      %v3016 = vpop.f32.mrf.mxu0
      %v3017 = vadd.f32 %v2856, %v3016
      %v3018 = vpop.f32.mrf.mxu0
      %v3019 = vadd.f32 %v2858, %v3018
      %3020 = vmatprep.mubr.f32.mxu0 %v1136
      %3021 = vmatmul.mubr.f32.gmra.mxu0 %v1135
      %v3022 = vpop.f32.mrf.mxu0
      %v3023 = vadd.f32 %v2862, %v3022
      %v3024 = vpop.f32.mrf.mxu0
      %v3025 = vadd.f32 %v2864, %v3024
      %3026 = vmatprep.mubr.f32.mxu0 %v1142
      %3027 = vmatmul.mubr.f32.gmra.mxu0 %v1141
      %v3028 = vpop.f32.mrf.mxu0
      %v3029 = vadd.f32 %v2868, %v3028
      %v3030 = vpop.f32.mrf.mxu0
      %v3031 = vadd.f32 %v2870, %v3030
      %3032 = vmatprep.mubr.f32.mxu0 %v1148
      %3033 = vmatmul.mubr.f32.gmra.mxu0 %v1147
      %v3034 = vpop.f32.mrf.mxu0
      %v3035 = vadd.f32 %v2874, %v3034
      %v3036 = vpop.f32.mrf.mxu0
      %v3037 = vadd.f32 %v2876, %v3036
      %3038 = vmatprep.mubr.f32.mxu0 %v1154
      %3039 = vmatmul.mubr.f32.gmra.mxu0 %v1153
      %v3040 = vpop.f32.mrf.mxu0
      %v3041 = vadd.f32 %v2880, %v3040
      %v3042 = vpop.f32.mrf.mxu0
      %v3043 = vadd.f32 %v2882, %v3042
      %3044 = vmatprep.mubr.f32.mxu0 %v1160
      %3045 = vmatmul.mubr.f32.gmra.mxu0 %v1159
      %v3046 = vpop.f32.mrf.mxu0
      %v3047 = vadd.f32 %v2886, %v3046
      %v3048 = vpop.f32.mrf.mxu0
      %v3049 = vadd.f32 %v2888, %v3048
      %3050 = vmatprep.mubr.f32.mxu0 %v1166
      %3051 = vmatmul.mubr.f32.gmra.mxu0 %v1165
      %v3052 = vpop.f32.mrf.mxu0
      %v3053 = vadd.f32 %v2892, %v3052
      %v3054 = vpop.f32.mrf.mxu0
      %v3055 = vadd.f32 %v2894, %v3054
      %3056 = vmatprep.mubr.f32.mxu0 %v1172
      %3057 = vmatmul.mubr.f32.gmra.mxu0 %v1171
      %v3058 = vpop.f32.mrf.mxu0
      %v3059 = vadd.f32 %v2898, %v3058
      %v3060 = vpop.f32.mrf.mxu0
      %v3061 = vadd.f32 %v2900, %v3060
      %3062 = vmatprep.mubr.f32.mxu0 %v1178
      %3063 = vmatmul.mubr.f32.gmra.mxu0 %v1177
      %v3064 = vpop.f32.mrf.mxu0
      %v3065 = vadd.f32 %v2904, %v3064
      %v3066 = vpop.f32.mrf.mxu0
      %v3067 = vadd.f32 %v2906, %v3066
      %3068 = vmatprep.mubr.f32.mxu0 %v1184
      %3069 = vmatmul.mubr.f32.gmra.mxu0 %v1183
      %v3070 = vpop.f32.mrf.mxu0
      %v3071 = vadd.f32 %v2910, %v3070
      %v3072 = vpop.f32.mrf.mxu0
      %v3073 = vadd.f32 %v2912, %v3072
      %3074 = vmatprep.mubr.f32.mxu0 %v1190
      %3075 = vmatmul.mubr.f32.gmra.mxu0 %v1189
      %v3076 = vpop.f32.mrf.mxu0
      %v3077 = vadd.f32 %v2916, %v3076
      %v3078 = vpop.f32.mrf.mxu0
      %v3079 = vadd.f32 %v2918, %v3078
      %3080 = vdwg.mxu0
      %3081 = vmatprep.subr.mxu0 %v1672
      %3082 = vmatpush1.msra.mxu0 %v1671
      %3083 = vmatprep.subr.mxu0 %v1666
      %3084 = vmatpush1.msra.mxu0 %v1665
      %3085 = vmatprep.subr.mxu0 %v1660
      %3086 = vmatpush1.msra.mxu0 %v1659
      %3087 = vmatprep.subr.mxu0 %v1654
      %3088 = vmatpush1.msra.mxu0 %v1653
      %3089 = vmatprep.subr.mxu0 %v1648
      %3090 = vmatpush1.msra.mxu0 %v1647
      %3091 = vmatprep.subr.mxu0 %v1642
      %3092 = vmatpush1.msra.mxu0 %v1641
      %3093 = vmatprep.subr.mxu0 %v1636
      %3094 = vmatpush1.msra.mxu0 %v1635
      %3095 = vmatprep.subr.mxu0 %v1630
      %3096 = vmatpush1.msra.mxu0 %v1629
      %3097 = vmatprep.subr.mxu0 %v1624
      %3098 = vmatpush1.msra.mxu0 %v1623
      %3099 = vmatprep.subr.mxu0 %v1618
      %3100 = vmatpush1.msra.mxu0 %v1617
      %3101 = vmatprep.subr.mxu0 %v1612
      %3102 = vmatpush1.msra.mxu0 %v1611
      %3103 = vmatprep.subr.mxu0 %v1606
      %3104 = vmatpush1.msra.mxu0 %v1605
      %3105 = vmatprep.subr.mxu0 %v1600
      %3106 = vmatpush1.msra.mxu0 %v1599
      %3107 = vmatprep.subr.mxu0 %v1594
      %3108 = vmatpush1.msra.mxu0 %v1593
      %3109 = vmatprep.subr.mxu0 %v1588
      %3110 = vmatpush1.msra.mxu0 %v1587
      %3111 = vmatprep.subr.mxu0 %v1582
      %3112 = vmatpush1.msra.mxu0 %v1581
      %3113 = vmatprep.subr.mxu0 %v1768
      %3114 = vmatpush2.msra.mxu0 %v1767
      %3115 = vmatprep.subr.mxu0 %v1762
      %3116 = vmatpush2.msra.mxu0 %v1761
      %3117 = vmatprep.subr.mxu0 %v1756
      %3118 = vmatpush2.msra.mxu0 %v1755
      %3119 = vmatprep.subr.mxu0 %v1750
      %3120 = vmatpush2.msra.mxu0 %v1749
      %3121 = vmatprep.subr.mxu0 %v1744
      %3122 = vmatpush2.msra.mxu0 %v1743
      %3123 = vmatprep.subr.mxu0 %v1738
      %3124 = vmatpush2.msra.mxu0 %v1737
      %3125 = vmatprep.subr.mxu0 %v1732
      %3126 = vmatpush2.msra.mxu0 %v1731
      %3127 = vmatprep.subr.mxu0 %v1726
      %3128 = vmatpush2.msra.mxu0 %v1725
      %3129 = vmatprep.subr.mxu0 %v1720
      %3130 = vmatpush2.msra.mxu0 %v1719
      %3131 = vmatprep.subr.mxu0 %v1714
      %3132 = vmatpush2.msra.mxu0 %v1713
      %3133 = vmatprep.subr.mxu0 %v1708
      %3134 = vmatpush2.msra.mxu0 %v1707
      %3135 = vmatprep.subr.mxu0 %v1702
      %3136 = vmatpush2.msra.mxu0 %v1701
      %3137 = vmatprep.subr.mxu0 %v1696
      %3138 = vmatpush2.msra.mxu0 %v1695
      %3139 = vmatprep.subr.mxu0 %v1690
      %3140 = vmatpush2.msra.mxu0 %v1689
      %3141 = vmatprep.subr.mxu0 %v1684
      %3142 = vmatpush2.msra.mxu0 %v1683
      %3143 = vmatprep.subr.mxu0 %v1678
      %3144 = vmatpush2.msra.mxu0 %v1677
      %3145 = vmatprep.mubr.f32.mxu0 %v1102
      %3146 = vmatmul.mubr.f32.gmra.mxu0 %v1101
      %v3147 = vpop.f32.mrf.mxu0
      %v3148 = vadd.f32 %v2987, %v3147
      %v3149 = vpop.f32.mrf.mxu0
      %v3150 = vadd.f32 %v2989, %v3149
      %3151 = vmatprep.mubr.f32.mxu0 %v1108
      %3152 = vmatmul.mubr.f32.gmra.mxu0 %v1107
      %v3153 = vpop.f32.mrf.mxu0
      %v3154 = vadd.f32 %v2993, %v3153
      %v3155 = vpop.f32.mrf.mxu0
      %v3156 = vadd.f32 %v2995, %v3155
      %3157 = vmatprep.mubr.f32.mxu0 %v1114
      %3158 = vmatmul.mubr.f32.gmra.mxu0 %v1113
      %v3159 = vpop.f32.mrf.mxu0
      %v3160 = vadd.f32 %v2999, %v3159
      %v3161 = vpop.f32.mrf.mxu0
      %v3162 = vadd.f32 %v3001, %v3161
      %3163 = vmatprep.mubr.f32.mxu0 %v1120
      %3164 = vmatmul.mubr.f32.gmra.mxu0 %v1119
      %v3165 = vpop.f32.mrf.mxu0
      %v3166 = vadd.f32 %v3005, %v3165
      %v3167 = vpop.f32.mrf.mxu0
      %v3168 = vadd.f32 %v3007, %v3167
      %3169 = vmatprep.mubr.f32.mxu0 %v1126
      %3170 = vmatmul.mubr.f32.gmra.mxu0 %v1125
      %v3171 = vpop.f32.mrf.mxu0
      %v3172 = vadd.f32 %v3011, %v3171
      %v3173 = vpop.f32.mrf.mxu0
      %v3174 = vadd.f32 %v3013, %v3173
      %3175 = vmatprep.mubr.f32.mxu0 %v1132
      %3176 = vmatmul.mubr.f32.gmra.mxu0 %v1131
      %v3177 = vpop.f32.mrf.mxu0
      %v3178 = vadd.f32 %v3017, %v3177
      %v3179 = vpop.f32.mrf.mxu0
      %v3180 = vadd.f32 %v3019, %v3179
      %3181 = vmatprep.mubr.f32.mxu0 %v1138
      %3182 = vmatmul.mubr.f32.gmra.mxu0 %v1137
      %v3183 = vpop.f32.mrf.mxu0
      %v3184 = vadd.f32 %v3023, %v3183
      %v3185 = vpop.f32.mrf.mxu0
      %v3186 = vadd.f32 %v3025, %v3185
      %3187 = vmatprep.mubr.f32.mxu0 %v1144
      %3188 = vmatmul.mubr.f32.gmra.mxu0 %v1143
      %v3189 = vpop.f32.mrf.mxu0
      %v3190 = vadd.f32 %v3029, %v3189
      %v3191 = vpop.f32.mrf.mxu0
      %v3192 = vadd.f32 %v3031, %v3191
      %3193 = vmatprep.mubr.f32.mxu0 %v1150
      %3194 = vmatmul.mubr.f32.gmra.mxu0 %v1149
      %v3195 = vpop.f32.mrf.mxu0
      %v3196 = vadd.f32 %v3035, %v3195
      %v3197 = vpop.f32.mrf.mxu0
      %v3198 = vadd.f32 %v3037, %v3197
      %3199 = vmatprep.mubr.f32.mxu0 %v1156
      %3200 = vmatmul.mubr.f32.gmra.mxu0 %v1155
      %v3201 = vpop.f32.mrf.mxu0
      %v3202 = vadd.f32 %v3041, %v3201
      %v3203 = vpop.f32.mrf.mxu0
      %v3204 = vadd.f32 %v3043, %v3203
      %3205 = vmatprep.mubr.f32.mxu0 %v1162
      %3206 = vmatmul.mubr.f32.gmra.mxu0 %v1161
      %v3207 = vpop.f32.mrf.mxu0
      %v3208 = vadd.f32 %v3047, %v3207
      %v3209 = vpop.f32.mrf.mxu0
      %v3210 = vadd.f32 %v3049, %v3209
      %3211 = vmatprep.mubr.f32.mxu0 %v1168
      %3212 = vmatmul.mubr.f32.gmra.mxu0 %v1167
      %v3213 = vpop.f32.mrf.mxu0
      %v3214 = vadd.f32 %v3053, %v3213
      %v3215 = vpop.f32.mrf.mxu0
      %v3216 = vadd.f32 %v3055, %v3215
      %3217 = vmatprep.mubr.f32.mxu0 %v1174
      %3218 = vmatmul.mubr.f32.gmra.mxu0 %v1173
      %v3219 = vpop.f32.mrf.mxu0
      %v3220 = vadd.f32 %v3059, %v3219
      %v3221 = vpop.f32.mrf.mxu0
      %v3222 = vadd.f32 %v3061, %v3221
      %3223 = vmatprep.mubr.f32.mxu0 %v1180
      %3224 = vmatmul.mubr.f32.gmra.mxu0 %v1179
      %v3225 = vpop.f32.mrf.mxu0
      %v3226 = vadd.f32 %v3065, %v3225
      %v3227 = vpop.f32.mrf.mxu0
      %v3228 = vadd.f32 %v3067, %v3227
      %3229 = vmatprep.mubr.f32.mxu0 %v1186
      %3230 = vmatmul.mubr.f32.gmra.mxu0 %v1185
      %v3231 = vpop.f32.mrf.mxu0
      %v3232 = vadd.f32 %v3071, %v3231
      %v3233 = vpop.f32.mrf.mxu0
      %v3234 = vadd.f32 %v3073, %v3233
      %3235 = vmatprep.mubr.f32.mxu0 %v1192
      %3236 = vmatmul.mubr.f32.gmra.mxu0 %v1191
      %v3237 = vpop.f32.mrf.mxu0
      %v3238 = vadd.f32 %v3077, %v3237
      %v3239 = vpop.f32.mrf.mxu0
      %v3240 = vadd.f32 %v3079, %v3239
      %3241 = vdwg.mxu0
      %v3242 = vld [vmem:[%s6] sm:$0xff]
      %v3243 = vld [vmem:[%s6 + $0x8] sm:$0xff]
      %v3244 = vld [vmem:[%s6 + $0x10] sm:$0xff]
      %v3245 = vld [vmem:[%s6 + $0x18] sm:$0xff]
      %v3246 = vld [vmem:[%s6 + $0x20] sm:$0xff]
      %v3247 = vld [vmem:[%s6 + $0x30] sm:$0xff]
      %v3248 = vld [vmem:[%s6 + $0x40] sm:$0x1]
      %v3249 = vld [vmem:[%s6 + $0x48] sm:$0x1]
      %v3250 = vld [vmem:[%s7] sm:$0xff]
      %v3251 = vld [vmem:[%s7 + $0x10] sm:$0xff]
      %v3252 = vld [vmem:[%s7 + $0x20] sm:$0xff]
      %v3253 = vld [vmem:[%s7 + $0x30] sm:$0xff]
      %v3254 = vld [vmem:[%s7 + $0x40] sm:$0xff]
      %v3255 = vld [vmem:[%s7 + $0x50] sm:$0xff]
      %v3256 = vld [vmem:[%s7 + $0x60] sm:$0xff]
      %v3257 = vld [vmem:[%s7 + $0x70] sm:$0xff]
      %v3258 = vld [vmem:[%s7 + $0x80] sm:$0xff]
      %v3259 = vld [vmem:[%s7 + $0x90] sm:$0xff]
      %v3260 = vld [vmem:[%s7 + $0xa0] sm:$0xff]
      %v3261 = vld [vmem:[%s7 + $0xb0] sm:$0xff]
      %v3262 = vld [vmem:[%s7 + $0xc0] sm:$0xff]
      %v3263 = vld [vmem:[%s7 + $0xd0] sm:$0xff]
      %v3264 = vld [vmem:[%s7 + $0xe0] sm:$0xff]
      %v3265 = vld [vmem:[%s7 + $0xf0] sm:$0xff]
      %v3266 = vld [vmem:[%s7 + $0x100] sm:$0xff]
      %v3267 = vld [vmem:[%s7 + $0x110] sm:$0xff]
      %v3268 = vld [vmem:[%s7 + $0x120] sm:$0xff]
      %v3269 = vld [vmem:[%s7 + $0x130] sm:$0xff]
      %v3270 = vld [vmem:[%s7 + $0x140] sm:$0xff]
      %v3271 = vld [vmem:[%s7 + $0x150] sm:$0xff]
      %v3272 = vld [vmem:[%s7 + $0x160] sm:$0xff]
      %v3273 = vld [vmem:[%s7 + $0x170] sm:$0xff]
      %v3274 = vld [vmem:[%s7 + $0x180] sm:$0xff]
      %v3275 = vld [vmem:[%s7 + $0x190] sm:$0xff]
      %v3276 = vld [vmem:[%s7 + $0x1a0] sm:$0xff]
      %v3277 = vld [vmem:[%s7 + $0x1b0] sm:$0xff]
      %v3278 = vld [vmem:[%s7 + $0x1c0] sm:$0xff]
      %v3279 = vld [vmem:[%s7 + $0x1d0] sm:$0xff]
      %v3280 = vld [vmem:[%s7 + $0x1e0] sm:$0xff]
      %v3281 = vld [vmem:[%s7 + $0x1f0] sm:$0xff]
      %v3282 = vld [vmem:[%s7 + $0x200] sm:$0xff]
      %v3283 = vld [vmem:[%s7 + $0x210] sm:$0xff]
      %v3284 = vld [vmem:[%s7 + $0x220] sm:$0xff]
      %v3285 = vld [vmem:[%s7 + $0x230] sm:$0xff]
      %v3286 = vld [vmem:[%s7 + $0x240] sm:$0xff]
      %v3287 = vld [vmem:[%s7 + $0x250] sm:$0xff]
      %v3288 = vld [vmem:[%s7 + $0x260] sm:$0xff]
      %v3289 = vld [vmem:[%s7 + $0x270] sm:$0xff]
      %v3290 = vld [vmem:[%s7 + $0x280] sm:$0xff]
      %v3291 = vld [vmem:[%s7 + $0x290] sm:$0xff]
      %v3292 = vld [vmem:[%s7 + $0x2a0] sm:$0xff]
      %v3293 = vld [vmem:[%s7 + $0x2b0] sm:$0xff]
      %v3294 = vld [vmem:[%s7 + $0x2c0] sm:$0xff]
      %v3295 = vld [vmem:[%s7 + $0x2d0] sm:$0xff]
      %v3296 = vld [vmem:[%s7 + $0x2e0] sm:$0xff]
      %v3297 = vld [vmem:[%s7 + $0x2f0] sm:$0xff]
      %v3298 = vld [vmem:[%s7 + $0x300] sm:$0xff]
      %v3299 = vld [vmem:[%s7 + $0x310] sm:$0xff]
      %v3300 = vld [vmem:[%s7 + $0x320] sm:$0xff]
      %v3301 = vld [vmem:[%s7 + $0x330] sm:$0xff]
      %v3302 = vld [vmem:[%s7 + $0x340] sm:$0xff]
      %v3303 = vld [vmem:[%s7 + $0x350] sm:$0xff]
      %v3304 = vld [vmem:[%s7 + $0x360] sm:$0xff]
      %v3305 = vld [vmem:[%s7 + $0x370] sm:$0xff]
      %v3306 = vld [vmem:[%s7 + $0x380] sm:$0xff]
      %v3307 = vld [vmem:[%s7 + $0x390] sm:$0xff]
      %v3308 = vld [vmem:[%s7 + $0x3a0] sm:$0xff]
      %v3309 = vld [vmem:[%s7 + $0x3b0] sm:$0xff]
      %v3310 = vld [vmem:[%s7 + $0x3c0] sm:$0xff]
      %v3311 = vld [vmem:[%s7 + $0x3d0] sm:$0xff]
      %v3312 = vld [vmem:[%s7 + $0x3e0] sm:$0xff]
      %v3313 = vld [vmem:[%s7 + $0x3f0] sm:$0xff]
      %v3314 = vld [vmem:[%s7 + $0x400] sm:$0xff]
      %v3315 = vld [vmem:[%s7 + $0x410] sm:$0xff]
      %v3316 = vld [vmem:[%s7 + $0x420] sm:$0xff]
      %v3317 = vld [vmem:[%s7 + $0x430] sm:$0xff]
      %v3318 = vld [vmem:[%s7 + $0x440] sm:$0xff]
      %v3319 = vld [vmem:[%s7 + $0x450] sm:$0xff]
      %v3320 = vld [vmem:[%s7 + $0x460] sm:$0xff]
      %v3321 = vld [vmem:[%s7 + $0x470] sm:$0xff]
      %v3322 = vld [vmem:[%s7 + $0x480] sm:$0xff]
      %v3323 = vld [vmem:[%s7 + $0x490] sm:$0xff]
      %v3324 = vld [vmem:[%s7 + $0x4a0] sm:$0xff]
      %v3325 = vld [vmem:[%s7 + $0x4b0] sm:$0xff]
      %v3326 = vld [vmem:[%s7 + $0x4c0] sm:$0xff]
      %v3327 = vld [vmem:[%s7 + $0x4d0] sm:$0xff]
      %v3328 = vld [vmem:[%s7 + $0x4e0] sm:$0xff]
      %v3329 = vld [vmem:[%s7 + $0x4f0] sm:$0xff]
      %v3330 = vld [vmem:[%s7 + $0x500] sm:$0xff]
      %v3331 = vld [vmem:[%s7 + $0x508] sm:$0xff]
      %v3332 = vld [vmem:[%s7 + $0x510] sm:$0xff]
      %v3333 = vld [vmem:[%s7 + $0x518] sm:$0xff]
      %v3334 = vld [vmem:[%s7 + $0x520] sm:$0xff]
      %v3335 = vld [vmem:[%s7 + $0x528] sm:$0xff]
      %v3336 = vld [vmem:[%s7 + $0x530] sm:$0xff]
      %v3337 = vld [vmem:[%s7 + $0x538] sm:$0xff]
      %v3338 = vld [vmem:[%s7 + $0x540] sm:$0xff]
      %v3339 = vld [vmem:[%s7 + $0x548] sm:$0xff]
      %v3340 = vld [vmem:[%s7 + $0x550] sm:$0xff]
      %v3341 = vld [vmem:[%s7 + $0x558] sm:$0xff]
      %v3342 = vld [vmem:[%s7 + $0x560] sm:$0xff]
      %v3343 = vld [vmem:[%s7 + $0x568] sm:$0xff]
      %v3344 = vld [vmem:[%s7 + $0x570] sm:$0xff]
      %v3345 = vld [vmem:[%s7 + $0x578] sm:$0xff]
      %v3346 = vld [vmem:[%s7 + $0x580] sm:$0xff]
      %v3347 = vld [vmem:[%s7 + $0x588] sm:$0xff]
      %v3348 = vld [vmem:[%s7 + $0x590] sm:$0xff]
      %v3349 = vld [vmem:[%s7 + $0x598] sm:$0xff]
      %v3350 = vld [vmem:[%s7 + $0x5a0] sm:$0xff]
      %v3351 = vld [vmem:[%s7 + $0x5a8] sm:$0xff]
      %v3352 = vld [vmem:[%s7 + $0x5b0] sm:$0xff]
      %v3353 = vld [vmem:[%s7 + $0x5b8] sm:$0xff]
      %v3354 = vld [vmem:[%s7 + $0x5c0] sm:$0xff]
      %v3355 = vld [vmem:[%s7 + $0x5c8] sm:$0xff]
      %v3356 = vld [vmem:[%s7 + $0x5d0] sm:$0xff]
      %v3357 = vld [vmem:[%s7 + $0x5d8] sm:$0xff]
      %v3358 = vld [vmem:[%s7 + $0x5e0] sm:$0xff]
      %v3359 = vld [vmem:[%s7 + $0x5e8] sm:$0xff]
      %v3360 = vld [vmem:[%s7 + $0x5f0] sm:$0xff]
      %v3361 = vld [vmem:[%s7 + $0x5f8] sm:$0xff]
      %v3362 = vmul.u32 %v494, 32
      %vm3363 = vcmp.ge.s32.totalorder %v396, %v3362
      %v3364 = vadd.s32 %v494, 1
      %v3365 = vmul.u32 %v3364, 32
      %vm3366 = vcmp.lt.s32.totalorder %v396, %v3365
      %vm3367 = vmand %vm3363, %vm3366
      %v3368 = vsel %vm3367, 1, 0
      %v3369 = vcvt.s32.f32 %v3368
      %vm3370 = vcmask 130048
      %v3372 = vsel %vm3370, %v477, 0
      %v3375 = vsel %vm3370, %v478, 0
      %v3378 = vsel %vm3370, %v479, 0
      %v3381 = vsel %vm3370, %v480, 0
      %v3384 = vsel %vm3370, %v481, 0
      %v3387 = vsel %vm3370, %v482, 0
      %v3390 = vsel %vm3370, %v483, 0
      %v3393 = vsel %vm3370, %v484, 0
      %v3396 = vsel %vm3370, %v485, 0
      %v3399 = vsel %vm3370, %v486, 0
      %v3402 = vsel %vm3370, %v487, 0
      %v3405 = vsel %vm3370, %v488, 0
      %v3408 = vsel %vm3370, %v489, 0
      %v3411 = vsel %vm3370, %v490, 0
      %v3414 = vsel %vm3370, %v491, 0
      %v3417 = vsel %vm3370, %v492, 0
      %3419 = vmatprep.subr.mxu0 0.0
      %3420 = vmatpush1.msra.mxu0 0.0
      %3421 = vmatprep.subr.mxu0 0.0
      %3422 = vmatpush1.msra.mxu0 0.0
      %3423 = vmatprep.subr.mxu0 0.0
      %3424 = vmatpush1.msra.mxu0 0.0
      %3425 = vmatprep.subr.mxu0 0.0
      %3426 = vmatpush1.msra.mxu0 0.0
      %3427 = vmatprep.subr.mxu0 0.0
      %3428 = vmatpush1.msra.mxu0 0.0
      %3429 = vmatprep.subr.mxu0 0.0
      %3430 = vmatpush1.msra.mxu0 0.0
      %3431 = vmatprep.subr.mxu0 0.0
      %3432 = vmatpush1.msra.mxu0 0.0
      %3433 = vmatprep.subr.mxu0 0.0
      %3434 = vmatpush1.msra.mxu0 0.0
      %3435 = vmatprep.subr.mxu0 0.0
      %3436 = vmatpush1.msra.mxu0 0.0
      %3437 = vmatprep.subr.mxu0 0.0
      %3438 = vmatpush1.msra.mxu0 0.0
      %3439 = vmatprep.subr.mxu0 0.0
      %3440 = vmatpush1.msra.mxu0 0.0
      %3441 = vmatprep.subr.mxu0 0.0
      %3442 = vmatpush1.msra.mxu0 0.0
      %3443 = vmatprep.subr.mxu0 0.0
      %3444 = vmatpush1.msra.mxu0 0.0
      %3445 = vmatprep.subr.mxu0 0.0
      %3446 = vmatpush1.msra.mxu0 0.0
      %3447 = vmatprep.subr.mxu0 0.0
      %3448 = vmatpush1.msra.mxu0 %v361
      %3449 = vmatprep.subr.mxu0 0.0
      %3450 = vmatpush1.msra.mxu0 %v360
      %3451 = vmatprep.subr.mxu0 0.0
      %3452 = vmatpush2.msra.mxu0 0.0
      %3453 = vmatprep.subr.mxu0 0.0
      %3454 = vmatpush2.msra.mxu0 0.0
      %3455 = vmatprep.subr.mxu0 0.0
      %3456 = vmatpush2.msra.mxu0 0.0
      %3457 = vmatprep.subr.mxu0 0.0
      %3458 = vmatpush2.msra.mxu0 0.0
      %3459 = vmatprep.subr.mxu0 0.0
      %3460 = vmatpush2.msra.mxu0 0.0
      %3461 = vmatprep.subr.mxu0 0.0
      %3462 = vmatpush2.msra.mxu0 0.0
      %3463 = vmatprep.subr.mxu0 0.0
      %3464 = vmatpush2.msra.mxu0 0.0
      %3465 = vmatprep.subr.mxu0 0.0
      %3466 = vmatpush2.msra.mxu0 0.0
      %3467 = vmatprep.subr.mxu0 0.0
      %3468 = vmatpush2.msra.mxu0 0.0
      %3469 = vmatprep.subr.mxu0 0.0
      %3470 = vmatpush2.msra.mxu0 0.0
      %3471 = vmatprep.subr.mxu0 0.0
      %3472 = vmatpush2.msra.mxu0 0.0
      %3473 = vmatprep.subr.mxu0 0.0
      %3474 = vmatpush2.msra.mxu0 0.0
      %3475 = vmatprep.subr.mxu0 0.0
      %3476 = vmatpush2.msra.mxu0 0.0
      %3477 = vmatprep.subr.mxu0 0.0
      %3478 = vmatpush2.msra.mxu0 0.0
      %3479 = vmatprep.subr.mxu0 0.0
      %3480 = vmatpush2.msra.mxu0 0.0
      %3481 = vmatprep.subr.mxu0 0.0
      %3482 = vmatpush2.msra.mxu0 0.0
      %3483 = vmatprep.mubr.f32.mxu0 0.0
      %3484 = vmatmul.mubr.f32.gmra.mxu0 %v3372
      %v3485 = vpop.f32.mrf.mxu0
      %v3486 = vadd.f32 0.0, %v3485
      %v3487 = vpop.f32.mrf.mxu0
      %3488 = vmatprep.mubr.f32.mxu0 0.0
      %3489 = vmatmul.mubr.f32.gmra.mxu0 %v3375
      %v3490 = vpop.f32.mrf.mxu0
      %v3491 = vadd.f32 0.0, %v3490
      %v3492 = vpop.f32.mrf.mxu0
      %3493 = vmatprep.mubr.f32.mxu0 0.0
      %3494 = vmatmul.mubr.f32.gmra.mxu0 %v3378
      %v3495 = vpop.f32.mrf.mxu0
      %v3496 = vadd.f32 0.0, %v3495
      %v3497 = vpop.f32.mrf.mxu0
      %3498 = vmatprep.mubr.f32.mxu0 0.0
      %3499 = vmatmul.mubr.f32.gmra.mxu0 %v3381
      %v3500 = vpop.f32.mrf.mxu0
      %v3501 = vadd.f32 0.0, %v3500
      %v3502 = vpop.f32.mrf.mxu0
      %3503 = vmatprep.mubr.f32.mxu0 0.0
      %3504 = vmatmul.mubr.f32.gmra.mxu0 %v3384
      %v3505 = vpop.f32.mrf.mxu0
      %v3506 = vadd.f32 0.0, %v3505
      %v3507 = vpop.f32.mrf.mxu0
      %3508 = vmatprep.mubr.f32.mxu0 0.0
      %3509 = vmatmul.mubr.f32.gmra.mxu0 %v3387
      %v3510 = vpop.f32.mrf.mxu0
      %v3511 = vadd.f32 0.0, %v3510
      %v3512 = vpop.f32.mrf.mxu0
      %3513 = vmatprep.mubr.f32.mxu0 0.0
      %3514 = vmatmul.mubr.f32.gmra.mxu0 %v3390
      %v3515 = vpop.f32.mrf.mxu0
      %v3516 = vadd.f32 0.0, %v3515
      %v3517 = vpop.f32.mrf.mxu0
      %3518 = vmatprep.mubr.f32.mxu0 0.0
      %3519 = vmatmul.mubr.f32.gmra.mxu0 %v3393
      %v3520 = vpop.f32.mrf.mxu0
      %v3521 = vadd.f32 0.0, %v3520
      %v3522 = vpop.f32.mrf.mxu0
      %3523 = vmatprep.mubr.f32.mxu0 0.0
      %3524 = vmatmul.mubr.f32.gmra.mxu0 %v3396
      %v3525 = vpop.f32.mrf.mxu0
      %v3526 = vadd.f32 0.0, %v3525
      %v3527 = vpop.f32.mrf.mxu0
      %3528 = vmatprep.mubr.f32.mxu0 0.0
      %3529 = vmatmul.mubr.f32.gmra.mxu0 %v3399
      %v3530 = vpop.f32.mrf.mxu0
      %v3531 = vadd.f32 0.0, %v3530
      %v3532 = vpop.f32.mrf.mxu0
      %3533 = vmatprep.mubr.f32.mxu0 0.0
      %3534 = vmatmul.mubr.f32.gmra.mxu0 %v3402
      %v3535 = vpop.f32.mrf.mxu0
      %v3536 = vadd.f32 0.0, %v3535
      %v3537 = vpop.f32.mrf.mxu0
      %3538 = vmatprep.mubr.f32.mxu0 0.0
      %3539 = vmatmul.mubr.f32.gmra.mxu0 %v3405
      %v3540 = vpop.f32.mrf.mxu0
      %v3541 = vadd.f32 0.0, %v3540
      %v3542 = vpop.f32.mrf.mxu0
      %3543 = vmatprep.mubr.f32.mxu0 0.0
      %3544 = vmatmul.mubr.f32.gmra.mxu0 %v3408
      %v3545 = vpop.f32.mrf.mxu0
      %v3546 = vadd.f32 0.0, %v3545
      %v3547 = vpop.f32.mrf.mxu0
      %3548 = vmatprep.mubr.f32.mxu0 0.0
      %3549 = vmatmul.mubr.f32.gmra.mxu0 %v3411
      %v3550 = vpop.f32.mrf.mxu0
      %v3551 = vadd.f32 0.0, %v3550
      %v3552 = vpop.f32.mrf.mxu0
      %3553 = vmatprep.mubr.f32.mxu0 0.0
      %3554 = vmatmul.mubr.f32.gmra.mxu0 %v3414
      %v3555 = vpop.f32.mrf.mxu0
      %v3556 = vadd.f32 0.0, %v3555
      %v3557 = vpop.f32.mrf.mxu0
      %3558 = vmatprep.mubr.f32.mxu0 0.0
      %3559 = vmatmul.mubr.f32.gmra.mxu0 %v3417
      %v3560 = vpop.f32.mrf.mxu0
      %v3561 = vadd.f32 0.0, %v3560
      %v3562 = vpop.f32.mrf.mxu0
      %3563 = vdwg.mxu0
      %vm3564 = vcmask 31744
      %v3566 = vsel %vm3564, %v3486, 0
      %v3569 = vsel %vm3564, %v3491, 0
      %v3572 = vsel %vm3564, %v3496, 0
      %v3575 = vsel %vm3564, %v3501, 0
      %v3578 = vsel %vm3564, %v3506, 0
      %v3581 = vsel %vm3564, %v3511, 0
      %v3584 = vsel %vm3564, %v3516, 0
      %v3587 = vsel %vm3564, %v3521, 0
      %v3590 = vsel %vm3564, %v3526, 0
      %v3593 = vsel %vm3564, %v3531, 0
      %v3596 = vsel %vm3564, %v3536, 0
      %v3599 = vsel %vm3564, %v3541, 0
      %v3602 = vsel %vm3564, %v3546, 0
      %v3605 = vsel %vm3564, %v3551, 0
      %v3608 = vsel %vm3564, %v3556, 0
      %v3611 = vsel %vm3564, %v3561, 0
      %vm3613 = vcmask 1043456
      %v3615 = vsel %vm3613, %v3369, 0
      %3617 = vmatprep.subr.mxu0 0.0
      %3618 = vmatpush1.msra.mxu0 0.0
      %3619 = vmatprep.subr.mxu0 0.0
      %3620 = vmatpush1.msra.mxu0 0.0
      %3621 = vmatprep.subr.mxu0 0.0
      %3622 = vmatpush1.msra.mxu0 0.0
      %3623 = vmatprep.subr.mxu0 0.0
      %3624 = vmatpush1.msra.mxu0 0.0
      %3625 = vmatprep.subr.mxu0 0.0
      %3626 = vmatpush1.msra.mxu0 0.0
      %3627 = vmatprep.subr.mxu0 0.0
      %3628 = vmatpush1.msra.mxu0 0.0
      %3629 = vmatprep.subr.mxu0 0.0
      %3630 = vmatpush1.msra.mxu0 0.0
      %3631 = vmatprep.subr.mxu0 0.0
      %3632 = vmatpush1.msra.mxu0 0.0
      %3633 = vmatprep.subr.mxu0 0.0
      %3634 = vmatpush1.msra.mxu0 0.0
      %3635 = vmatprep.subr.mxu0 0.0
      %3636 = vmatpush1.msra.mxu0 0.0
      %3637 = vmatprep.subr.mxu0 0.0
      %3638 = vmatpush1.msra.mxu0 0.0
      %3639 = vmatprep.subr.mxu0 0.0
      %3640 = vmatpush1.msra.mxu0 0.0
      %3641 = vmatprep.subr.mxu0 0.0
      %3642 = vmatpush1.msra.mxu0 0.0
      %3643 = vmatprep.subr.mxu0 0.0
      %3644 = vmatpush1.msra.mxu0 0.0
      %3645 = vmatprep.subr.mxu0 0.0
      %3646 = vmatpush1.msra.mxu0 0.0
      %3647 = vmatprep.subr.mxu0 0.0
      %3648 = vmatpush1.msra.mxu0 %v3615
      %3649 = vmatprep.subr.mxu0 0.0
      %3650 = vmatpush2.msra.mxu0 0.0
      %3651 = vmatprep.subr.mxu0 0.0
      %3652 = vmatpush2.msra.mxu0 0.0
      %3653 = vmatprep.subr.mxu0 0.0
      %3654 = vmatpush2.msra.mxu0 0.0
      %3655 = vmatprep.subr.mxu0 0.0
      %3656 = vmatpush2.msra.mxu0 0.0
      %3657 = vmatprep.subr.mxu0 0.0
      %3658 = vmatpush2.msra.mxu0 0.0
      %3659 = vmatprep.subr.mxu0 0.0
      %3660 = vmatpush2.msra.mxu0 0.0
      %3661 = vmatprep.subr.mxu0 0.0
      %3662 = vmatpush2.msra.mxu0 0.0
      %3663 = vmatprep.subr.mxu0 0.0
      %3664 = vmatpush2.msra.mxu0 0.0
      %3665 = vmatprep.subr.mxu0 0.0
      %3666 = vmatpush2.msra.mxu0 0.0
      %3667 = vmatprep.subr.mxu0 0.0
      %3668 = vmatpush2.msra.mxu0 0.0
      %3669 = vmatprep.subr.mxu0 0.0
      %3670 = vmatpush2.msra.mxu0 0.0
      %3671 = vmatprep.subr.mxu0 0.0
      %3672 = vmatpush2.msra.mxu0 0.0
      %3673 = vmatprep.subr.mxu0 0.0
      %3674 = vmatpush2.msra.mxu0 0.0
      %3675 = vmatprep.subr.mxu0 0.0
      %3676 = vmatpush2.msra.mxu0 0.0
      %3677 = vmatprep.subr.mxu0 0.0
      %3678 = vmatpush2.msra.mxu0 0.0
      %3679 = vmatprep.subr.mxu0 0.0
      %3680 = vmatpush2.msra.mxu0 0.0
      %3681 = vmatprep.mubr.f32.mxu0 0.0
      %3682 = vmatmul.mubr.f32.gmra.mxu0 %v3566
      %v3683 = vpop.f32.mrf.mxu0
      %v3684 = vadd.f32 0.0, %v3683
      %v3685 = vpop.f32.mrf.mxu0
      %3686 = vmatprep.mubr.f32.mxu0 0.0
      %3687 = vmatmul.mubr.f32.gmra.mxu0 %v3569
      %v3688 = vpop.f32.mrf.mxu0
      %v3689 = vadd.f32 0.0, %v3688
      %v3690 = vpop.f32.mrf.mxu0
      %3691 = vmatprep.mubr.f32.mxu0 0.0
      %3692 = vmatmul.mubr.f32.gmra.mxu0 %v3572
      %v3693 = vpop.f32.mrf.mxu0
      %v3694 = vadd.f32 0.0, %v3693
      %v3695 = vpop.f32.mrf.mxu0
      %3696 = vmatprep.mubr.f32.mxu0 0.0
      %3697 = vmatmul.mubr.f32.gmra.mxu0 %v3575
      %v3698 = vpop.f32.mrf.mxu0
      %v3699 = vadd.f32 0.0, %v3698
      %v3700 = vpop.f32.mrf.mxu0
      %3701 = vmatprep.mubr.f32.mxu0 0.0
      %3702 = vmatmul.mubr.f32.gmra.mxu0 %v3578
      %v3703 = vpop.f32.mrf.mxu0
      %v3704 = vadd.f32 0.0, %v3703
      %v3705 = vpop.f32.mrf.mxu0
      %3706 = vmatprep.mubr.f32.mxu0 0.0
      %3707 = vmatmul.mubr.f32.gmra.mxu0 %v3581
      %v3708 = vpop.f32.mrf.mxu0
      %v3709 = vadd.f32 0.0, %v3708
      %v3710 = vpop.f32.mrf.mxu0
      %3711 = vmatprep.mubr.f32.mxu0 0.0
      %3712 = vmatmul.mubr.f32.gmra.mxu0 %v3584
      %v3713 = vpop.f32.mrf.mxu0
      %v3714 = vadd.f32 0.0, %v3713
      %v3715 = vpop.f32.mrf.mxu0
      %3716 = vmatprep.mubr.f32.mxu0 0.0
      %3717 = vmatmul.mubr.f32.gmra.mxu0 %v3587
      %v3718 = vpop.f32.mrf.mxu0
      %v3719 = vadd.f32 0.0, %v3718
      %v3720 = vpop.f32.mrf.mxu0
      %3721 = vmatprep.mubr.f32.mxu0 0.0
      %3722 = vmatmul.mubr.f32.gmra.mxu0 %v3590
      %v3723 = vpop.f32.mrf.mxu0
      %v3724 = vadd.f32 0.0, %v3723
      %v3725 = vpop.f32.mrf.mxu0
      %3726 = vmatprep.mubr.f32.mxu0 0.0
      %3727 = vmatmul.mubr.f32.gmra.mxu0 %v3593
      %v3728 = vpop.f32.mrf.mxu0
      %v3729 = vadd.f32 0.0, %v3728
      %v3730 = vpop.f32.mrf.mxu0
      %3731 = vmatprep.mubr.f32.mxu0 0.0
      %3732 = vmatmul.mubr.f32.gmra.mxu0 %v3596
      %v3733 = vpop.f32.mrf.mxu0
      %v3734 = vadd.f32 0.0, %v3733
      %v3735 = vpop.f32.mrf.mxu0
      %3736 = vmatprep.mubr.f32.mxu0 0.0
      %3737 = vmatmul.mubr.f32.gmra.mxu0 %v3599
      %v3738 = vpop.f32.mrf.mxu0
      %v3739 = vadd.f32 0.0, %v3738
      %v3740 = vpop.f32.mrf.mxu0
      %3741 = vmatprep.mubr.f32.mxu0 0.0
      %3742 = vmatmul.mubr.f32.gmra.mxu0 %v3602
      %v3743 = vpop.f32.mrf.mxu0
      %v3744 = vadd.f32 0.0, %v3743
      %v3745 = vpop.f32.mrf.mxu0
      %3746 = vmatprep.mubr.f32.mxu0 0.0
      %3747 = vmatmul.mubr.f32.gmra.mxu0 %v3605
      %v3748 = vpop.f32.mrf.mxu0
      %v3749 = vadd.f32 0.0, %v3748
      %v3750 = vpop.f32.mrf.mxu0
      %3751 = vmatprep.mubr.f32.mxu0 0.0
      %3752 = vmatmul.mubr.f32.gmra.mxu0 %v3608
      %v3753 = vpop.f32.mrf.mxu0
      %v3754 = vadd.f32 0.0, %v3753
      %v3755 = vpop.f32.mrf.mxu0
      %3756 = vmatprep.mubr.f32.mxu0 0.0
      %3757 = vmatmul.mubr.f32.gmra.mxu0 %v3611
      %v3758 = vpop.f32.mrf.mxu0
      %v3759 = vadd.f32 0.0, %v3758
      %v3760 = vpop.f32.mrf.mxu0
      %3761 = vdwg.mxu0
      %v3762 = vmul.f32 %v3684, %v2182
      %v3763 = vmul.f32 %v3689, %v2188
      %v3764 = vmul.f32 %v3694, %v2194
      %v3765 = vmul.f32 %v3699, %v2200
      %v3766 = vmul.f32 %v3704, %v2206
      %v3767 = vmul.f32 %v3709, %v2212
      %v3768 = vmul.f32 %v3714, %v2218
      %v3769 = vmul.f32 %v3719, %v2224
      %v3770 = vmul.f32 %v3724, %v2230
      %v3771 = vmul.f32 %v3729, %v2236
      %v3772 = vmul.f32 %v3734, %v2242
      %v3773 = vmul.f32 %v3739, %v2248
      %v3774 = vmul.f32 %v3744, %v2254
      %v3775 = vmul.f32 %v3749, %v2260
      %v3776 = vmul.f32 %v3754, %v2266
      %v3777 = vmul.f32 %v3759, %v2272
      %3778 = vmatprep.subr.mxu0 0.0
      %3779 = vmatpush1.msra.mxu0 %v3777
      %3780 = vmatprep.subr.mxu0 0.0
      %3781 = vmatpush1.msra.mxu0 %v3776
      %3782 = vmatprep.subr.mxu0 0.0
      %3783 = vmatpush1.msra.mxu0 %v3775
      %3784 = vmatprep.subr.mxu0 0.0
      %3785 = vmatpush1.msra.mxu0 %v3774
      %3786 = vmatprep.subr.mxu0 0.0
      %3787 = vmatpush1.msra.mxu0 %v3773
      %3788 = vmatprep.subr.mxu0 0.0
      %3789 = vmatpush1.msra.mxu0 %v3772
      %3790 = vmatprep.subr.mxu0 0.0
      %3791 = vmatpush1.msra.mxu0 %v3771
      %3792 = vmatprep.subr.mxu0 0.0
      %3793 = vmatpush1.msra.mxu0 %v3770
      %3794 = vmatprep.subr.mxu0 0.0
      %3795 = vmatpush1.msra.mxu0 %v3769
      %3796 = vmatprep.subr.mxu0 0.0
      %3797 = vmatpush1.msra.mxu0 %v3768
      %3798 = vmatprep.subr.mxu0 0.0
      %3799 = vmatpush1.msra.mxu0 %v3767
      %3800 = vmatprep.subr.mxu0 0.0
      %3801 = vmatpush1.msra.mxu0 %v3766
      %3802 = vmatprep.subr.mxu0 0.0
      %3803 = vmatpush1.msra.mxu0 %v3765
      %3804 = vmatprep.subr.mxu0 0.0
      %3805 = vmatpush1.msra.mxu0 %v3764
      %3806 = vmatprep.subr.mxu0 0.0
      %3807 = vmatpush1.msra.mxu0 %v3763
      %3808 = vmatprep.subr.mxu0 0.0
      %3809 = vmatpush1.msra.mxu0 %v3762
      %3810 = vmatprep.subr.mxu0 0.0
      %3811 = vmatpush2.msra.mxu0 0.0
      %3812 = vmatprep.subr.mxu0 0.0
      %3813 = vmatpush2.msra.mxu0 0.0
      %3814 = vmatprep.subr.mxu0 0.0
      %3815 = vmatpush2.msra.mxu0 0.0
      %3816 = vmatprep.subr.mxu0 0.0
      %3817 = vmatpush2.msra.mxu0 0.0
      %3818 = vmatprep.subr.mxu0 0.0
      %3819 = vmatpush2.msra.mxu0 0.0
      %3820 = vmatprep.subr.mxu0 0.0
      %3821 = vmatpush2.msra.mxu0 0.0
      %3822 = vmatprep.subr.mxu0 0.0
      %3823 = vmatpush2.msra.mxu0 0.0
      %3824 = vmatprep.subr.mxu0 0.0
      %3825 = vmatpush2.msra.mxu0 0.0
      %3826 = vmatprep.subr.mxu0 0.0
      %3827 = vmatpush2.msra.mxu0 0.0
      %3828 = vmatprep.subr.mxu0 0.0
      %3829 = vmatpush2.msra.mxu0 0.0
      %3830 = vmatprep.subr.mxu0 0.0
      %3831 = vmatpush2.msra.mxu0 0.0
      %3832 = vmatprep.subr.mxu0 0.0
      %3833 = vmatpush2.msra.mxu0 0.0
      %3834 = vmatprep.subr.mxu0 0.0
      %3835 = vmatpush2.msra.mxu0 0.0
      %3836 = vmatprep.subr.mxu0 0.0
      %3837 = vmatpush2.msra.mxu0 0.0
      %3838 = vmatprep.subr.mxu0 0.0
      %3839 = vmatpush2.msra.mxu0 0.0
      %3840 = vmatprep.subr.mxu0 0.0
      %3841 = vmatpush2.msra.mxu0 0.0
      %3842 = vmatprep.mubr.f32.mxu0 0.0
      %3843 = vmatmul.mubr.f32.gmra.mxu0 %v513
      %v3844 = vpop.f32.mrf.mxu0
      %v3845 = vadd.f32 0.0, %v3844
      %v3846 = vpop.f32.mrf.mxu0
      %3847 = vmatprep.mubr.f32.mxu0 0.0
      %3848 = vmatmul.mubr.f32.gmra.mxu0 %v515
      %v3849 = vpop.f32.mrf.mxu0
      %v3850 = vadd.f32 0.0, %v3849
      %v3851 = vpop.f32.mrf.mxu0
      %3852 = vdwg.mxu0
      %v3854 = vsel %vm3564, %v360, 0
      %v3857 = vsel %vm3564, %v361, 0
      %v3860 = vsel %vm3613, %v3242, 0
      %3862 = vmatprep.subr.mxu0 0.0
      %3863 = vmatpush1.msra.mxu0 0.0
      %3864 = vmatprep.subr.mxu0 0.0
      %3865 = vmatpush1.msra.mxu0 0.0
      %3866 = vmatprep.subr.mxu0 0.0
      %3867 = vmatpush1.msra.mxu0 0.0
      %3868 = vmatprep.subr.mxu0 0.0
      %3869 = vmatpush1.msra.mxu0 0.0
      %3870 = vmatprep.subr.mxu0 0.0
      %3871 = vmatpush1.msra.mxu0 0.0
      %3872 = vmatprep.subr.mxu0 0.0
      %3873 = vmatpush1.msra.mxu0 0.0
      %3874 = vmatprep.subr.mxu0 0.0
      %3875 = vmatpush1.msra.mxu0 0.0
      %3876 = vmatprep.subr.mxu0 0.0
      %3877 = vmatpush1.msra.mxu0 0.0
      %3878 = vmatprep.subr.mxu0 0.0
      %3879 = vmatpush1.msra.mxu0 0.0
      %3880 = vmatprep.subr.mxu0 0.0
      %3881 = vmatpush1.msra.mxu0 0.0
      %3882 = vmatprep.subr.mxu0 0.0
      %3883 = vmatpush1.msra.mxu0 0.0
      %3884 = vmatprep.subr.mxu0 0.0
      %3885 = vmatpush1.msra.mxu0 0.0
      %3886 = vmatprep.subr.mxu0 0.0
      %3887 = vmatpush1.msra.mxu0 0.0
      %3888 = vmatprep.subr.mxu0 0.0
      %3889 = vmatpush1.msra.mxu0 0.0
      %3890 = vmatprep.subr.mxu0 0.0
      %3891 = vmatpush1.msra.mxu0 0.0
      %3892 = vmatprep.subr.mxu0 0.0
      %3893 = vmatpush1.msra.mxu0 %v3860
      %3894 = vmatprep.subr.mxu0 0.0
      %3895 = vmatpush2.msra.mxu0 0.0
      %3896 = vmatprep.subr.mxu0 0.0
      %3897 = vmatpush2.msra.mxu0 0.0
      %3898 = vmatprep.subr.mxu0 0.0
      %3899 = vmatpush2.msra.mxu0 0.0
      %3900 = vmatprep.subr.mxu0 0.0
      %3901 = vmatpush2.msra.mxu0 0.0
      %3902 = vmatprep.subr.mxu0 0.0
      %3903 = vmatpush2.msra.mxu0 0.0
      %3904 = vmatprep.subr.mxu0 0.0
      %3905 = vmatpush2.msra.mxu0 0.0
      %3906 = vmatprep.subr.mxu0 0.0
      %3907 = vmatpush2.msra.mxu0 0.0
      %3908 = vmatprep.subr.mxu0 0.0
      %3909 = vmatpush2.msra.mxu0 0.0
      %3910 = vmatprep.subr.mxu0 0.0
      %3911 = vmatpush2.msra.mxu0 0.0
      %3912 = vmatprep.subr.mxu0 0.0
      %3913 = vmatpush2.msra.mxu0 0.0
      %3914 = vmatprep.subr.mxu0 0.0
      %3915 = vmatpush2.msra.mxu0 0.0
      %3916 = vmatprep.subr.mxu0 0.0
      %3917 = vmatpush2.msra.mxu0 0.0
      %3918 = vmatprep.subr.mxu0 0.0
      %3919 = vmatpush2.msra.mxu0 0.0
      %3920 = vmatprep.subr.mxu0 0.0
      %3921 = vmatpush2.msra.mxu0 0.0
      %3922 = vmatprep.subr.mxu0 0.0
      %3923 = vmatpush2.msra.mxu0 0.0
      %3924 = vmatprep.subr.mxu0 0.0
      %3925 = vmatpush2.msra.mxu0 0.0
      %3926 = vmatprep.mubr.f32.mxu0 0.0
      %3927 = vmatmul.mubr.f32.gmra.mxu0 %v3854
      %v3928 = vpop.f32.mrf.mxu0
      %v3929 = vadd.f32 0.0, %v3928
      %v3930 = vpop.f32.mrf.mxu0
      %3931 = vmatprep.mubr.f32.mxu0 0.0
      %3932 = vmatmul.mubr.f32.gmra.mxu0 %v3857
      %v3933 = vpop.f32.mrf.mxu0
      %v3934 = vadd.f32 0.0, %v3933
      %v3935 = vpop.f32.mrf.mxu0
      %3936 = vdwg.mxu0
      %3937 = vmatprep.subr.mxu0 0.0
      %3938 = vmatpush1.msra.mxu0 %v3265
      %3939 = vmatprep.subr.mxu0 0.0
      %3940 = vmatpush1.msra.mxu0 %v3264
      %3941 = vmatprep.subr.mxu0 0.0
      %3942 = vmatpush1.msra.mxu0 %v3263
      %3943 = vmatprep.subr.mxu0 0.0
      %3944 = vmatpush1.msra.mxu0 %v3262
      %3945 = vmatprep.subr.mxu0 0.0
      %3946 = vmatpush1.msra.mxu0 %v3261
      %3947 = vmatprep.subr.mxu0 0.0
      %3948 = vmatpush1.msra.mxu0 %v3260
      %3949 = vmatprep.subr.mxu0 0.0
      %3950 = vmatpush1.msra.mxu0 %v3259
      %3951 = vmatprep.subr.mxu0 0.0
      %3952 = vmatpush1.msra.mxu0 %v3258
      %3953 = vmatprep.subr.mxu0 0.0
      %3954 = vmatpush1.msra.mxu0 %v3257
      %3955 = vmatprep.subr.mxu0 0.0
      %3956 = vmatpush1.msra.mxu0 %v3256
      %3957 = vmatprep.subr.mxu0 0.0
      %3958 = vmatpush1.msra.mxu0 %v3255
      %3959 = vmatprep.subr.mxu0 0.0
      %3960 = vmatpush1.msra.mxu0 %v3254
      %3961 = vmatprep.subr.mxu0 0.0
      %3962 = vmatpush1.msra.mxu0 %v3253
      %3963 = vmatprep.subr.mxu0 0.0
      %3964 = vmatpush1.msra.mxu0 %v3252
      %3965 = vmatprep.subr.mxu0 0.0
      %3966 = vmatpush1.msra.mxu0 %v3251
      %3967 = vmatprep.subr.mxu0 0.0
      %3968 = vmatpush1.msra.mxu0 %v3250
      %3969 = vmatprep.subr.mxu0 0.0
      %3970 = vmatpush2.msra.mxu0 0.0
      %3971 = vmatprep.subr.mxu0 0.0
      %3972 = vmatpush2.msra.mxu0 0.0
      %3973 = vmatprep.subr.mxu0 0.0
      %3974 = vmatpush2.msra.mxu0 0.0
      %3975 = vmatprep.subr.mxu0 0.0
      %3976 = vmatpush2.msra.mxu0 0.0
      %3977 = vmatprep.subr.mxu0 0.0
      %3978 = vmatpush2.msra.mxu0 0.0
      %3979 = vmatprep.subr.mxu0 0.0
      %3980 = vmatpush2.msra.mxu0 0.0
      %3981 = vmatprep.subr.mxu0 0.0
      %3982 = vmatpush2.msra.mxu0 0.0
      %3983 = vmatprep.subr.mxu0 0.0
      %3984 = vmatpush2.msra.mxu0 0.0
      %3985 = vmatprep.subr.mxu0 0.0
      %3986 = vmatpush2.msra.mxu0 0.0
      %3987 = vmatprep.subr.mxu0 0.0
      %3988 = vmatpush2.msra.mxu0 0.0
      %3989 = vmatprep.subr.mxu0 0.0
      %3990 = vmatpush2.msra.mxu0 0.0
      %3991 = vmatprep.subr.mxu0 0.0
      %3992 = vmatpush2.msra.mxu0 0.0
      %3993 = vmatprep.subr.mxu0 0.0
      %3994 = vmatpush2.msra.mxu0 0.0
      %3995 = vmatprep.subr.mxu0 0.0
      %3996 = vmatpush2.msra.mxu0 0.0
      %3997 = vmatprep.subr.mxu0 0.0
      %3998 = vmatpush2.msra.mxu0 0.0
      %3999 = vmatprep.subr.mxu0 0.0
      %4000 = vmatpush2.msra.mxu0 0.0
      %4001 = vmatprep.mubr.f32.mxu0 0.0
      %4002 = vmatmul.mubr.f32.gmra.mxu0 %v3845
      %v4003 = vpop.f32.mrf.mxu0
      %v4004 = vadd.f32 %v3929, %v4003
      %v4005 = vpop.f32.mrf.mxu0
      %4006 = vmatprep.mubr.f32.mxu0 0.0
      %4007 = vmatmul.mubr.f32.gmra.mxu0 %v3850
      %v4008 = vpop.f32.mrf.mxu0
      %v4009 = vadd.f32 %v3934, %v4008
      %v4010 = vpop.f32.mrf.mxu0
      %4011 = vdwg.mxu0
      %v4012 = vlaneseq
      %v4013 = vshrl.u32 %v4012, 7
      %v4014 = vsub.s32 0, %v4013
      %v4015 = vrot.slane %v3248, %v4014
      %v4016 = vadd.f32 %v4004, %v4015
      %v4017 = vadd.f32 %v4009, %v4015
      %v4018 = vmax.f32 %v4016, 0.0
      %v4019 = vmax.f32 %v4017, 0.0
      %v4020 = vadd.s32 %v396, 128
      %v4021 = vadd.s32 %v396, 256
      %v4022 = vadd.s32 %v396, 384
      %v4023 = vadd.s32 %v494, 16
      %v4024 = vadd.s32 %v494, 24
      %v4025 = vmul.u32 %v494, 16
      %v4026 = vmul.u32 %v495, 16
      %v4027 = vmul.u32 %v4023, 16
      %v4028 = vmul.u32 %v4024, 16
      %vm4029 = vcmp.ge.s32.totalorder %v396, %v4025
      %vm4030 = vcmp.ge.s32.totalorder %v4020, %v4025
      %vm4031 = vcmp.ge.s32.totalorder %v4021, %v4025
      %vm4032 = vcmp.ge.s32.totalorder %v4022, %v4025
      %vm4033 = vcmp.ge.s32.totalorder %v396, %v4026
      %vm4034 = vcmp.ge.s32.totalorder %v4020, %v4026
      %vm4035 = vcmp.ge.s32.totalorder %v4021, %v4026
      %vm4036 = vcmp.ge.s32.totalorder %v4022, %v4026
      %vm4037 = vcmp.ge.s32.totalorder %v396, %v4027
      %vm4038 = vcmp.ge.s32.totalorder %v4020, %v4027
      %vm4039 = vcmp.ge.s32.totalorder %v4021, %v4027
      %vm4040 = vcmp.ge.s32.totalorder %v4022, %v4027
      %vm4041 = vcmp.ge.s32.totalorder %v396, %v4028
      %vm4042 = vcmp.ge.s32.totalorder %v4020, %v4028
      %vm4043 = vcmp.ge.s32.totalorder %v4021, %v4028
      %vm4044 = vcmp.ge.s32.totalorder %v4022, %v4028
      %v4045 = vadd.s32 %v495, 1
      %v4046 = vadd.s32 %v4023, 1
      %v4047 = vadd.s32 %v4024, 1
      %v4048 = vmul.u32 %v3364, 16
      %v4049 = vmul.u32 %v4045, 16
      %v4050 = vmul.u32 %v4046, 16
      %v4051 = vmul.u32 %v4047, 16
      %vm4052 = vcmp.lt.s32.totalorder %v396, %v4048
      %vm4053 = vcmp.lt.s32.totalorder %v4020, %v4048
      %vm4054 = vcmp.lt.s32.totalorder %v4021, %v4048
      %vm4055 = vcmp.lt.s32.totalorder %v4022, %v4048
      %vm4056 = vcmp.lt.s32.totalorder %v396, %v4049
      %vm4057 = vcmp.lt.s32.totalorder %v4020, %v4049
      %vm4058 = vcmp.lt.s32.totalorder %v4021, %v4049
      %vm4059 = vcmp.lt.s32.totalorder %v4022, %v4049
      %vm4060 = vcmp.lt.s32.totalorder %v396, %v4050
      %vm4061 = vcmp.lt.s32.totalorder %v4020, %v4050
      %vm4062 = vcmp.lt.s32.totalorder %v4021, %v4050
      %vm4063 = vcmp.lt.s32.totalorder %v4022, %v4050
      %vm4064 = vcmp.lt.s32.totalorder %v396, %v4051
      %vm4065 = vcmp.lt.s32.totalorder %v4020, %v4051
      %vm4066 = vcmp.lt.s32.totalorder %v4021, %v4051
      %vm4067 = vcmp.lt.s32.totalorder %v4022, %v4051
      %vm4068 = vmand %vm4029, %vm4052
      %vm4069 = vmand %vm4030, %vm4053
      %vm4070 = vmand %vm4031, %vm4054
      %vm4071 = vmand %vm4032, %vm4055
      %vm4072 = vmand %vm4033, %vm4056
      %vm4073 = vmand %vm4034, %vm4057
      %vm4074 = vmand %vm4035, %vm4058
      %vm4075 = vmand %vm4036, %vm4059
      %vm4076 = vmand %vm4037, %vm4060
      %vm4077 = vmand %vm4038, %vm4061
      %vm4078 = vmand %vm4039, %vm4062
      %vm4079 = vmand %vm4040, %vm4063
      %vm4080 = vmand %vm4041, %vm4064
      %vm4081 = vmand %vm4042, %vm4065
      %vm4082 = vmand %vm4043, %vm4066
      %vm4083 = vmand %vm4044, %vm4067
      %v4084 = vsel %vm4068, 1, 0
      %v4085 = vsel %vm4069, 1, 0
      %v4086 = vsel %vm4070, 1, 0
      %v4087 = vsel %vm4071, 1, 0
      %v4088 = vsel %vm4072, 1, 0
      %v4089 = vsel %vm4073, 1, 0
      %v4090 = vsel %vm4074, 1, 0
      %v4091 = vsel %vm4075, 1, 0
      %v4092 = vsel %vm4076, 1, 0
      %v4093 = vsel %vm4077, 1, 0
      %v4094 = vsel %vm4078, 1, 0
      %v4095 = vsel %vm4079, 1, 0
      %v4096 = vsel %vm4080, 1, 0
      %v4097 = vsel %vm4081, 1, 0
      %v4098 = vsel %vm4082, 1, 0
      %v4099 = vsel %vm4083, 1, 0
      %v4100 = vcvt.s32.f32 %v4084
      %v4101 = vcvt.s32.f32 %v4085
      %v4102 = vcvt.s32.f32 %v4086
      %v4103 = vcvt.s32.f32 %v4087
      %v4104 = vcvt.s32.f32 %v4088
      %v4105 = vcvt.s32.f32 %v4089
      %v4106 = vcvt.s32.f32 %v4090
      %v4107 = vcvt.s32.f32 %v4091
      %v4108 = vcvt.s32.f32 %v4092
      %v4109 = vcvt.s32.f32 %v4093
      %v4110 = vcvt.s32.f32 %v4094
      %v4111 = vcvt.s32.f32 %v4095
      %v4112 = vcvt.s32.f32 %v4096
      %v4113 = vcvt.s32.f32 %v4097
      %v4114 = vcvt.s32.f32 %v4098
      %v4115 = vcvt.s32.f32 %v4099
      %4116 = vmatprep.subr.mxu0 0.0
      %4117 = vmatpush1.msra.mxu0 0.0
      %4118 = vmatprep.subr.mxu0 0.0
      %4119 = vmatpush1.msra.mxu0 0.0
      %4120 = vmatprep.subr.mxu0 0.0
      %4121 = vmatpush1.msra.mxu0 0.0
      %4122 = vmatprep.subr.mxu0 0.0
      %4123 = vmatpush1.msra.mxu0 0.0
      %4124 = vmatprep.subr.mxu0 0.0
      %4125 = vmatpush1.msra.mxu0 0.0
      %4126 = vmatprep.subr.mxu0 0.0
      %4127 = vmatpush1.msra.mxu0 0.0
      %4128 = vmatprep.subr.mxu0 0.0
      %4129 = vmatpush1.msra.mxu0 0.0
      %4130 = vmatprep.subr.mxu0 0.0
      %4131 = vmatpush1.msra.mxu0 0.0
      %4132 = vmatprep.subr.mxu0 0.0
      %4133 = vmatpush1.msra.mxu0 0.0
      %4134 = vmatprep.subr.mxu0 0.0
      %4135 = vmatpush1.msra.mxu0 0.0
      %4136 = vmatprep.subr.mxu0 0.0
      %4137 = vmatpush1.msra.mxu0 0.0
      %4138 = vmatprep.subr.mxu0 0.0
      %4139 = vmatpush1.msra.mxu0 0.0
      %4140 = vmatprep.subr.mxu0 0.0
      %4141 = vmatpush1.msra.mxu0 0.0
      %4142 = vmatprep.subr.mxu0 0.0
      %4143 = vmatpush1.msra.mxu0 0.0
      %4144 = vmatprep.subr.mxu0 0.0
      %4145 = vmatpush1.msra.mxu0 %v4019
      %4146 = vmatprep.subr.mxu0 0.0
      %4147 = vmatpush1.msra.mxu0 %v4018
      %4148 = vmatprep.subr.mxu0 0.0
      %4149 = vmatpush2.msra.mxu0 0.0
      %4150 = vmatprep.subr.mxu0 0.0
      %4151 = vmatpush2.msra.mxu0 0.0
      %4152 = vmatprep.subr.mxu0 0.0
      %4153 = vmatpush2.msra.mxu0 0.0
      %4154 = vmatprep.subr.mxu0 0.0
      %4155 = vmatpush2.msra.mxu0 0.0
      %4156 = vmatprep.subr.mxu0 0.0
      %4157 = vmatpush2.msra.mxu0 0.0
      %4158 = vmatprep.subr.mxu0 0.0
      %4159 = vmatpush2.msra.mxu0 0.0
      %4160 = vmatprep.subr.mxu0 0.0
      %4161 = vmatpush2.msra.mxu0 0.0
      %4162 = vmatprep.subr.mxu0 0.0
      %4163 = vmatpush2.msra.mxu0 0.0
      %4164 = vmatprep.subr.mxu0 0.0
      %4165 = vmatpush2.msra.mxu0 0.0
      %4166 = vmatprep.subr.mxu0 0.0
      %4167 = vmatpush2.msra.mxu0 0.0
      %4168 = vmatprep.subr.mxu0 0.0
      %4169 = vmatpush2.msra.mxu0 0.0
      %4170 = vmatprep.subr.mxu0 0.0
      %4171 = vmatpush2.msra.mxu0 0.0
      %4172 = vmatprep.subr.mxu0 0.0
      %4173 = vmatpush2.msra.mxu0 0.0
      %4174 = vmatprep.subr.mxu0 0.0
      %4175 = vmatpush2.msra.mxu0 0.0
      %4176 = vmatprep.subr.mxu0 0.0
      %4177 = vmatpush2.msra.mxu0 0.0
      %4178 = vmatprep.subr.mxu0 0.0
      %4179 = vmatpush2.msra.mxu0 0.0
      %4180 = vmatprep.mubr.f32.mxu0 0.0
      %4181 = vmatmul.mubr.f32.gmra.mxu0 %v3372
      %v4182 = vpop.f32.mrf.mxu0
      %v4183 = vadd.f32 0.0, %v4182
      %v4184 = vpop.f32.mrf.mxu0
      %4185 = vmatprep.mubr.f32.mxu0 0.0
      %4186 = vmatmul.mubr.f32.gmra.mxu0 %v3375
      %v4187 = vpop.f32.mrf.mxu0
      %v4188 = vadd.f32 0.0, %v4187
      %v4189 = vpop.f32.mrf.mxu0
      %4190 = vmatprep.mubr.f32.mxu0 0.0
      %4191 = vmatmul.mubr.f32.gmra.mxu0 %v3378
      %v4192 = vpop.f32.mrf.mxu0
      %v4193 = vadd.f32 0.0, %v4192
      %v4194 = vpop.f32.mrf.mxu0
      %4195 = vmatprep.mubr.f32.mxu0 0.0
      %4196 = vmatmul.mubr.f32.gmra.mxu0 %v3381
      %v4197 = vpop.f32.mrf.mxu0
      %v4198 = vadd.f32 0.0, %v4197
      %v4199 = vpop.f32.mrf.mxu0
      %4200 = vmatprep.mubr.f32.mxu0 0.0
      %4201 = vmatmul.mubr.f32.gmra.mxu0 %v3384
      %v4202 = vpop.f32.mrf.mxu0
      %v4203 = vadd.f32 0.0, %v4202
      %v4204 = vpop.f32.mrf.mxu0
      %4205 = vmatprep.mubr.f32.mxu0 0.0
      %4206 = vmatmul.mubr.f32.gmra.mxu0 %v3387
      %v4207 = vpop.f32.mrf.mxu0
      %v4208 = vadd.f32 0.0, %v4207
      %v4209 = vpop.f32.mrf.mxu0
      %4210 = vmatprep.mubr.f32.mxu0 0.0
      %4211 = vmatmul.mubr.f32.gmra.mxu0 %v3390
      %v4212 = vpop.f32.mrf.mxu0
      %v4213 = vadd.f32 0.0, %v4212
      %v4214 = vpop.f32.mrf.mxu0
      %4215 = vmatprep.mubr.f32.mxu0 0.0
      %4216 = vmatmul.mubr.f32.gmra.mxu0 %v3393
      %v4217 = vpop.f32.mrf.mxu0
      %v4218 = vadd.f32 0.0, %v4217
      %v4219 = vpop.f32.mrf.mxu0
      %4220 = vmatprep.mubr.f32.mxu0 0.0
      %4221 = vmatmul.mubr.f32.gmra.mxu0 %v3396
      %v4222 = vpop.f32.mrf.mxu0
      %v4223 = vadd.f32 0.0, %v4222
      %v4224 = vpop.f32.mrf.mxu0
      %4225 = vmatprep.mubr.f32.mxu0 0.0
      %4226 = vmatmul.mubr.f32.gmra.mxu0 %v3399
      %v4227 = vpop.f32.mrf.mxu0
      %v4228 = vadd.f32 0.0, %v4227
      %v4229 = vpop.f32.mrf.mxu0
      %4230 = vmatprep.mubr.f32.mxu0 0.0
      %4231 = vmatmul.mubr.f32.gmra.mxu0 %v3402
      %v4232 = vpop.f32.mrf.mxu0
      %v4233 = vadd.f32 0.0, %v4232
      %v4234 = vpop.f32.mrf.mxu0
      %4235 = vmatprep.mubr.f32.mxu0 0.0
      %4236 = vmatmul.mubr.f32.gmra.mxu0 %v3405
      %v4237 = vpop.f32.mrf.mxu0
      %v4238 = vadd.f32 0.0, %v4237
      %v4239 = vpop.f32.mrf.mxu0
      %4240 = vmatprep.mubr.f32.mxu0 0.0
      %4241 = vmatmul.mubr.f32.gmra.mxu0 %v3408
      %v4242 = vpop.f32.mrf.mxu0
      %v4243 = vadd.f32 0.0, %v4242
      %v4244 = vpop.f32.mrf.mxu0
      %4245 = vmatprep.mubr.f32.mxu0 0.0
      %4246 = vmatmul.mubr.f32.gmra.mxu0 %v3411
      %v4247 = vpop.f32.mrf.mxu0
      %v4248 = vadd.f32 0.0, %v4247
      %v4249 = vpop.f32.mrf.mxu0
      %4250 = vmatprep.mubr.f32.mxu0 0.0
      %4251 = vmatmul.mubr.f32.gmra.mxu0 %v3414
      %v4252 = vpop.f32.mrf.mxu0
      %v4253 = vadd.f32 0.0, %v4252
      %v4254 = vpop.f32.mrf.mxu0
      %4255 = vmatprep.mubr.f32.mxu0 0.0
      %4256 = vmatmul.mubr.f32.gmra.mxu0 %v3417
      %v4257 = vpop.f32.mrf.mxu0
      %v4258 = vadd.f32 0.0, %v4257
      %v4259 = vpop.f32.mrf.mxu0
      %4260 = vdwg.mxu0
      %vm4261 = vcmask 261120
      %v4263 = vsel %vm4261, %v4183, 0
      %v4266 = vsel %vm4261, %v4188, 0
      %v4269 = vsel %vm4261, %v4193, 0
      %v4272 = vsel %vm4261, %v4198, 0
      %v4275 = vsel %vm4261, %v4203, 0
      %v4278 = vsel %vm4261, %v4208, 0
      %v4281 = vsel %vm4261, %v4213, 0
      %v4284 = vsel %vm4261, %v4218, 0
      %v4287 = vsel %vm4261, %v4223, 0
      %v4290 = vsel %vm4261, %v4228, 0
      %v4293 = vsel %vm4261, %v4233, 0
      %v4296 = vsel %vm4261, %v4238, 0
      %v4299 = vsel %vm4261, %v4243, 0
      %v4302 = vsel %vm4261, %v4248, 0
      %v4305 = vsel %vm4261, %v4253, 0
      %v4308 = vsel %vm4261, %v4258, 0
      %4310 = vmatprep.subr.mxu0 0.0
      %4311 = vmatpush1.msra.mxu0 0.0
      %4312 = vmatprep.subr.mxu0 0.0
      %4313 = vmatpush1.msra.mxu0 0.0
      %4314 = vmatprep.subr.mxu0 0.0
      %4315 = vmatpush1.msra.mxu0 0.0
      %4316 = vmatprep.subr.mxu0 0.0
      %4317 = vmatpush1.msra.mxu0 0.0
      %4318 = vmatprep.subr.mxu0 0.0
      %4319 = vmatpush1.msra.mxu0 0.0
      %4320 = vmatprep.subr.mxu0 0.0
      %4321 = vmatpush1.msra.mxu0 0.0
      %4322 = vmatprep.subr.mxu0 0.0
      %4323 = vmatpush1.msra.mxu0 0.0
      %4324 = vmatprep.subr.mxu0 0.0
      %4325 = vmatpush1.msra.mxu0 0.0
      %4326 = vmatprep.subr.mxu0 0.0
      %4327 = vmatpush1.msra.mxu0 0.0
      %4328 = vmatprep.subr.mxu0 0.0
      %4329 = vmatpush1.msra.mxu0 0.0
      %4330 = vmatprep.subr.mxu0 0.0
      %4331 = vmatpush1.msra.mxu0 0.0
      %4332 = vmatprep.subr.mxu0 0.0
      %4333 = vmatpush1.msra.mxu0 0.0
      %4334 = vmatprep.subr.mxu0 %v4113
      %4335 = vmatpush1.msra.mxu0 %v4112
      %4336 = vmatprep.subr.mxu0 %v4109
      %4337 = vmatpush1.msra.mxu0 %v4108
      %4338 = vmatprep.subr.mxu0 %v4105
      %4339 = vmatpush1.msra.mxu0 %v4104
      %4340 = vmatprep.subr.mxu0 %v4101
      %4341 = vmatpush1.msra.mxu0 %v4100
      %4342 = vmatprep.subr.mxu0 0.0
      %4343 = vmatpush2.msra.mxu0 0.0
      %4344 = vmatprep.subr.mxu0 0.0
      %4345 = vmatpush2.msra.mxu0 0.0
      %4346 = vmatprep.subr.mxu0 0.0
      %4347 = vmatpush2.msra.mxu0 0.0
      %4348 = vmatprep.subr.mxu0 0.0
      %4349 = vmatpush2.msra.mxu0 0.0
      %4350 = vmatprep.subr.mxu0 0.0
      %4351 = vmatpush2.msra.mxu0 0.0
      %4352 = vmatprep.subr.mxu0 0.0
      %4353 = vmatpush2.msra.mxu0 0.0
      %4354 = vmatprep.subr.mxu0 0.0
      %4355 = vmatpush2.msra.mxu0 0.0
      %4356 = vmatprep.subr.mxu0 0.0
      %4357 = vmatpush2.msra.mxu0 0.0
      %4358 = vmatprep.subr.mxu0 0.0
      %4359 = vmatpush2.msra.mxu0 0.0
      %4360 = vmatprep.subr.mxu0 0.0
      %4361 = vmatpush2.msra.mxu0 0.0
      %4362 = vmatprep.subr.mxu0 0.0
      %4363 = vmatpush2.msra.mxu0 0.0
      %4364 = vmatprep.subr.mxu0 0.0
      %4365 = vmatpush2.msra.mxu0 0.0
      %4366 = vmatprep.subr.mxu0 0.0
      %4367 = vmatpush2.msra.mxu0 0.0
      %4368 = vmatprep.subr.mxu0 0.0
      %4369 = vmatpush2.msra.mxu0 0.0
      %4370 = vmatprep.subr.mxu0 0.0
      %4371 = vmatpush2.msra.mxu0 0.0
      %4372 = vmatprep.subr.mxu0 0.0
      %4373 = vmatpush2.msra.mxu0 0.0
      %4374 = vmatprep.mubr.f32.mxu0 0.0
      %4375 = vmatmul.mubr.f32.gmra.mxu0 %v4263
      %v4376 = vpop.f32.mrf.mxu0
      %v4377 = vadd.f32 0.0, %v4376
      %v4378 = vpop.f32.mrf.mxu0
      %v4379 = vadd.f32 0.0, %v4378
      %4380 = vmatprep.mubr.f32.mxu0 0.0
      %4381 = vmatmul.mubr.f32.gmra.mxu0 %v4266
      %v4382 = vpop.f32.mrf.mxu0
      %v4383 = vadd.f32 0.0, %v4382
      %v4384 = vpop.f32.mrf.mxu0
      %v4385 = vadd.f32 0.0, %v4384
      %4386 = vmatprep.mubr.f32.mxu0 0.0
      %4387 = vmatmul.mubr.f32.gmra.mxu0 %v4269
      %v4388 = vpop.f32.mrf.mxu0
      %v4389 = vadd.f32 0.0, %v4388
      %v4390 = vpop.f32.mrf.mxu0
      %v4391 = vadd.f32 0.0, %v4390
      %4392 = vmatprep.mubr.f32.mxu0 0.0
      %4393 = vmatmul.mubr.f32.gmra.mxu0 %v4272
      %v4394 = vpop.f32.mrf.mxu0
      %v4395 = vadd.f32 0.0, %v4394
      %v4396 = vpop.f32.mrf.mxu0
      %v4397 = vadd.f32 0.0, %v4396
      %4398 = vmatprep.mubr.f32.mxu0 0.0
      %4399 = vmatmul.mubr.f32.gmra.mxu0 %v4275
      %v4400 = vpop.f32.mrf.mxu0
      %v4401 = vadd.f32 0.0, %v4400
      %v4402 = vpop.f32.mrf.mxu0
      %v4403 = vadd.f32 0.0, %v4402
      %4404 = vmatprep.mubr.f32.mxu0 0.0
      %4405 = vmatmul.mubr.f32.gmra.mxu0 %v4278
      %v4406 = vpop.f32.mrf.mxu0
      %v4407 = vadd.f32 0.0, %v4406
      %v4408 = vpop.f32.mrf.mxu0
      %v4409 = vadd.f32 0.0, %v4408
      %4410 = vmatprep.mubr.f32.mxu0 0.0
      %4411 = vmatmul.mubr.f32.gmra.mxu0 %v4281
      %v4412 = vpop.f32.mrf.mxu0
      %v4413 = vadd.f32 0.0, %v4412
      %v4414 = vpop.f32.mrf.mxu0
      %v4415 = vadd.f32 0.0, %v4414
      %4416 = vmatprep.mubr.f32.mxu0 0.0
      %4417 = vmatmul.mubr.f32.gmra.mxu0 %v4284
      %v4418 = vpop.f32.mrf.mxu0
      %v4419 = vadd.f32 0.0, %v4418
      %v4420 = vpop.f32.mrf.mxu0
      %v4421 = vadd.f32 0.0, %v4420
      %4422 = vmatprep.mubr.f32.mxu0 0.0
      %4423 = vmatmul.mubr.f32.gmra.mxu0 %v4287
      %v4424 = vpop.f32.mrf.mxu0
      %v4425 = vadd.f32 0.0, %v4424
      %v4426 = vpop.f32.mrf.mxu0
      %v4427 = vadd.f32 0.0, %v4426
      %4428 = vmatprep.mubr.f32.mxu0 0.0
      %4429 = vmatmul.mubr.f32.gmra.mxu0 %v4290
      %v4430 = vpop.f32.mrf.mxu0
      %v4431 = vadd.f32 0.0, %v4430
      %v4432 = vpop.f32.mrf.mxu0
      %v4433 = vadd.f32 0.0, %v4432
      %4434 = vmatprep.mubr.f32.mxu0 0.0
      %4435 = vmatmul.mubr.f32.gmra.mxu0 %v4293
      %v4436 = vpop.f32.mrf.mxu0
      %v4437 = vadd.f32 0.0, %v4436
      %v4438 = vpop.f32.mrf.mxu0
      %v4439 = vadd.f32 0.0, %v4438
      %4440 = vmatprep.mubr.f32.mxu0 0.0
      %4441 = vmatmul.mubr.f32.gmra.mxu0 %v4296
      %v4442 = vpop.f32.mrf.mxu0
      %v4443 = vadd.f32 0.0, %v4442
      %v4444 = vpop.f32.mrf.mxu0
      %v4445 = vadd.f32 0.0, %v4444
      %4446 = vmatprep.mubr.f32.mxu0 0.0
      %4447 = vmatmul.mubr.f32.gmra.mxu0 %v4299
      %v4448 = vpop.f32.mrf.mxu0
      %v4449 = vadd.f32 0.0, %v4448
      %v4450 = vpop.f32.mrf.mxu0
      %v4451 = vadd.f32 0.0, %v4450
      %4452 = vmatprep.mubr.f32.mxu0 0.0
      %4453 = vmatmul.mubr.f32.gmra.mxu0 %v4302
      %v4454 = vpop.f32.mrf.mxu0
      %v4455 = vadd.f32 0.0, %v4454
      %v4456 = vpop.f32.mrf.mxu0
      %v4457 = vadd.f32 0.0, %v4456
      %4458 = vmatprep.mubr.f32.mxu0 0.0
      %4459 = vmatmul.mubr.f32.gmra.mxu0 %v4305
      %v4460 = vpop.f32.mrf.mxu0
      %v4461 = vadd.f32 0.0, %v4460
      %v4462 = vpop.f32.mrf.mxu0
      %v4463 = vadd.f32 0.0, %v4462
      %4464 = vmatprep.mubr.f32.mxu0 0.0
      %4465 = vmatmul.mubr.f32.gmra.mxu0 %v4308
      %v4466 = vpop.f32.mrf.mxu0
      %v4467 = vadd.f32 0.0, %v4466
      %v4468 = vpop.f32.mrf.mxu0
      %v4469 = vadd.f32 0.0, %v4468
      %4470 = vdwg.mxu0
      %4471 = vmatprep.subr.mxu0 0.0
      %4472 = vmatpush1.msra.mxu0 0.0
      %4473 = vmatprep.subr.mxu0 0.0
      %4474 = vmatpush1.msra.mxu0 0.0
      %4475 = vmatprep.subr.mxu0 0.0
      %4476 = vmatpush1.msra.mxu0 0.0
      %4477 = vmatprep.subr.mxu0 0.0
      %4478 = vmatpush1.msra.mxu0 0.0
      %4479 = vmatprep.subr.mxu0 0.0
      %4480 = vmatpush1.msra.mxu0 0.0
      %4481 = vmatprep.subr.mxu0 0.0
      %4482 = vmatpush1.msra.mxu0 0.0
      %4483 = vmatprep.subr.mxu0 0.0
      %4484 = vmatpush1.msra.mxu0 0.0
      %4485 = vmatprep.subr.mxu0 0.0
      %4486 = vmatpush1.msra.mxu0 0.0
      %4487 = vmatprep.subr.mxu0 0.0
      %4488 = vmatpush1.msra.mxu0 0.0
      %4489 = vmatprep.subr.mxu0 0.0
      %4490 = vmatpush1.msra.mxu0 0.0
      %4491 = vmatprep.subr.mxu0 0.0
      %4492 = vmatpush1.msra.mxu0 0.0
      %4493 = vmatprep.subr.mxu0 0.0
      %4494 = vmatpush1.msra.mxu0 0.0
      %4495 = vmatprep.subr.mxu0 %v4115
      %4496 = vmatpush1.msra.mxu0 %v4114
      %4497 = vmatprep.subr.mxu0 %v4111
      %4498 = vmatpush1.msra.mxu0 %v4110
      %4499 = vmatprep.subr.mxu0 %v4107
      %4500 = vmatpush1.msra.mxu0 %v4106
      %4501 = vmatprep.subr.mxu0 %v4103
      %4502 = vmatpush1.msra.mxu0 %v4102
      %4503 = vmatprep.subr.mxu0 0.0
      %4504 = vmatpush2.msra.mxu0 0.0
      %4505 = vmatprep.subr.mxu0 0.0
      %4506 = vmatpush2.msra.mxu0 0.0
      %4507 = vmatprep.subr.mxu0 0.0
      %4508 = vmatpush2.msra.mxu0 0.0
      %4509 = vmatprep.subr.mxu0 0.0
      %4510 = vmatpush2.msra.mxu0 0.0
      %4511 = vmatprep.subr.mxu0 0.0
      %4512 = vmatpush2.msra.mxu0 0.0
      %4513 = vmatprep.subr.mxu0 0.0
      %4514 = vmatpush2.msra.mxu0 0.0
      %4515 = vmatprep.subr.mxu0 0.0
      %4516 = vmatpush2.msra.mxu0 0.0
      %4517 = vmatprep.subr.mxu0 0.0
      %4518 = vmatpush2.msra.mxu0 0.0
      %4519 = vmatprep.subr.mxu0 0.0
      %4520 = vmatpush2.msra.mxu0 0.0
      %4521 = vmatprep.subr.mxu0 0.0
      %4522 = vmatpush2.msra.mxu0 0.0
      %4523 = vmatprep.subr.mxu0 0.0
      %4524 = vmatpush2.msra.mxu0 0.0
      %4525 = vmatprep.subr.mxu0 0.0
      %4526 = vmatpush2.msra.mxu0 0.0
      %4527 = vmatprep.subr.mxu0 0.0
      %4528 = vmatpush2.msra.mxu0 0.0
      %4529 = vmatprep.subr.mxu0 0.0
      %4530 = vmatpush2.msra.mxu0 0.0
      %4531 = vmatprep.subr.mxu0 0.0
      %4532 = vmatpush2.msra.mxu0 0.0
      %4533 = vmatprep.subr.mxu0 0.0
      %4534 = vmatpush2.msra.mxu0 0.0
      %4535 = vmatprep.mubr.f32.mxu0 0.0
      %4536 = vmatmul.mubr.f32.gmra.mxu0 %v4263
      %v4537 = vpop.f32.mrf.mxu0
      %v4538 = vadd.f32 0.0, %v4537
      %v4539 = vpop.f32.mrf.mxu0
      %v4540 = vadd.f32 0.0, %v4539
      %4541 = vmatprep.mubr.f32.mxu0 0.0
      %4542 = vmatmul.mubr.f32.gmra.mxu0 %v4266
      %v4543 = vpop.f32.mrf.mxu0
      %v4544 = vadd.f32 0.0, %v4543
      %v4545 = vpop.f32.mrf.mxu0
      %v4546 = vadd.f32 0.0, %v4545
      %4547 = vmatprep.mubr.f32.mxu0 0.0
      %4548 = vmatmul.mubr.f32.gmra.mxu0 %v4269
      %v4549 = vpop.f32.mrf.mxu0
      %v4550 = vadd.f32 0.0, %v4549
      %v4551 = vpop.f32.mrf.mxu0
      %v4552 = vadd.f32 0.0, %v4551
      %4553 = vmatprep.mubr.f32.mxu0 0.0
      %4554 = vmatmul.mubr.f32.gmra.mxu0 %v4272
      %v4555 = vpop.f32.mrf.mxu0
      %v4556 = vadd.f32 0.0, %v4555
      %v4557 = vpop.f32.mrf.mxu0
      %v4558 = vadd.f32 0.0, %v4557
      %4559 = vmatprep.mubr.f32.mxu0 0.0
      %4560 = vmatmul.mubr.f32.gmra.mxu0 %v4275
      %v4561 = vpop.f32.mrf.mxu0
      %v4562 = vadd.f32 0.0, %v4561
      %v4563 = vpop.f32.mrf.mxu0
      %v4564 = vadd.f32 0.0, %v4563
      %4565 = vmatprep.mubr.f32.mxu0 0.0
      %4566 = vmatmul.mubr.f32.gmra.mxu0 %v4278
      %v4567 = vpop.f32.mrf.mxu0
      %v4568 = vadd.f32 0.0, %v4567
      %v4569 = vpop.f32.mrf.mxu0
      %v4570 = vadd.f32 0.0, %v4569
      %4571 = vmatprep.mubr.f32.mxu0 0.0
      %4572 = vmatmul.mubr.f32.gmra.mxu0 %v4281
      %v4573 = vpop.f32.mrf.mxu0
      %v4574 = vadd.f32 0.0, %v4573
      %v4575 = vpop.f32.mrf.mxu0
      %v4576 = vadd.f32 0.0, %v4575
      %4577 = vmatprep.mubr.f32.mxu0 0.0
      %4578 = vmatmul.mubr.f32.gmra.mxu0 %v4284
      %v4579 = vpop.f32.mrf.mxu0
      %v4580 = vadd.f32 0.0, %v4579
      %v4581 = vpop.f32.mrf.mxu0
      %v4582 = vadd.f32 0.0, %v4581
      %4583 = vmatprep.mubr.f32.mxu0 0.0
      %4584 = vmatmul.mubr.f32.gmra.mxu0 %v4287
      %v4585 = vpop.f32.mrf.mxu0
      %v4586 = vadd.f32 0.0, %v4585
      %v4587 = vpop.f32.mrf.mxu0
      %v4588 = vadd.f32 0.0, %v4587
      %4589 = vmatprep.mubr.f32.mxu0 0.0
      %4590 = vmatmul.mubr.f32.gmra.mxu0 %v4290
      %v4591 = vpop.f32.mrf.mxu0
      %v4592 = vadd.f32 0.0, %v4591
      %v4593 = vpop.f32.mrf.mxu0
      %v4594 = vadd.f32 0.0, %v4593
      %4595 = vmatprep.mubr.f32.mxu0 0.0
      %4596 = vmatmul.mubr.f32.gmra.mxu0 %v4293
      %v4597 = vpop.f32.mrf.mxu0
      %v4598 = vadd.f32 0.0, %v4597
      %v4599 = vpop.f32.mrf.mxu0
      %v4600 = vadd.f32 0.0, %v4599
      %4601 = vmatprep.mubr.f32.mxu0 0.0
      %4602 = vmatmul.mubr.f32.gmra.mxu0 %v4296
      %v4603 = vpop.f32.mrf.mxu0
      %v4604 = vadd.f32 0.0, %v4603
      %v4605 = vpop.f32.mrf.mxu0
      %v4606 = vadd.f32 0.0, %v4605
      %4607 = vmatprep.mubr.f32.mxu0 0.0
      %4608 = vmatmul.mubr.f32.gmra.mxu0 %v4299
      %v4609 = vpop.f32.mrf.mxu0
      %v4610 = vadd.f32 0.0, %v4609
      %v4611 = vpop.f32.mrf.mxu0
      %v4612 = vadd.f32 0.0, %v4611
      %4613 = vmatprep.mubr.f32.mxu0 0.0
      %4614 = vmatmul.mubr.f32.gmra.mxu0 %v4302
      %v4615 = vpop.f32.mrf.mxu0
      %v4616 = vadd.f32 0.0, %v4615
      %v4617 = vpop.f32.mrf.mxu0
      %v4618 = vadd.f32 0.0, %v4617
      %4619 = vmatprep.mubr.f32.mxu0 0.0
      %4620 = vmatmul.mubr.f32.gmra.mxu0 %v4305
      %v4621 = vpop.f32.mrf.mxu0
      %v4622 = vadd.f32 0.0, %v4621
      %v4623 = vpop.f32.mrf.mxu0
      %v4624 = vadd.f32 0.0, %v4623
      %4625 = vmatprep.mubr.f32.mxu0 0.0
      %4626 = vmatmul.mubr.f32.gmra.mxu0 %v4308
      %v4627 = vpop.f32.mrf.mxu0
      %v4628 = vadd.f32 0.0, %v4627
      %v4629 = vpop.f32.mrf.mxu0
      %v4630 = vadd.f32 0.0, %v4629
      %4631 = vdwg.mxu0
      %v4632 = vmul.f32 %v4377, %v2184
      %v4633 = vmul.f32 %v4379, %v2665
      %v4634 = vmul.f32 %v4538, %v2667
      %v4635 = vmul.f32 %v4540, %v3148
      %v4636 = vmul.f32 %v4383, %v2190
      %v4637 = vmul.f32 %v4385, %v2671
      %v4638 = vmul.f32 %v4544, %v2673
      %v4639 = vmul.f32 %v4546, %v3154
      %v4640 = vmul.f32 %v4389, %v2196
      %v4641 = vmul.f32 %v4391, %v2677
      %v4642 = vmul.f32 %v4550, %v2679
      %v4643 = vmul.f32 %v4552, %v3160
      %v4644 = vmul.f32 %v4395, %v2202
      %v4645 = vmul.f32 %v4397, %v2683
      %v4646 = vmul.f32 %v4556, %v2685
      %v4647 = vmul.f32 %v4558, %v3166
      %v4648 = vmul.f32 %v4401, %v2208
      %v4649 = vmul.f32 %v4403, %v2689
      %v4650 = vmul.f32 %v4562, %v2691
      %v4651 = vmul.f32 %v4564, %v3172
      %v4652 = vmul.f32 %v4407, %v2214
      %v4653 = vmul.f32 %v4409, %v2695
      %v4654 = vmul.f32 %v4568, %v2697
      %v4655 = vmul.f32 %v4570, %v3178
      %v4656 = vmul.f32 %v4413, %v2220
      %v4657 = vmul.f32 %v4415, %v2701
      %v4658 = vmul.f32 %v4574, %v2703
      %v4659 = vmul.f32 %v4576, %v3184
      %v4660 = vmul.f32 %v4419, %v2226
      %v4661 = vmul.f32 %v4421, %v2707
      %v4662 = vmul.f32 %v4580, %v2709
      %v4663 = vmul.f32 %v4582, %v3190
      %v4664 = vmul.f32 %v4425, %v2232
      %v4665 = vmul.f32 %v4427, %v2713
      %v4666 = vmul.f32 %v4586, %v2715
      %v4667 = vmul.f32 %v4588, %v3196
      %v4668 = vmul.f32 %v4431, %v2238
      %v4669 = vmul.f32 %v4433, %v2719
      %v4670 = vmul.f32 %v4592, %v2721
      %v4671 = vmul.f32 %v4594, %v3202
      %v4672 = vmul.f32 %v4437, %v2244
      %v4673 = vmul.f32 %v4439, %v2725
      %v4674 = vmul.f32 %v4598, %v2727
      %v4675 = vmul.f32 %v4600, %v3208
      %v4676 = vmul.f32 %v4443, %v2250
      %v4677 = vmul.f32 %v4445, %v2731
      %v4678 = vmul.f32 %v4604, %v2733
      %v4679 = vmul.f32 %v4606, %v3214
      %v4680 = vmul.f32 %v4449, %v2256
      %v4681 = vmul.f32 %v4451, %v2737
      %v4682 = vmul.f32 %v4610, %v2739
      %v4683 = vmul.f32 %v4612, %v3220
      %v4684 = vmul.f32 %v4455, %v2262
      %v4685 = vmul.f32 %v4457, %v2743
      %v4686 = vmul.f32 %v4616, %v2745
      %v4687 = vmul.f32 %v4618, %v3226
      %v4688 = vmul.f32 %v4461, %v2268
      %v4689 = vmul.f32 %v4463, %v2749
      %v4690 = vmul.f32 %v4622, %v2751
      %v4691 = vmul.f32 %v4624, %v3232
      %v4692 = vmul.f32 %v4467, %v2274
      %v4693 = vmul.f32 %v4469, %v2755
      %v4694 = vmul.f32 %v4628, %v2757
      %v4695 = vmul.f32 %v4630, %v3238
      %4696 = vmatprep.subr.mxu0 %v4693
      %4697 = vmatpush1.msra.mxu0 %v4692
      %4698 = vmatprep.subr.mxu0 %v4689
      %4699 = vmatpush1.msra.mxu0 %v4688
      %4700 = vmatprep.subr.mxu0 %v4685
      %4701 = vmatpush1.msra.mxu0 %v4684
      %4702 = vmatprep.subr.mxu0 %v4681
      %4703 = vmatpush1.msra.mxu0 %v4680
      %4704 = vmatprep.subr.mxu0 %v4677
      %4705 = vmatpush1.msra.mxu0 %v4676
      %4706 = vmatprep.subr.mxu0 %v4673
      %4707 = vmatpush1.msra.mxu0 %v4672
      %4708 = vmatprep.subr.mxu0 %v4669
      %4709 = vmatpush1.msra.mxu0 %v4668
      %4710 = vmatprep.subr.mxu0 %v4665
      %4711 = vmatpush1.msra.mxu0 %v4664
      %4712 = vmatprep.subr.mxu0 %v4661
      %4713 = vmatpush1.msra.mxu0 %v4660
      %4714 = vmatprep.subr.mxu0 %v4657
      %4715 = vmatpush1.msra.mxu0 %v4656
      %4716 = vmatprep.subr.mxu0 %v4653
      %4717 = vmatpush1.msra.mxu0 %v4652
      %4718 = vmatprep.subr.mxu0 %v4649
      %4719 = vmatpush1.msra.mxu0 %v4648
      %4720 = vmatprep.subr.mxu0 %v4645
      %4721 = vmatpush1.msra.mxu0 %v4644
      %4722 = vmatprep.subr.mxu0 %v4641
      %4723 = vmatpush1.msra.mxu0 %v4640
      %4724 = vmatprep.subr.mxu0 %v4637
      %4725 = vmatpush1.msra.mxu0 %v4636
      %4726 = vmatprep.subr.mxu0 %v4633
      %4727 = vmatpush1.msra.mxu0 %v4632
      %4728 = vmatprep.subr.mxu0 0.0
      %4729 = vmatpush2.msra.mxu0 0.0
      %4730 = vmatprep.subr.mxu0 0.0
      %4731 = vmatpush2.msra.mxu0 0.0
      %4732 = vmatprep.subr.mxu0 0.0
      %4733 = vmatpush2.msra.mxu0 0.0
      %4734 = vmatprep.subr.mxu0 0.0
      %4735 = vmatpush2.msra.mxu0 0.0
      %4736 = vmatprep.subr.mxu0 0.0
      %4737 = vmatpush2.msra.mxu0 0.0
      %4738 = vmatprep.subr.mxu0 0.0
      %4739 = vmatpush2.msra.mxu0 0.0
      %4740 = vmatprep.subr.mxu0 0.0
      %4741 = vmatpush2.msra.mxu0 0.0
      %4742 = vmatprep.subr.mxu0 0.0
      %4743 = vmatpush2.msra.mxu0 0.0
      %4744 = vmatprep.subr.mxu0 0.0
      %4745 = vmatpush2.msra.mxu0 0.0
      %4746 = vmatprep.subr.mxu0 0.0
      %4747 = vmatpush2.msra.mxu0 0.0
      %4748 = vmatprep.subr.mxu0 0.0
      %4749 = vmatpush2.msra.mxu0 0.0
      %4750 = vmatprep.subr.mxu0 0.0
      %4751 = vmatpush2.msra.mxu0 0.0
      %4752 = vmatprep.subr.mxu0 0.0
      %4753 = vmatpush2.msra.mxu0 0.0
      %4754 = vmatprep.subr.mxu0 0.0
      %4755 = vmatpush2.msra.mxu0 0.0
      %4756 = vmatprep.subr.mxu0 0.0
      %4757 = vmatpush2.msra.mxu0 0.0
      %4758 = vmatprep.subr.mxu0 0.0
      %4759 = vmatpush2.msra.mxu0 0.0
      %4760 = vmatprep.mubr.f32.mxu0 0.0
      %4761 = vmatmul.mubr.f32.gmra.mxu0 %v513
      %v4762 = vpop.f32.mrf.mxu0
      %v4763 = vadd.f32 0.0, %v4762
      %v4764 = vpop.f32.mrf.mxu0
      %v4765 = vadd.f32 0.0, %v4764
      %4766 = vmatprep.mubr.f32.mxu0 0.0
      %4767 = vmatmul.mubr.f32.gmra.mxu0 %v515
      %v4768 = vpop.f32.mrf.mxu0
      %v4769 = vadd.f32 0.0, %v4768
      %v4770 = vpop.f32.mrf.mxu0
      %v4771 = vadd.f32 0.0, %v4770
      %4772 = vdwg.mxu0
      %4773 = vmatprep.subr.mxu0 %v4695
      %4774 = vmatpush1.msra.mxu0 %v4694
      %4775 = vmatprep.subr.mxu0 %v4691
      %4776 = vmatpush1.msra.mxu0 %v4690
      %4777 = vmatprep.subr.mxu0 %v4687
      %4778 = vmatpush1.msra.mxu0 %v4686
      %4779 = vmatprep.subr.mxu0 %v4683
      %4780 = vmatpush1.msra.mxu0 %v4682
      %4781 = vmatprep.subr.mxu0 %v4679
      %4782 = vmatpush1.msra.mxu0 %v4678
      %4783 = vmatprep.subr.mxu0 %v4675
      %4784 = vmatpush1.msra.mxu0 %v4674
      %4785 = vmatprep.subr.mxu0 %v4671
      %4786 = vmatpush1.msra.mxu0 %v4670
      %4787 = vmatprep.subr.mxu0 %v4667
      %4788 = vmatpush1.msra.mxu0 %v4666
      %4789 = vmatprep.subr.mxu0 %v4663
      %4790 = vmatpush1.msra.mxu0 %v4662
      %4791 = vmatprep.subr.mxu0 %v4659
      %4792 = vmatpush1.msra.mxu0 %v4658
      %4793 = vmatprep.subr.mxu0 %v4655
      %4794 = vmatpush1.msra.mxu0 %v4654
      %4795 = vmatprep.subr.mxu0 %v4651
      %4796 = vmatpush1.msra.mxu0 %v4650
      %4797 = vmatprep.subr.mxu0 %v4647
      %4798 = vmatpush1.msra.mxu0 %v4646
      %4799 = vmatprep.subr.mxu0 %v4643
      %4800 = vmatpush1.msra.mxu0 %v4642
      %4801 = vmatprep.subr.mxu0 %v4639
      %4802 = vmatpush1.msra.mxu0 %v4638
      %4803 = vmatprep.subr.mxu0 %v4635
      %4804 = vmatpush1.msra.mxu0 %v4634
      %4805 = vmatprep.subr.mxu0 0.0
      %4806 = vmatpush2.msra.mxu0 0.0
      %4807 = vmatprep.subr.mxu0 0.0
      %4808 = vmatpush2.msra.mxu0 0.0
      %4809 = vmatprep.subr.mxu0 0.0
      %4810 = vmatpush2.msra.mxu0 0.0
      %4811 = vmatprep.subr.mxu0 0.0
      %4812 = vmatpush2.msra.mxu0 0.0
      %4813 = vmatprep.subr.mxu0 0.0
      %4814 = vmatpush2.msra.mxu0 0.0
      %4815 = vmatprep.subr.mxu0 0.0
      %4816 = vmatpush2.msra.mxu0 0.0
      %4817 = vmatprep.subr.mxu0 0.0
      %4818 = vmatpush2.msra.mxu0 0.0
      %4819 = vmatprep.subr.mxu0 0.0
      %4820 = vmatpush2.msra.mxu0 0.0
      %4821 = vmatprep.subr.mxu0 0.0
      %4822 = vmatpush2.msra.mxu0 0.0
      %4823 = vmatprep.subr.mxu0 0.0
      %4824 = vmatpush2.msra.mxu0 0.0
      %4825 = vmatprep.subr.mxu0 0.0
      %4826 = vmatpush2.msra.mxu0 0.0
      %4827 = vmatprep.subr.mxu0 0.0
      %4828 = vmatpush2.msra.mxu0 0.0
      %4829 = vmatprep.subr.mxu0 0.0
      %4830 = vmatpush2.msra.mxu0 0.0
      %4831 = vmatprep.subr.mxu0 0.0
      %4832 = vmatpush2.msra.mxu0 0.0
      %4833 = vmatprep.subr.mxu0 0.0
      %4834 = vmatpush2.msra.mxu0 0.0
      %4835 = vmatprep.subr.mxu0 0.0
      %4836 = vmatpush2.msra.mxu0 0.0
      %4837 = vmatprep.mubr.f32.mxu0 0.0
      %4838 = vmatmul.mubr.f32.gmra.mxu0 %v513
      %v4839 = vpop.f32.mrf.mxu0
      %v4840 = vadd.f32 0.0, %v4839
      %v4841 = vpop.f32.mrf.mxu0
      %v4842 = vadd.f32 0.0, %v4841
      %4843 = vmatprep.mubr.f32.mxu0 0.0
      %4844 = vmatmul.mubr.f32.gmra.mxu0 %v515
      %v4845 = vpop.f32.mrf.mxu0
      %v4846 = vadd.f32 0.0, %v4845
      %v4847 = vpop.f32.mrf.mxu0
      %v4848 = vadd.f32 0.0, %v4847
      %4849 = vdwg.mxu0
      %4853 = vrot.lane.b32.xlu0 %v3242, 96
      %v4854 = vpop.permute.xlu0 %4853
      %4855 = vrot.lane.b32.xlu0 %v3244, 96
      %v4856 = vpop.permute.xlu0 %4855
      %4857 = vrot.lane.b32.xlu0 %v3246, 96
      %v4858 = vpop.permute.xlu0 %4857
      %4859 = vrot.lane.b32.xlu0 %v3247, 96
      %v4860 = vpop.permute.xlu0 %4859
      %v4866 = vsel %vm4261, %v4018, 0
      %v4869 = vsel %vm4261, %v4019, 0
      %4871 = vmatprep.subr.mxu0 0.0
      %4872 = vmatpush1.msra.mxu0 0.0
      %4873 = vmatprep.subr.mxu0 0.0
      %4874 = vmatpush1.msra.mxu0 0.0
      %4875 = vmatprep.subr.mxu0 0.0
      %4876 = vmatpush1.msra.mxu0 0.0
      %4877 = vmatprep.subr.mxu0 0.0
      %4878 = vmatpush1.msra.mxu0 0.0
      %4879 = vmatprep.subr.mxu0 0.0
      %4880 = vmatpush1.msra.mxu0 0.0
      %4881 = vmatprep.subr.mxu0 0.0
      %4882 = vmatpush1.msra.mxu0 0.0
      %4883 = vmatprep.subr.mxu0 0.0
      %4884 = vmatpush1.msra.mxu0 0.0
      %4885 = vmatprep.subr.mxu0 0.0
      %4886 = vmatpush1.msra.mxu0 0.0
      %4887 = vmatprep.subr.mxu0 0.0
      %4888 = vmatpush1.msra.mxu0 0.0
      %4889 = vmatprep.subr.mxu0 0.0
      %4890 = vmatpush1.msra.mxu0 0.0
      %4891 = vmatprep.subr.mxu0 0.0
      %4892 = vmatpush1.msra.mxu0 0.0
      %4893 = vmatprep.subr.mxu0 0.0
      %4894 = vmatpush1.msra.mxu0 0.0
      %4895 = vmatprep.subr.mxu0 0.0
      %4896 = vmatpush1.msra.mxu0 %v4860
      %4897 = vmatprep.subr.mxu0 0.0
      %4898 = vmatpush1.msra.mxu0 %v4858
      %4899 = vmatprep.subr.mxu0 0.0
      %4900 = vmatpush1.msra.mxu0 %v4856
      %4901 = vmatprep.subr.mxu0 0.0
      %4902 = vmatpush1.msra.mxu0 %v4854
      %4903 = vmatprep.subr.mxu0 0.0
      %4904 = vmatpush2.msra.mxu0 0.0
      %4905 = vmatprep.subr.mxu0 0.0
      %4906 = vmatpush2.msra.mxu0 0.0
      %4907 = vmatprep.subr.mxu0 0.0
      %4908 = vmatpush2.msra.mxu0 0.0
      %4909 = vmatprep.subr.mxu0 0.0
      %4910 = vmatpush2.msra.mxu0 0.0
      %4911 = vmatprep.subr.mxu0 0.0
      %4912 = vmatpush2.msra.mxu0 0.0
      %4913 = vmatprep.subr.mxu0 0.0
      %4914 = vmatpush2.msra.mxu0 0.0
      %4915 = vmatprep.subr.mxu0 0.0
      %4916 = vmatpush2.msra.mxu0 0.0
      %4917 = vmatprep.subr.mxu0 0.0
      %4918 = vmatpush2.msra.mxu0 0.0
      %4919 = vmatprep.subr.mxu0 0.0
      %4920 = vmatpush2.msra.mxu0 0.0
      %4921 = vmatprep.subr.mxu0 0.0
      %4922 = vmatpush2.msra.mxu0 0.0
      %4923 = vmatprep.subr.mxu0 0.0
      %4924 = vmatpush2.msra.mxu0 0.0
      %4925 = vmatprep.subr.mxu0 0.0
      %4926 = vmatpush2.msra.mxu0 0.0
      %4927 = vmatprep.subr.mxu0 0.0
      %4928 = vmatpush2.msra.mxu0 0.0
      %4929 = vmatprep.subr.mxu0 0.0
      %4930 = vmatpush2.msra.mxu0 0.0
      %4931 = vmatprep.subr.mxu0 0.0
      %4932 = vmatpush2.msra.mxu0 0.0
      %4933 = vmatprep.subr.mxu0 0.0
      %4934 = vmatpush2.msra.mxu0 0.0
      %4935 = vmatprep.mubr.f32.mxu0 0.0
      %4936 = vmatmul.mubr.f32.gmra.mxu0 %v4866
      %v4937 = vpop.f32.mrf.mxu0
      %v4938 = vadd.f32 0.0, %v4937
      %v4939 = vpop.f32.mrf.mxu0
      %4940 = vmatprep.mubr.f32.mxu0 0.0
      %4941 = vmatmul.mubr.f32.gmra.mxu0 %v4869
      %v4942 = vpop.f32.mrf.mxu0
      %v4943 = vadd.f32 0.0, %v4942
      %v4944 = vpop.f32.mrf.mxu0
      %4945 = vdwg.mxu0
      %5010 = vrot.lane.b32.xlu0 %v3266, 96
      %v5011 = vpop.permute.xlu0 %5010
      %5012 = vrot.lane.b32.xlu0 %v3267, 96
      %v5013 = vpop.permute.xlu0 %5012
      %5014 = vrot.lane.b32.xlu0 %v3268, 96
      %v5015 = vpop.permute.xlu0 %5014
      %5016 = vrot.lane.b32.xlu0 %v3269, 96
      %v5017 = vpop.permute.xlu0 %5016
      %5018 = vrot.lane.b32.xlu0 %v3270, 96
      %v5019 = vpop.permute.xlu0 %5018
      %5020 = vrot.lane.b32.xlu0 %v3271, 96
      %v5021 = vpop.permute.xlu0 %5020
      %5022 = vrot.lane.b32.xlu0 %v3272, 96
      %v5023 = vpop.permute.xlu0 %5022
      %5024 = vrot.lane.b32.xlu0 %v3273, 96
      %v5025 = vpop.permute.xlu0 %5024
      %5026 = vrot.lane.b32.xlu0 %v3274, 96
      %v5027 = vpop.permute.xlu0 %5026
      %5028 = vrot.lane.b32.xlu0 %v3275, 96
      %v5029 = vpop.permute.xlu0 %5028
      %5030 = vrot.lane.b32.xlu0 %v3276, 96
      %v5031 = vpop.permute.xlu0 %5030
      %5032 = vrot.lane.b32.xlu0 %v3277, 96
      %v5033 = vpop.permute.xlu0 %5032
      %5034 = vrot.lane.b32.xlu0 %v3278, 96
      %v5035 = vpop.permute.xlu0 %5034
      %5036 = vrot.lane.b32.xlu0 %v3279, 96
      %v5037 = vpop.permute.xlu0 %5036
      %5038 = vrot.lane.b32.xlu0 %v3280, 96
      %v5039 = vpop.permute.xlu0 %5038
      %5040 = vrot.lane.b32.xlu0 %v3281, 96
      %v5041 = vpop.permute.xlu0 %5040
      %5042 = vrot.lane.b32.xlu0 %v3282, 96
      %v5043 = vpop.permute.xlu0 %5042
      %5044 = vrot.lane.b32.xlu0 %v3283, 96
      %v5045 = vpop.permute.xlu0 %5044
      %5046 = vrot.lane.b32.xlu0 %v3284, 96
      %v5047 = vpop.permute.xlu0 %5046
      %5048 = vrot.lane.b32.xlu0 %v3285, 96
      %v5049 = vpop.permute.xlu0 %5048
      %5050 = vrot.lane.b32.xlu0 %v3286, 96
      %v5051 = vpop.permute.xlu0 %5050
      %5052 = vrot.lane.b32.xlu0 %v3287, 96
      %v5053 = vpop.permute.xlu0 %5052
      %5054 = vrot.lane.b32.xlu0 %v3288, 96
      %v5055 = vpop.permute.xlu0 %5054
      %5056 = vrot.lane.b32.xlu0 %v3289, 96
      %v5057 = vpop.permute.xlu0 %5056
      %5058 = vrot.lane.b32.xlu0 %v3290, 96
      %v5059 = vpop.permute.xlu0 %5058
      %5060 = vrot.lane.b32.xlu0 %v3291, 96
      %v5061 = vpop.permute.xlu0 %5060
      %5062 = vrot.lane.b32.xlu0 %v3292, 96
      %v5063 = vpop.permute.xlu0 %5062
      %5064 = vrot.lane.b32.xlu0 %v3293, 96
      %v5065 = vpop.permute.xlu0 %5064
      %5066 = vrot.lane.b32.xlu0 %v3294, 96
      %v5067 = vpop.permute.xlu0 %5066
      %5068 = vrot.lane.b32.xlu0 %v3295, 96
      %v5069 = vpop.permute.xlu0 %5068
      %5070 = vrot.lane.b32.xlu0 %v3296, 96
      %v5071 = vpop.permute.xlu0 %5070
      %5072 = vrot.lane.b32.xlu0 %v3297, 96
      %v5073 = vpop.permute.xlu0 %5072
      %5074 = vrot.lane.b32.xlu0 %v3298, 96
      %v5075 = vpop.permute.xlu0 %5074
      %5076 = vrot.lane.b32.xlu0 %v3299, 96
      %v5077 = vpop.permute.xlu0 %5076
      %5078 = vrot.lane.b32.xlu0 %v3300, 96
      %v5079 = vpop.permute.xlu0 %5078
      %5080 = vrot.lane.b32.xlu0 %v3301, 96
      %v5081 = vpop.permute.xlu0 %5080
      %5082 = vrot.lane.b32.xlu0 %v3302, 96
      %v5083 = vpop.permute.xlu0 %5082
      %5084 = vrot.lane.b32.xlu0 %v3303, 96
      %v5085 = vpop.permute.xlu0 %5084
      %5086 = vrot.lane.b32.xlu0 %v3304, 96
      %v5087 = vpop.permute.xlu0 %5086
      %5088 = vrot.lane.b32.xlu0 %v3305, 96
      %v5089 = vpop.permute.xlu0 %5088
      %5090 = vrot.lane.b32.xlu0 %v3306, 96
      %v5091 = vpop.permute.xlu0 %5090
      %5092 = vrot.lane.b32.xlu0 %v3307, 96
      %v5093 = vpop.permute.xlu0 %5092
      %5094 = vrot.lane.b32.xlu0 %v3308, 96
      %v5095 = vpop.permute.xlu0 %5094
      %5096 = vrot.lane.b32.xlu0 %v3309, 96
      %v5097 = vpop.permute.xlu0 %5096
      %5098 = vrot.lane.b32.xlu0 %v3310, 96
      %v5099 = vpop.permute.xlu0 %5098
      %5100 = vrot.lane.b32.xlu0 %v3311, 96
      %v5101 = vpop.permute.xlu0 %5100
      %5102 = vrot.lane.b32.xlu0 %v3312, 96
      %v5103 = vpop.permute.xlu0 %5102
      %5104 = vrot.lane.b32.xlu0 %v3313, 96
      %v5105 = vpop.permute.xlu0 %5104
      %5106 = vrot.lane.b32.xlu0 %v3314, 96
      %v5107 = vpop.permute.xlu0 %5106
      %5108 = vrot.lane.b32.xlu0 %v3315, 96
      %v5109 = vpop.permute.xlu0 %5108
      %5110 = vrot.lane.b32.xlu0 %v3316, 96
      %v5111 = vpop.permute.xlu0 %5110
      %5112 = vrot.lane.b32.xlu0 %v3317, 96
      %v5113 = vpop.permute.xlu0 %5112
      %5114 = vrot.lane.b32.xlu0 %v3318, 96
      %v5115 = vpop.permute.xlu0 %5114
      %5116 = vrot.lane.b32.xlu0 %v3319, 96
      %v5117 = vpop.permute.xlu0 %5116
      %5118 = vrot.lane.b32.xlu0 %v3320, 96
      %v5119 = vpop.permute.xlu0 %5118
      %5120 = vrot.lane.b32.xlu0 %v3321, 96
      %v5121 = vpop.permute.xlu0 %5120
      %5122 = vrot.lane.b32.xlu0 %v3322, 96
      %v5123 = vpop.permute.xlu0 %5122
      %5124 = vrot.lane.b32.xlu0 %v3323, 96
      %v5125 = vpop.permute.xlu0 %5124
      %5126 = vrot.lane.b32.xlu0 %v3324, 96
      %v5127 = vpop.permute.xlu0 %5126
      %5128 = vrot.lane.b32.xlu0 %v3325, 96
      %v5129 = vpop.permute.xlu0 %5128
      %5130 = vrot.lane.b32.xlu0 %v3326, 96
      %v5131 = vpop.permute.xlu0 %5130
      %5132 = vrot.lane.b32.xlu0 %v3327, 96
      %v5133 = vpop.permute.xlu0 %5132
      %5134 = vrot.lane.b32.xlu0 %v3328, 96
      %v5135 = vpop.permute.xlu0 %5134
      %5136 = vrot.lane.b32.xlu0 %v3329, 96
      %v5137 = vpop.permute.xlu0 %5136
      %5202 = vmatprep.subr.mxu0 0.0
      %5203 = vmatpush1.msra.mxu0 %v5041
      %5204 = vmatprep.subr.mxu0 0.0
      %5205 = vmatpush1.msra.mxu0 %v5039
      %5206 = vmatprep.subr.mxu0 0.0
      %5207 = vmatpush1.msra.mxu0 %v5037
      %5208 = vmatprep.subr.mxu0 0.0
      %5209 = vmatpush1.msra.mxu0 %v5035
      %5210 = vmatprep.subr.mxu0 0.0
      %5211 = vmatpush1.msra.mxu0 %v5033
      %5212 = vmatprep.subr.mxu0 0.0
      %5213 = vmatpush1.msra.mxu0 %v5031
      %5214 = vmatprep.subr.mxu0 0.0
      %5215 = vmatpush1.msra.mxu0 %v5029
      %5216 = vmatprep.subr.mxu0 0.0
      %5217 = vmatpush1.msra.mxu0 %v5027
      %5218 = vmatprep.subr.mxu0 0.0
      %5219 = vmatpush1.msra.mxu0 %v5025
      %5220 = vmatprep.subr.mxu0 0.0
      %5221 = vmatpush1.msra.mxu0 %v5023
      %5222 = vmatprep.subr.mxu0 0.0
      %5223 = vmatpush1.msra.mxu0 %v5021
      %5224 = vmatprep.subr.mxu0 0.0
      %5225 = vmatpush1.msra.mxu0 %v5019
      %5226 = vmatprep.subr.mxu0 0.0
      %5227 = vmatpush1.msra.mxu0 %v5017
      %5228 = vmatprep.subr.mxu0 0.0
      %5229 = vmatpush1.msra.mxu0 %v5015
      %5230 = vmatprep.subr.mxu0 0.0
      %5231 = vmatpush1.msra.mxu0 %v5013
      %5232 = vmatprep.subr.mxu0 0.0
      %5233 = vmatpush1.msra.mxu0 %v5011
      %5234 = vmatprep.subr.mxu0 0.0
      %5235 = vmatpush2.msra.mxu0 %v5073
      %5236 = vmatprep.subr.mxu0 0.0
      %5237 = vmatpush2.msra.mxu0 %v5071
      %5238 = vmatprep.subr.mxu0 0.0
      %5239 = vmatpush2.msra.mxu0 %v5069
      %5240 = vmatprep.subr.mxu0 0.0
      %5241 = vmatpush2.msra.mxu0 %v5067
      %5242 = vmatprep.subr.mxu0 0.0
      %5243 = vmatpush2.msra.mxu0 %v5065
      %5244 = vmatprep.subr.mxu0 0.0
      %5245 = vmatpush2.msra.mxu0 %v5063
      %5246 = vmatprep.subr.mxu0 0.0
      %5247 = vmatpush2.msra.mxu0 %v5061
      %5248 = vmatprep.subr.mxu0 0.0
      %5249 = vmatpush2.msra.mxu0 %v5059
      %5250 = vmatprep.subr.mxu0 0.0
      %5251 = vmatpush2.msra.mxu0 %v5057
      %5252 = vmatprep.subr.mxu0 0.0
      %5253 = vmatpush2.msra.mxu0 %v5055
      %5254 = vmatprep.subr.mxu0 0.0
      %5255 = vmatpush2.msra.mxu0 %v5053
      %5256 = vmatprep.subr.mxu0 0.0
      %5257 = vmatpush2.msra.mxu0 %v5051
      %5258 = vmatprep.subr.mxu0 0.0
      %5259 = vmatpush2.msra.mxu0 %v5049
      %5260 = vmatprep.subr.mxu0 0.0
      %5261 = vmatpush2.msra.mxu0 %v5047
      %5262 = vmatprep.subr.mxu0 0.0
      %5263 = vmatpush2.msra.mxu0 %v5045
      %5264 = vmatprep.subr.mxu0 0.0
      %5265 = vmatpush2.msra.mxu0 %v5043
      %5266 = vmatprep.mubr.f32.mxu0 %v4765
      %5267 = vmatmul.mubr.f32.gmra.mxu0 %v4763
      %v5268 = vpop.f32.mrf.mxu0
      %v5269 = vadd.f32 %v4938, %v5268
      %v5270 = vpop.f32.mrf.mxu0
      %5271 = vmatprep.mubr.f32.mxu0 %v4771
      %5272 = vmatmul.mubr.f32.gmra.mxu0 %v4769
      %v5273 = vpop.f32.mrf.mxu0
      %v5274 = vadd.f32 %v4943, %v5273
      %v5275 = vpop.f32.mrf.mxu0
      %5276 = vdwg.mxu0
      %5277 = vmatprep.subr.mxu0 0.0
      %5278 = vmatpush1.msra.mxu0 %v5105
      %5279 = vmatprep.subr.mxu0 0.0
      %5280 = vmatpush1.msra.mxu0 %v5103
      %5281 = vmatprep.subr.mxu0 0.0
      %5282 = vmatpush1.msra.mxu0 %v5101
      %5283 = vmatprep.subr.mxu0 0.0
      %5284 = vmatpush1.msra.mxu0 %v5099
      %5285 = vmatprep.subr.mxu0 0.0
      %5286 = vmatpush1.msra.mxu0 %v5097
      %5287 = vmatprep.subr.mxu0 0.0
      %5288 = vmatpush1.msra.mxu0 %v5095
      %5289 = vmatprep.subr.mxu0 0.0
      %5290 = vmatpush1.msra.mxu0 %v5093
      %5291 = vmatprep.subr.mxu0 0.0
      %5292 = vmatpush1.msra.mxu0 %v5091
      %5293 = vmatprep.subr.mxu0 0.0
      %5294 = vmatpush1.msra.mxu0 %v5089
      %5295 = vmatprep.subr.mxu0 0.0
      %5296 = vmatpush1.msra.mxu0 %v5087
      %5297 = vmatprep.subr.mxu0 0.0
      %5298 = vmatpush1.msra.mxu0 %v5085
      %5299 = vmatprep.subr.mxu0 0.0
      %5300 = vmatpush1.msra.mxu0 %v5083
      %5301 = vmatprep.subr.mxu0 0.0
      %5302 = vmatpush1.msra.mxu0 %v5081
      %5303 = vmatprep.subr.mxu0 0.0
      %5304 = vmatpush1.msra.mxu0 %v5079
      %5305 = vmatprep.subr.mxu0 0.0
      %5306 = vmatpush1.msra.mxu0 %v5077
      %5307 = vmatprep.subr.mxu0 0.0
      %5308 = vmatpush1.msra.mxu0 %v5075
      %5309 = vmatprep.subr.mxu0 0.0
      %5310 = vmatpush2.msra.mxu0 %v5137
      %5311 = vmatprep.subr.mxu0 0.0
      %5312 = vmatpush2.msra.mxu0 %v5135
      %5313 = vmatprep.subr.mxu0 0.0
      %5314 = vmatpush2.msra.mxu0 %v5133
      %5315 = vmatprep.subr.mxu0 0.0
      %5316 = vmatpush2.msra.mxu0 %v5131
      %5317 = vmatprep.subr.mxu0 0.0
      %5318 = vmatpush2.msra.mxu0 %v5129
      %5319 = vmatprep.subr.mxu0 0.0
      %5320 = vmatpush2.msra.mxu0 %v5127
      %5321 = vmatprep.subr.mxu0 0.0
      %5322 = vmatpush2.msra.mxu0 %v5125
      %5323 = vmatprep.subr.mxu0 0.0
      %5324 = vmatpush2.msra.mxu0 %v5123
      %5325 = vmatprep.subr.mxu0 0.0
      %5326 = vmatpush2.msra.mxu0 %v5121
      %5327 = vmatprep.subr.mxu0 0.0
      %5328 = vmatpush2.msra.mxu0 %v5119
      %5329 = vmatprep.subr.mxu0 0.0
      %5330 = vmatpush2.msra.mxu0 %v5117
      %5331 = vmatprep.subr.mxu0 0.0
      %5332 = vmatpush2.msra.mxu0 %v5115
      %5333 = vmatprep.subr.mxu0 0.0
      %5334 = vmatpush2.msra.mxu0 %v5113
      %5335 = vmatprep.subr.mxu0 0.0
      %5336 = vmatpush2.msra.mxu0 %v5111
      %5337 = vmatprep.subr.mxu0 0.0
      %5338 = vmatpush2.msra.mxu0 %v5109
      %5339 = vmatprep.subr.mxu0 0.0
      %5340 = vmatpush2.msra.mxu0 %v5107
      %5341 = vmatprep.mubr.f32.mxu0 %v4842
      %5342 = vmatmul.mubr.f32.gmra.mxu0 %v4840
      %v5343 = vpop.f32.mrf.mxu0
      %v5344 = vadd.f32 %v5269, %v5343
      %v5345 = vpop.f32.mrf.mxu0
      %5346 = vmatprep.mubr.f32.mxu0 %v4848
      %5347 = vmatmul.mubr.f32.gmra.mxu0 %v4846
      %v5348 = vpop.f32.mrf.mxu0
      %v5349 = vadd.f32 %v5274, %v5348
      %v5350 = vpop.f32.mrf.mxu0
      %5351 = vdwg.mxu0
      %5353 = vrot.lane.b32.xlu0 %v4015, 96
      %v5354 = vpop.permute.xlu0 %5353
      %v5356 = vadd.f32 %v5344, %v5354
      %v5357 = vadd.f32 %v5349, %v5354
      %v5358 = vmax.f32 %v5356, 0.0
      %v5359 = vmax.f32 %v5357, 0.0
      %v5360 = vmul.u32 %v494, 8
      %v5361 = vmul.u32 %v495, 8
      %vm5362 = vcmp.ge.s32.totalorder %v396, %v5360
      %vm5363 = vcmp.ge.s32.totalorder %v396, %v5361
      %v5364 = vmul.u32 %v3364, 8
      %v5365 = vmul.u32 %v4045, 8
      %vm5366 = vcmp.lt.s32.totalorder %v396, %v5364
      %vm5367 = vcmp.lt.s32.totalorder %v396, %v5365
      %vm5368 = vmand %vm5362, %vm5366
      %vm5369 = vmand %vm5363, %vm5367
      %v5370 = vsel %vm5368, 1, 0
      %v5371 = vsel %vm5369, 1, 0
      %v5372 = vcvt.s32.f32 %v5370
      %v5373 = vcvt.s32.f32 %v5371
      %5374 = vmatprep.subr.mxu0 0.0
      %5375 = vmatpush1.msra.mxu0 0.0
      %5376 = vmatprep.subr.mxu0 0.0
      %5377 = vmatpush1.msra.mxu0 0.0
      %5378 = vmatprep.subr.mxu0 0.0
      %5379 = vmatpush1.msra.mxu0 0.0
      %5380 = vmatprep.subr.mxu0 0.0
      %5381 = vmatpush1.msra.mxu0 0.0
      %5382 = vmatprep.subr.mxu0 0.0
      %5383 = vmatpush1.msra.mxu0 0.0
      %5384 = vmatprep.subr.mxu0 0.0
      %5385 = vmatpush1.msra.mxu0 0.0
      %5386 = vmatprep.subr.mxu0 0.0
      %5387 = vmatpush1.msra.mxu0 0.0
      %5388 = vmatprep.subr.mxu0 0.0
      %5389 = vmatpush1.msra.mxu0 0.0
      %5390 = vmatprep.subr.mxu0 0.0
      %5391 = vmatpush1.msra.mxu0 0.0
      %5392 = vmatprep.subr.mxu0 0.0
      %5393 = vmatpush1.msra.mxu0 0.0
      %5394 = vmatprep.subr.mxu0 0.0
      %5395 = vmatpush1.msra.mxu0 0.0
      %5396 = vmatprep.subr.mxu0 0.0
      %5397 = vmatpush1.msra.mxu0 0.0
      %5398 = vmatprep.subr.mxu0 0.0
      %5399 = vmatpush1.msra.mxu0 0.0
      %5400 = vmatprep.subr.mxu0 0.0
      %5401 = vmatpush1.msra.mxu0 0.0
      %5402 = vmatprep.subr.mxu0 0.0
      %5403 = vmatpush1.msra.mxu0 %v5359
      %5404 = vmatprep.subr.mxu0 0.0
      %5405 = vmatpush1.msra.mxu0 %v5358
      %5406 = vmatprep.subr.mxu0 0.0
      %5407 = vmatpush2.msra.mxu0 0.0
      %5408 = vmatprep.subr.mxu0 0.0
      %5409 = vmatpush2.msra.mxu0 0.0
      %5410 = vmatprep.subr.mxu0 0.0
      %5411 = vmatpush2.msra.mxu0 0.0
      %5412 = vmatprep.subr.mxu0 0.0
      %5413 = vmatpush2.msra.mxu0 0.0
      %5414 = vmatprep.subr.mxu0 0.0
      %5415 = vmatpush2.msra.mxu0 0.0
      %5416 = vmatprep.subr.mxu0 0.0
      %5417 = vmatpush2.msra.mxu0 0.0
      %5418 = vmatprep.subr.mxu0 0.0
      %5419 = vmatpush2.msra.mxu0 0.0
      %5420 = vmatprep.subr.mxu0 0.0
      %5421 = vmatpush2.msra.mxu0 0.0
      %5422 = vmatprep.subr.mxu0 0.0
      %5423 = vmatpush2.msra.mxu0 0.0
      %5424 = vmatprep.subr.mxu0 0.0
      %5425 = vmatpush2.msra.mxu0 0.0
      %5426 = vmatprep.subr.mxu0 0.0
      %5427 = vmatpush2.msra.mxu0 0.0
      %5428 = vmatprep.subr.mxu0 0.0
      %5429 = vmatpush2.msra.mxu0 0.0
      %5430 = vmatprep.subr.mxu0 0.0
      %5431 = vmatpush2.msra.mxu0 0.0
      %5432 = vmatprep.subr.mxu0 0.0
      %5433 = vmatpush2.msra.mxu0 0.0
      %5434 = vmatprep.subr.mxu0 0.0
      %5435 = vmatpush2.msra.mxu0 0.0
      %5436 = vmatprep.subr.mxu0 0.0
      %5437 = vmatpush2.msra.mxu0 0.0
      %5438 = vmatprep.mubr.f32.mxu0 0.0
      %5439 = vmatmul.mubr.f32.gmra.mxu0 %v3372
      %v5440 = vpop.f32.mrf.mxu0
      %v5441 = vadd.f32 0.0, %v5440
      %v5442 = vpop.f32.mrf.mxu0
      %5443 = vmatprep.mubr.f32.mxu0 0.0
      %5444 = vmatmul.mubr.f32.gmra.mxu0 %v3375
      %v5445 = vpop.f32.mrf.mxu0
      %v5446 = vadd.f32 0.0, %v5445
      %v5447 = vpop.f32.mrf.mxu0
      %5448 = vmatprep.mubr.f32.mxu0 0.0
      %5449 = vmatmul.mubr.f32.gmra.mxu0 %v3378
      %v5450 = vpop.f32.mrf.mxu0
      %v5451 = vadd.f32 0.0, %v5450
      %v5452 = vpop.f32.mrf.mxu0
      %5453 = vmatprep.mubr.f32.mxu0 0.0
      %5454 = vmatmul.mubr.f32.gmra.mxu0 %v3381
      %v5455 = vpop.f32.mrf.mxu0
      %v5456 = vadd.f32 0.0, %v5455
      %v5457 = vpop.f32.mrf.mxu0
      %5458 = vmatprep.mubr.f32.mxu0 0.0
      %5459 = vmatmul.mubr.f32.gmra.mxu0 %v3384
      %v5460 = vpop.f32.mrf.mxu0
      %v5461 = vadd.f32 0.0, %v5460
      %v5462 = vpop.f32.mrf.mxu0
      %5463 = vmatprep.mubr.f32.mxu0 0.0
      %5464 = vmatmul.mubr.f32.gmra.mxu0 %v3387
      %v5465 = vpop.f32.mrf.mxu0
      %v5466 = vadd.f32 0.0, %v5465
      %v5467 = vpop.f32.mrf.mxu0
      %5468 = vmatprep.mubr.f32.mxu0 0.0
      %5469 = vmatmul.mubr.f32.gmra.mxu0 %v3390
      %v5470 = vpop.f32.mrf.mxu0
      %v5471 = vadd.f32 0.0, %v5470
      %v5472 = vpop.f32.mrf.mxu0
      %5473 = vmatprep.mubr.f32.mxu0 0.0
      %5474 = vmatmul.mubr.f32.gmra.mxu0 %v3393
      %v5475 = vpop.f32.mrf.mxu0
      %v5476 = vadd.f32 0.0, %v5475
      %v5477 = vpop.f32.mrf.mxu0
      %5478 = vmatprep.mubr.f32.mxu0 0.0
      %5479 = vmatmul.mubr.f32.gmra.mxu0 %v3396
      %v5480 = vpop.f32.mrf.mxu0
      %v5481 = vadd.f32 0.0, %v5480
      %v5482 = vpop.f32.mrf.mxu0
      %5483 = vmatprep.mubr.f32.mxu0 0.0
      %5484 = vmatmul.mubr.f32.gmra.mxu0 %v3399
      %v5485 = vpop.f32.mrf.mxu0
      %v5486 = vadd.f32 0.0, %v5485
      %v5487 = vpop.f32.mrf.mxu0
      %5488 = vmatprep.mubr.f32.mxu0 0.0
      %5489 = vmatmul.mubr.f32.gmra.mxu0 %v3402
      %v5490 = vpop.f32.mrf.mxu0
      %v5491 = vadd.f32 0.0, %v5490
      %v5492 = vpop.f32.mrf.mxu0
      %5493 = vmatprep.mubr.f32.mxu0 0.0
      %5494 = vmatmul.mubr.f32.gmra.mxu0 %v3405
      %v5495 = vpop.f32.mrf.mxu0
      %v5496 = vadd.f32 0.0, %v5495
      %v5497 = vpop.f32.mrf.mxu0
      %5498 = vmatprep.mubr.f32.mxu0 0.0
      %5499 = vmatmul.mubr.f32.gmra.mxu0 %v3408
      %v5500 = vpop.f32.mrf.mxu0
      %v5501 = vadd.f32 0.0, %v5500
      %v5502 = vpop.f32.mrf.mxu0
      %5503 = vmatprep.mubr.f32.mxu0 0.0
      %5504 = vmatmul.mubr.f32.gmra.mxu0 %v3411
      %v5505 = vpop.f32.mrf.mxu0
      %v5506 = vadd.f32 0.0, %v5505
      %v5507 = vpop.f32.mrf.mxu0
      %5508 = vmatprep.mubr.f32.mxu0 0.0
      %5509 = vmatmul.mubr.f32.gmra.mxu0 %v3414
      %v5510 = vpop.f32.mrf.mxu0
      %v5511 = vadd.f32 0.0, %v5510
      %v5512 = vpop.f32.mrf.mxu0
      %5513 = vmatprep.mubr.f32.mxu0 0.0
      %5514 = vmatmul.mubr.f32.gmra.mxu0 %v3417
      %v5515 = vpop.f32.mrf.mxu0
      %v5516 = vadd.f32 0.0, %v5515
      %v5517 = vpop.f32.mrf.mxu0
      %5518 = vdwg.mxu0
      %v5520 = vsel %vm3370, %v5441, 0
      %v5523 = vsel %vm3370, %v5446, 0
      %v5526 = vsel %vm3370, %v5451, 0
      %v5529 = vsel %vm3370, %v5456, 0
      %v5532 = vsel %vm3370, %v5461, 0
      %v5535 = vsel %vm3370, %v5466, 0
      %v5538 = vsel %vm3370, %v5471, 0
      %v5541 = vsel %vm3370, %v5476, 0
      %v5544 = vsel %vm3370, %v5481, 0
      %v5547 = vsel %vm3370, %v5486, 0
      %v5550 = vsel %vm3370, %v5491, 0
      %v5553 = vsel %vm3370, %v5496, 0
      %v5556 = vsel %vm3370, %v5501, 0
      %v5559 = vsel %vm3370, %v5506, 0
      %v5562 = vsel %vm3370, %v5511, 0
      %v5565 = vsel %vm3370, %v5516, 0
      %5567 = vmatprep.subr.mxu0 0.0
      %5568 = vmatpush1.msra.mxu0 0.0
      %5569 = vmatprep.subr.mxu0 0.0
      %5570 = vmatpush1.msra.mxu0 0.0
      %5571 = vmatprep.subr.mxu0 0.0
      %5572 = vmatpush1.msra.mxu0 0.0
      %5573 = vmatprep.subr.mxu0 0.0
      %5574 = vmatpush1.msra.mxu0 0.0
      %5575 = vmatprep.subr.mxu0 0.0
      %5576 = vmatpush1.msra.mxu0 0.0
      %5577 = vmatprep.subr.mxu0 0.0
      %5578 = vmatpush1.msra.mxu0 0.0
      %5579 = vmatprep.subr.mxu0 0.0
      %5580 = vmatpush1.msra.mxu0 0.0
      %5581 = vmatprep.subr.mxu0 0.0
      %5582 = vmatpush1.msra.mxu0 0.0
      %5583 = vmatprep.subr.mxu0 0.0
      %5584 = vmatpush1.msra.mxu0 0.0
      %5585 = vmatprep.subr.mxu0 0.0
      %5586 = vmatpush1.msra.mxu0 0.0
      %5587 = vmatprep.subr.mxu0 0.0
      %5588 = vmatpush1.msra.mxu0 0.0
      %5589 = vmatprep.subr.mxu0 0.0
      %5590 = vmatpush1.msra.mxu0 0.0
      %5591 = vmatprep.subr.mxu0 0.0
      %5592 = vmatpush1.msra.mxu0 0.0
      %5593 = vmatprep.subr.mxu0 0.0
      %5594 = vmatpush1.msra.mxu0 0.0
      %5595 = vmatprep.subr.mxu0 0.0
      %5596 = vmatpush1.msra.mxu0 %v5373
      %5597 = vmatprep.subr.mxu0 0.0
      %5598 = vmatpush1.msra.mxu0 %v5372
      %5599 = vmatprep.subr.mxu0 0.0
      %5600 = vmatpush2.msra.mxu0 0.0
      %5601 = vmatprep.subr.mxu0 0.0
      %5602 = vmatpush2.msra.mxu0 0.0
      %5603 = vmatprep.subr.mxu0 0.0
      %5604 = vmatpush2.msra.mxu0 0.0
      %5605 = vmatprep.subr.mxu0 0.0
      %5606 = vmatpush2.msra.mxu0 0.0
      %5607 = vmatprep.subr.mxu0 0.0
      %5608 = vmatpush2.msra.mxu0 0.0
      %5609 = vmatprep.subr.mxu0 0.0
      %5610 = vmatpush2.msra.mxu0 0.0
      %5611 = vmatprep.subr.mxu0 0.0
      %5612 = vmatpush2.msra.mxu0 0.0
      %5613 = vmatprep.subr.mxu0 0.0
      %5614 = vmatpush2.msra.mxu0 0.0
      %5615 = vmatprep.subr.mxu0 0.0
      %5616 = vmatpush2.msra.mxu0 0.0
      %5617 = vmatprep.subr.mxu0 0.0
      %5618 = vmatpush2.msra.mxu0 0.0
      %5619 = vmatprep.subr.mxu0 0.0
      %5620 = vmatpush2.msra.mxu0 0.0
      %5621 = vmatprep.subr.mxu0 0.0
      %5622 = vmatpush2.msra.mxu0 0.0
      %5623 = vmatprep.subr.mxu0 0.0
      %5624 = vmatpush2.msra.mxu0 0.0
      %5625 = vmatprep.subr.mxu0 0.0
      %5626 = vmatpush2.msra.mxu0 0.0
      %5627 = vmatprep.subr.mxu0 0.0
      %5628 = vmatpush2.msra.mxu0 0.0
      %5629 = vmatprep.subr.mxu0 0.0
      %5630 = vmatpush2.msra.mxu0 0.0
      %5631 = vmatprep.mubr.f32.mxu0 0.0
      %5632 = vmatmul.mubr.f32.gmra.mxu0 %v5520
      %v5633 = vpop.f32.mrf.mxu0
      %v5634 = vadd.f32 0.0, %v5633
      %v5635 = vpop.f32.mrf.mxu0
      %5636 = vmatprep.mubr.f32.mxu0 0.0
      %5637 = vmatmul.mubr.f32.gmra.mxu0 %v5523
      %v5638 = vpop.f32.mrf.mxu0
      %v5639 = vadd.f32 0.0, %v5638
      %v5640 = vpop.f32.mrf.mxu0
      %5641 = vmatprep.mubr.f32.mxu0 0.0
      %5642 = vmatmul.mubr.f32.gmra.mxu0 %v5526
      %v5643 = vpop.f32.mrf.mxu0
      %v5644 = vadd.f32 0.0, %v5643
      %v5645 = vpop.f32.mrf.mxu0
      %5646 = vmatprep.mubr.f32.mxu0 0.0
      %5647 = vmatmul.mubr.f32.gmra.mxu0 %v5529
      %v5648 = vpop.f32.mrf.mxu0
      %v5649 = vadd.f32 0.0, %v5648
      %v5650 = vpop.f32.mrf.mxu0
      %5651 = vmatprep.mubr.f32.mxu0 0.0
      %5652 = vmatmul.mubr.f32.gmra.mxu0 %v5532
      %v5653 = vpop.f32.mrf.mxu0
      %v5654 = vadd.f32 0.0, %v5653
      %v5655 = vpop.f32.mrf.mxu0
      %5656 = vmatprep.mubr.f32.mxu0 0.0
      %5657 = vmatmul.mubr.f32.gmra.mxu0 %v5535
      %v5658 = vpop.f32.mrf.mxu0
      %v5659 = vadd.f32 0.0, %v5658
      %v5660 = vpop.f32.mrf.mxu0
      %5661 = vmatprep.mubr.f32.mxu0 0.0
      %5662 = vmatmul.mubr.f32.gmra.mxu0 %v5538
      %v5663 = vpop.f32.mrf.mxu0
      %v5664 = vadd.f32 0.0, %v5663
      %v5665 = vpop.f32.mrf.mxu0
      %5666 = vmatprep.mubr.f32.mxu0 0.0
      %5667 = vmatmul.mubr.f32.gmra.mxu0 %v5541
      %v5668 = vpop.f32.mrf.mxu0
      %v5669 = vadd.f32 0.0, %v5668
      %v5670 = vpop.f32.mrf.mxu0
      %5671 = vmatprep.mubr.f32.mxu0 0.0
      %5672 = vmatmul.mubr.f32.gmra.mxu0 %v5544
      %v5673 = vpop.f32.mrf.mxu0
      %v5674 = vadd.f32 0.0, %v5673
      %v5675 = vpop.f32.mrf.mxu0
      %5676 = vmatprep.mubr.f32.mxu0 0.0
      %5677 = vmatmul.mubr.f32.gmra.mxu0 %v5547
      %v5678 = vpop.f32.mrf.mxu0
      %v5679 = vadd.f32 0.0, %v5678
      %v5680 = vpop.f32.mrf.mxu0
      %5681 = vmatprep.mubr.f32.mxu0 0.0
      %5682 = vmatmul.mubr.f32.gmra.mxu0 %v5550
      %v5683 = vpop.f32.mrf.mxu0
      %v5684 = vadd.f32 0.0, %v5683
      %v5685 = vpop.f32.mrf.mxu0
      %5686 = vmatprep.mubr.f32.mxu0 0.0
      %5687 = vmatmul.mubr.f32.gmra.mxu0 %v5553
      %v5688 = vpop.f32.mrf.mxu0
      %v5689 = vadd.f32 0.0, %v5688
      %v5690 = vpop.f32.mrf.mxu0
      %5691 = vmatprep.mubr.f32.mxu0 0.0
      %5692 = vmatmul.mubr.f32.gmra.mxu0 %v5556
      %v5693 = vpop.f32.mrf.mxu0
      %v5694 = vadd.f32 0.0, %v5693
      %v5695 = vpop.f32.mrf.mxu0
      %5696 = vmatprep.mubr.f32.mxu0 0.0
      %5697 = vmatmul.mubr.f32.gmra.mxu0 %v5559
      %v5698 = vpop.f32.mrf.mxu0
      %v5699 = vadd.f32 0.0, %v5698
      %v5700 = vpop.f32.mrf.mxu0
      %5701 = vmatprep.mubr.f32.mxu0 0.0
      %5702 = vmatmul.mubr.f32.gmra.mxu0 %v5562
      %v5703 = vpop.f32.mrf.mxu0
      %v5704 = vadd.f32 0.0, %v5703
      %v5705 = vpop.f32.mrf.mxu0
      %5706 = vmatprep.mubr.f32.mxu0 0.0
      %5707 = vmatmul.mubr.f32.gmra.mxu0 %v5565
      %v5708 = vpop.f32.mrf.mxu0
      %v5709 = vadd.f32 0.0, %v5708
      %v5710 = vpop.f32.mrf.mxu0
      %5711 = vdwg.mxu0
      %v5712 = vmul.f32 %v5634, %v3150
      %v5713 = vmul.f32 %v5639, %v3156
      %v5714 = vmul.f32 %v5644, %v3162
      %v5715 = vmul.f32 %v5649, %v3168
      %v5716 = vmul.f32 %v5654, %v3174
      %v5717 = vmul.f32 %v5659, %v3180
      %v5718 = vmul.f32 %v5664, %v3186
      %v5719 = vmul.f32 %v5669, %v3192
      %v5720 = vmul.f32 %v5674, %v3198
      %v5721 = vmul.f32 %v5679, %v3204
      %v5722 = vmul.f32 %v5684, %v3210
      %v5723 = vmul.f32 %v5689, %v3216
      %v5724 = vmul.f32 %v5694, %v3222
      %v5725 = vmul.f32 %v5699, %v3228
      %v5726 = vmul.f32 %v5704, %v3234
      %v5727 = vmul.f32 %v5709, %v3240
      %5728 = vmatprep.subr.mxu0 0.0
      %5729 = vmatpush1.msra.mxu0 %v5727
      %5730 = vmatprep.subr.mxu0 0.0
      %5731 = vmatpush1.msra.mxu0 %v5726
      %5732 = vmatprep.subr.mxu0 0.0
      %5733 = vmatpush1.msra.mxu0 %v5725
      %5734 = vmatprep.subr.mxu0 0.0
      %5735 = vmatpush1.msra.mxu0 %v5724
      %5736 = vmatprep.subr.mxu0 0.0
      %5737 = vmatpush1.msra.mxu0 %v5723
      %5738 = vmatprep.subr.mxu0 0.0
      %5739 = vmatpush1.msra.mxu0 %v5722
      %5740 = vmatprep.subr.mxu0 0.0
      %5741 = vmatpush1.msra.mxu0 %v5721
      %5742 = vmatprep.subr.mxu0 0.0
      %5743 = vmatpush1.msra.mxu0 %v5720
      %5744 = vmatprep.subr.mxu0 0.0
      %5745 = vmatpush1.msra.mxu0 %v5719
      %5746 = vmatprep.subr.mxu0 0.0
      %5747 = vmatpush1.msra.mxu0 %v5718
      %5748 = vmatprep.subr.mxu0 0.0
      %5749 = vmatpush1.msra.mxu0 %v5717
      %5750 = vmatprep.subr.mxu0 0.0
      %5751 = vmatpush1.msra.mxu0 %v5716
      %5752 = vmatprep.subr.mxu0 0.0
      %5753 = vmatpush1.msra.mxu0 %v5715
      %5754 = vmatprep.subr.mxu0 0.0
      %5755 = vmatpush1.msra.mxu0 %v5714
      %5756 = vmatprep.subr.mxu0 0.0
      %5757 = vmatpush1.msra.mxu0 %v5713
      %5758 = vmatprep.subr.mxu0 0.0
      %5759 = vmatpush1.msra.mxu0 %v5712
      %5760 = vmatprep.subr.mxu0 0.0
      %5761 = vmatpush2.msra.mxu0 0.0
      %5762 = vmatprep.subr.mxu0 0.0
      %5763 = vmatpush2.msra.mxu0 0.0
      %5764 = vmatprep.subr.mxu0 0.0
      %5765 = vmatpush2.msra.mxu0 0.0
      %5766 = vmatprep.subr.mxu0 0.0
      %5767 = vmatpush2.msra.mxu0 0.0
      %5768 = vmatprep.subr.mxu0 0.0
      %5769 = vmatpush2.msra.mxu0 0.0
      %5770 = vmatprep.subr.mxu0 0.0
      %5771 = vmatpush2.msra.mxu0 0.0
      %5772 = vmatprep.subr.mxu0 0.0
      %5773 = vmatpush2.msra.mxu0 0.0
      %5774 = vmatprep.subr.mxu0 0.0
      %5775 = vmatpush2.msra.mxu0 0.0
      %5776 = vmatprep.subr.mxu0 0.0
      %5777 = vmatpush2.msra.mxu0 0.0
      %5778 = vmatprep.subr.mxu0 0.0
      %5779 = vmatpush2.msra.mxu0 0.0
      %5780 = vmatprep.subr.mxu0 0.0
      %5781 = vmatpush2.msra.mxu0 0.0
      %5782 = vmatprep.subr.mxu0 0.0
      %5783 = vmatpush2.msra.mxu0 0.0
      %5784 = vmatprep.subr.mxu0 0.0
      %5785 = vmatpush2.msra.mxu0 0.0
      %5786 = vmatprep.subr.mxu0 0.0
      %5787 = vmatpush2.msra.mxu0 0.0
      %5788 = vmatprep.subr.mxu0 0.0
      %5789 = vmatpush2.msra.mxu0 0.0
      %5790 = vmatprep.subr.mxu0 0.0
      %5791 = vmatpush2.msra.mxu0 0.0
      %5792 = vmatprep.mubr.f32.mxu0 0.0
      %5793 = vmatmul.mubr.f32.gmra.mxu0 %v513
      %v5794 = vpop.f32.mrf.mxu0
      %v5795 = vadd.f32 0.0, %v5794
      %v5796 = vpop.f32.mrf.mxu0
      %5797 = vmatprep.mubr.f32.mxu0 0.0
      %5798 = vmatmul.mubr.f32.gmra.mxu0 %v515
      %v5799 = vpop.f32.mrf.mxu0
      %v5800 = vadd.f32 0.0, %v5799
      %v5801 = vpop.f32.mrf.mxu0
      %5802 = vdwg.mxu0
      %5805 = vrot.lane.b32.xlu0 %v3242, 80
      %v5806 = vpop.permute.xlu0 %5805
      %5807 = vrot.lane.b32.xlu0 %v3243, 80
      %v5808 = vpop.permute.xlu0 %5807
      %5809 = vrot.lane.b32.xlu0 %v3244, 80
      %v5810 = vpop.permute.xlu0 %5809
      %5811 = vrot.lane.b32.xlu0 %v3245, 80
      %v5812 = vpop.permute.xlu0 %5811
      %vm5813 = vcmask 654336
      %v5814 = vsel %vm5813, %v5806, %v5808
      %v5815 = vsel %vm5813, %v5810, %v5812
      %v5819 = vsel %vm3370, %v5358, 0
      %v5822 = vsel %vm3370, %v5359, 0
      %5824 = vmatprep.subr.mxu0 0.0
      %5825 = vmatpush1.msra.mxu0 0.0
      %5826 = vmatprep.subr.mxu0 0.0
      %5827 = vmatpush1.msra.mxu0 0.0
      %5828 = vmatprep.subr.mxu0 0.0
      %5829 = vmatpush1.msra.mxu0 0.0
      %5830 = vmatprep.subr.mxu0 0.0
      %5831 = vmatpush1.msra.mxu0 0.0
      %5832 = vmatprep.subr.mxu0 0.0
      %5833 = vmatpush1.msra.mxu0 0.0
      %5834 = vmatprep.subr.mxu0 0.0
      %5835 = vmatpush1.msra.mxu0 0.0
      %5836 = vmatprep.subr.mxu0 0.0
      %5837 = vmatpush1.msra.mxu0 0.0
      %5838 = vmatprep.subr.mxu0 0.0
      %5839 = vmatpush1.msra.mxu0 0.0
      %5840 = vmatprep.subr.mxu0 0.0
      %5841 = vmatpush1.msra.mxu0 0.0
      %5842 = vmatprep.subr.mxu0 0.0
      %5843 = vmatpush1.msra.mxu0 0.0
      %5844 = vmatprep.subr.mxu0 0.0
      %5845 = vmatpush1.msra.mxu0 0.0
      %5846 = vmatprep.subr.mxu0 0.0
      %5847 = vmatpush1.msra.mxu0 0.0
      %5848 = vmatprep.subr.mxu0 0.0
      %5849 = vmatpush1.msra.mxu0 0.0
      %5850 = vmatprep.subr.mxu0 0.0
      %5851 = vmatpush1.msra.mxu0 0.0
      %5852 = vmatprep.subr.mxu0 0.0
      %5853 = vmatpush1.msra.mxu0 %v5815
      %5854 = vmatprep.subr.mxu0 0.0
      %5855 = vmatpush1.msra.mxu0 %v5814
      %5856 = vmatprep.subr.mxu0 0.0
      %5857 = vmatpush2.msra.mxu0 0.0
      %5858 = vmatprep.subr.mxu0 0.0
      %5859 = vmatpush2.msra.mxu0 0.0
      %5860 = vmatprep.subr.mxu0 0.0
      %5861 = vmatpush2.msra.mxu0 0.0
      %5862 = vmatprep.subr.mxu0 0.0
      %5863 = vmatpush2.msra.mxu0 0.0
      %5864 = vmatprep.subr.mxu0 0.0
      %5865 = vmatpush2.msra.mxu0 0.0
      %5866 = vmatprep.subr.mxu0 0.0
      %5867 = vmatpush2.msra.mxu0 0.0
      %5868 = vmatprep.subr.mxu0 0.0
      %5869 = vmatpush2.msra.mxu0 0.0
      %5870 = vmatprep.subr.mxu0 0.0
      %5871 = vmatpush2.msra.mxu0 0.0
      %5872 = vmatprep.subr.mxu0 0.0
      %5873 = vmatpush2.msra.mxu0 0.0
      %5874 = vmatprep.subr.mxu0 0.0
      %5875 = vmatpush2.msra.mxu0 0.0
      %5876 = vmatprep.subr.mxu0 0.0
      %5877 = vmatpush2.msra.mxu0 0.0
      %5878 = vmatprep.subr.mxu0 0.0
      %5879 = vmatpush2.msra.mxu0 0.0
      %5880 = vmatprep.subr.mxu0 0.0
      %5881 = vmatpush2.msra.mxu0 0.0
      %5882 = vmatprep.subr.mxu0 0.0
      %5883 = vmatpush2.msra.mxu0 0.0
      %5884 = vmatprep.subr.mxu0 0.0
      %5885 = vmatpush2.msra.mxu0 0.0
      %5886 = vmatprep.subr.mxu0 0.0
      %5887 = vmatpush2.msra.mxu0 0.0
      %5888 = vmatprep.mubr.f32.mxu0 0.0
      %5889 = vmatmul.mubr.f32.gmra.mxu0 %v5819
      %v5890 = vpop.f32.mrf.mxu0
      %v5891 = vadd.f32 0.0, %v5890
      %v5892 = vpop.f32.mrf.mxu0
      %5893 = vmatprep.mubr.f32.mxu0 0.0
      %5894 = vmatmul.mubr.f32.gmra.mxu0 %v5822
      %v5895 = vpop.f32.mrf.mxu0
      %v5896 = vadd.f32 0.0, %v5895
      %v5897 = vpop.f32.mrf.mxu0
      %5898 = vdwg.mxu0
      %5931 = vrot.lane.b32.xlu0 %v3330, 80
      %v5932 = vpop.permute.xlu0 %5931
      %5933 = vrot.lane.b32.xlu0 %v3331, 80
      %v5934 = vpop.permute.xlu0 %5933
      %5935 = vrot.lane.b32.xlu0 %v3332, 80
      %v5936 = vpop.permute.xlu0 %5935
      %5937 = vrot.lane.b32.xlu0 %v3333, 80
      %v5938 = vpop.permute.xlu0 %5937
      %5939 = vrot.lane.b32.xlu0 %v3334, 80
      %v5940 = vpop.permute.xlu0 %5939
      %5941 = vrot.lane.b32.xlu0 %v3335, 80
      %v5942 = vpop.permute.xlu0 %5941
      %5943 = vrot.lane.b32.xlu0 %v3336, 80
      %v5944 = vpop.permute.xlu0 %5943
      %5945 = vrot.lane.b32.xlu0 %v3337, 80
      %v5946 = vpop.permute.xlu0 %5945
      %5947 = vrot.lane.b32.xlu0 %v3338, 80
      %v5948 = vpop.permute.xlu0 %5947
      %5949 = vrot.lane.b32.xlu0 %v3339, 80
      %v5950 = vpop.permute.xlu0 %5949
      %5951 = vrot.lane.b32.xlu0 %v3340, 80
      %v5952 = vpop.permute.xlu0 %5951
      %5953 = vrot.lane.b32.xlu0 %v3341, 80
      %v5954 = vpop.permute.xlu0 %5953
      %5955 = vrot.lane.b32.xlu0 %v3342, 80
      %v5956 = vpop.permute.xlu0 %5955
      %5957 = vrot.lane.b32.xlu0 %v3343, 80
      %v5958 = vpop.permute.xlu0 %5957
      %5959 = vrot.lane.b32.xlu0 %v3344, 80
      %v5960 = vpop.permute.xlu0 %5959
      %5961 = vrot.lane.b32.xlu0 %v3345, 80
      %v5962 = vpop.permute.xlu0 %5961
      %5963 = vrot.lane.b32.xlu0 %v3346, 80
      %v5964 = vpop.permute.xlu0 %5963
      %5965 = vrot.lane.b32.xlu0 %v3347, 80
      %v5966 = vpop.permute.xlu0 %5965
      %5967 = vrot.lane.b32.xlu0 %v3348, 80
      %v5968 = vpop.permute.xlu0 %5967
      %5969 = vrot.lane.b32.xlu0 %v3349, 80
      %v5970 = vpop.permute.xlu0 %5969
      %5971 = vrot.lane.b32.xlu0 %v3350, 80
      %v5972 = vpop.permute.xlu0 %5971
      %5973 = vrot.lane.b32.xlu0 %v3351, 80
      %v5974 = vpop.permute.xlu0 %5973
      %5975 = vrot.lane.b32.xlu0 %v3352, 80
      %v5976 = vpop.permute.xlu0 %5975
      %5977 = vrot.lane.b32.xlu0 %v3353, 80
      %v5978 = vpop.permute.xlu0 %5977
      %5979 = vrot.lane.b32.xlu0 %v3354, 80
      %v5980 = vpop.permute.xlu0 %5979
      %5981 = vrot.lane.b32.xlu0 %v3355, 80
      %v5982 = vpop.permute.xlu0 %5981
      %5983 = vrot.lane.b32.xlu0 %v3356, 80
      %v5984 = vpop.permute.xlu0 %5983
      %5985 = vrot.lane.b32.xlu0 %v3357, 80
      %v5986 = vpop.permute.xlu0 %5985
      %5987 = vrot.lane.b32.xlu0 %v3358, 80
      %v5988 = vpop.permute.xlu0 %5987
      %5989 = vrot.lane.b32.xlu0 %v3359, 80
      %v5990 = vpop.permute.xlu0 %5989
      %5991 = vrot.lane.b32.xlu0 %v3360, 80
      %v5992 = vpop.permute.xlu0 %5991
      %5993 = vrot.lane.b32.xlu0 %v3361, 80
      %v5994 = vpop.permute.xlu0 %5993
      %v5995 = vsel %vm5813, %v5932, %v5934
      %v5996 = vsel %vm5813, %v5936, %v5938
      %v5997 = vsel %vm5813, %v5940, %v5942
      %v5998 = vsel %vm5813, %v5944, %v5946
      %v5999 = vsel %vm5813, %v5948, %v5950
      %v6000 = vsel %vm5813, %v5952, %v5954
      %v6001 = vsel %vm5813, %v5956, %v5958
      %v6002 = vsel %vm5813, %v5960, %v5962
      %v6003 = vsel %vm5813, %v5964, %v5966
      %v6004 = vsel %vm5813, %v5968, %v5970
      %v6005 = vsel %vm5813, %v5972, %v5974
      %v6006 = vsel %vm5813, %v5976, %v5978
      %v6007 = vsel %vm5813, %v5980, %v5982
      %v6008 = vsel %vm5813, %v5984, %v5986
      %v6009 = vsel %vm5813, %v5988, %v5990
      %v6010 = vsel %vm5813, %v5992, %v5994
      %6027 = vmatprep.subr.mxu0 0.0
      %6028 = vmatpush1.msra.mxu0 %v6010
      %6029 = vmatprep.subr.mxu0 0.0
      %6030 = vmatpush1.msra.mxu0 %v6009
      %6031 = vmatprep.subr.mxu0 0.0
      %6032 = vmatpush1.msra.mxu0 %v6008
      %6033 = vmatprep.subr.mxu0 0.0
      %6034 = vmatpush1.msra.mxu0 %v6007
      %6035 = vmatprep.subr.mxu0 0.0
      %6036 = vmatpush1.msra.mxu0 %v6006
      %6037 = vmatprep.subr.mxu0 0.0
      %6038 = vmatpush1.msra.mxu0 %v6005
      %6039 = vmatprep.subr.mxu0 0.0
      %6040 = vmatpush1.msra.mxu0 %v6004
      %6041 = vmatprep.subr.mxu0 0.0
      %6042 = vmatpush1.msra.mxu0 %v6003
      %6043 = vmatprep.subr.mxu0 0.0
      %6044 = vmatpush1.msra.mxu0 %v6002
      %6045 = vmatprep.subr.mxu0 0.0
      %6046 = vmatpush1.msra.mxu0 %v6001
      %6047 = vmatprep.subr.mxu0 0.0
      %6048 = vmatpush1.msra.mxu0 %v6000
      %6049 = vmatprep.subr.mxu0 0.0
      %6050 = vmatpush1.msra.mxu0 %v5999
      %6051 = vmatprep.subr.mxu0 0.0
      %6052 = vmatpush1.msra.mxu0 %v5998
      %6053 = vmatprep.subr.mxu0 0.0
      %6054 = vmatpush1.msra.mxu0 %v5997
      %6055 = vmatprep.subr.mxu0 0.0
      %6056 = vmatpush1.msra.mxu0 %v5996
      %6057 = vmatprep.subr.mxu0 0.0
      %6058 = vmatpush1.msra.mxu0 %v5995
      %6059 = vmatprep.subr.mxu0 0.0
      %6060 = vmatpush2.msra.mxu0 0.0
      %6061 = vmatprep.subr.mxu0 0.0
      %6062 = vmatpush2.msra.mxu0 0.0
      %6063 = vmatprep.subr.mxu0 0.0
      %6064 = vmatpush2.msra.mxu0 0.0
      %6065 = vmatprep.subr.mxu0 0.0
      %6066 = vmatpush2.msra.mxu0 0.0
      %6067 = vmatprep.subr.mxu0 0.0
      %6068 = vmatpush2.msra.mxu0 0.0
      %6069 = vmatprep.subr.mxu0 0.0
      %6070 = vmatpush2.msra.mxu0 0.0
      %6071 = vmatprep.subr.mxu0 0.0
      %6072 = vmatpush2.msra.mxu0 0.0
      %6073 = vmatprep.subr.mxu0 0.0
      %6074 = vmatpush2.msra.mxu0 0.0
      %6075 = vmatprep.subr.mxu0 0.0
      %6076 = vmatpush2.msra.mxu0 0.0
      %6077 = vmatprep.subr.mxu0 0.0
      %6078 = vmatpush2.msra.mxu0 0.0
      %6079 = vmatprep.subr.mxu0 0.0
      %6080 = vmatpush2.msra.mxu0 0.0
      %6081 = vmatprep.subr.mxu0 0.0
      %6082 = vmatpush2.msra.mxu0 0.0
      %6083 = vmatprep.subr.mxu0 0.0
      %6084 = vmatpush2.msra.mxu0 0.0
      %6085 = vmatprep.subr.mxu0 0.0
      %6086 = vmatpush2.msra.mxu0 0.0
      %6087 = vmatprep.subr.mxu0 0.0
      %6088 = vmatpush2.msra.mxu0 0.0
      %6089 = vmatprep.subr.mxu0 0.0
      %6090 = vmatpush2.msra.mxu0 0.0
      %6091 = vmatprep.mubr.f32.mxu0 0.0
      %6092 = vmatmul.mubr.f32.gmra.mxu0 %v5795
      %v6093 = vpop.f32.mrf.mxu0
      %v6094 = vadd.f32 %v5891, %v6093
      %v6095 = vpop.f32.mrf.mxu0
      %6096 = vmatprep.mubr.f32.mxu0 0.0
      %6097 = vmatmul.mubr.f32.gmra.mxu0 %v5800
      %v6098 = vpop.f32.mrf.mxu0
      %v6099 = vadd.f32 %v5896, %v6098
      %v6100 = vpop.f32.mrf.mxu0
      %6101 = vdwg.mxu0
      %v6102 = vlaneseq
      %v6103 = vshrl.u32 %v6102, 7
      %v6104 = vsub.s32 0, %v6103
      %v6105 = vrot.slane %v3249, %v6104
      %6107 = vrot.lane.b32.xlu0 %v4015, 80
      %v6108 = vpop.permute.xlu0 %6107
      %6109 = vrot.lane.b32.xlu0 %v6105, 80
      %v6110 = vpop.permute.xlu0 %6109
      %v6111 = vsel %vm5813, %v6108, %v6110
      %v6113 = vadd.f32 %v6094, %v6111
      %v6114 = vadd.f32 %v6099, %v6111
      %v6115 = vmax.f32 %v6113, 0.0
      %v6116 = vmax.f32 %v6114, 0.0
      %6117 = vst [vmem:[%s359] sm:$0xff] %v6115
      %6118 = vst [vmem:[%s359 + $0x8] sm:$0xff] %v6116
      %p6119 = scmp.lt.s32.totalorder %s19, 3
      %s6120 = scalar_select %p6119, %s19, 3
      %s6121 = smul.addr %s6120, 2
      %s6122 = smul.addr %s6121, 8
      %s6123 = scalar_lea.vmem %s8, %s6122
      // Predicated region
      $region53: #{gnn_encoder_forward_batched.1} parent=51 // pred_check
        %p6124 = pneg %p225
      $region54: #{gnn_encoder_forward_batched.1} parent=51 // pred_check_branch
        %6126 = sbr.rel (%p6124) target = $region56
      $region55: #{gnn_encoder_forward_batched.1} parent=51 // pred_region
        _
      $region56: #{gnn_encoder_forward_batched.1} parent=51 // pred_fallthru
        _
    $region52: #{gnn_encoder_forward_batched.1} parent=5 // pred_fallthru
      _
    %p6127 = scmp.le.s32.totalorder 2, %s14
    // Predicated region
    $region57: #{gnn_encoder_forward_batched.1} parent=5 // pred_check
      %p6128 = pneg %p6127
    $region58: #{gnn_encoder_forward_batched.1} parent=5 // pred_check_branch
      %6130 = sbr.rel (%p6128) target = $region60
    $region59: #{gnn_encoder_forward_batched.1} parent=5 // pred_region
      %s6131 = ssub.s32 %s14, 2
      // Predicated region
      $region61: #{gnn_encoder_forward_batched.1} parent=59 // pred_check
        %p6132 = pneg %p231
      $region62: #{gnn_encoder_forward_batched.1} parent=59 // pred_check_branch
        %6134 = sbr.rel (%p6132) target = $region64
      $region63: #{gnn_encoder_forward_batched.1} parent=59 // pred_region
        %p6135 = scmp.lt.s32.totalorder %s20, 3
        %s6136 = scalar_select %p6135, %s20, 3
        %s6137 = smul.addr %s6136, 2
        %s6138 = smul.addr %s6137, 8
        %s6139 = scalar_lea.vmem %s8, %s6138
      $region64: #{gnn_encoder_forward_batched.1} parent=59 // pred_fallthru
        _
    $region60: #{gnn_encoder_forward_batched.1} parent=5 // pred_fallthru
      _
  $region6: #{gnn_encoder_forward_batched.1} parent=0 // loop_footer
    %s18 = sadd.s32 1, %s14
  $region7: #{gnn_encoder_forward_batched.1} parent=0 // loop_footer_branch
    %13 = sbr.rel target = $region3
  $region8: #{gnn_encoder_forward_batched.1} parent=0 // loop_exit
    _

</llo_original>
